<compile_context>
chip_gen: v6e
topology: v6e:2x2x1
jax: 0.10.0
libtpu: 0.0.40
codegen_flags: <defaults>
</compile_context>

<pallas_src>
import functools

import jax
import jax.numpy as jnp
from jax.experimental import pallas as pl
from jax.experimental.pallas import tpu as pltpu

EPS = 1e-5
LANE = 128


def _round_up(v, m):
    return ((v + m - 1) // m) * m


def _make_kernel(rfull, guard, c2_starts, inv_cnt):
    """Fused BasicBlock kernel for one static configuration."""

    def kernel(packed_ref, w1_ref, bn1_ref, w2_ref, bn2_ref, sc_ref, mask_ref,
               out_ref, hbuf_ref):
        # Hoist the lane-broadcast of the (rows,1) row-validity mask once.
        maskb = jnp.broadcast_to(mask_ref[...], (rfull, LANE))

        # ---- conv1: taps pre-packed into lanes -> single K=128 MXU matmul --
        acc1 = jnp.dot(packed_ref[...], w1_ref[...],
                       preferred_element_type=jnp.float32)

        # ---- bn1 (batch stats, fused single pass) + relu --------------------
        hm = acc1 * maskb                      # halo rows -> exact zero
        s1 = jnp.sum(hm, axis=0, keepdims=True)
        s2 = jnp.sum(hm * hm, axis=0, keepdims=True)
        mu = s1 * inv_cnt
        var = jnp.maximum(s2 * inv_cnt - mu * mu, 0.0)
        scale = bn1_ref[0:1, :] * jax.lax.rsqrt(var + EPS)
        shift = bn1_ref[1:2, :] - mu * scale
        h = jnp.maximum(hm * scale + shift, 0.0) * maskb   # re-zero halo rows

        # ---- stage h in bf16 (single cast); zero only the guard bands -------
        hbuf_ref[0:guard, :] = jnp.zeros((guard, LANE), jnp.bfloat16)
        hbuf_ref[guard + rfull:2 * guard + rfull, :] = jnp.zeros(
            (guard, LANE), jnp.bfloat16)
        hbuf_ref[guard:guard + rfull, :] = h.astype(jnp.bfloat16)

        # ---- conv2: lane-concat 9 row-shifted windows -> one K=1152 matmul --
        lhs = jnp.concatenate(
            [hbuf_ref[s:s + rfull, :] for s in c2_starts], axis=-1)
        acc2 = jnp.dot(lhs, w2_ref[...], preferred_element_type=jnp.float32)

        # ---- bn2 + residual add + relu ---------------------------------------
        om = acc2 * maskb
        t1 = jnp.sum(om, axis=0, keepdims=True)
        t2 = jnp.sum(om * om, axis=0, keepdims=True)
        mu2 = t1 * inv_cnt
        var2 = jnp.maximum(t2 * inv_cnt - mu2 * mu2, 0.0)
        scale2 = bn2_ref[0:1, :] * jax.lax.rsqrt(var2 + EPS)
        shift2 = bn2_ref[1:2, :] - mu2 * scale2
        out_ref[...] = jnp.maximum(om * scale2 + shift2 + sc_ref[...], 0.0)

    return kernel


@functools.partial(jax.jit, static_argnames=("stride",))
def basic_block_forward(x, w1, gamma1, beta1, w2, gamma2, beta2, *, stride):
    """x: (N, Cin, H, W) f32 NCHW.  Returns (N, planes, Ho, Wo) f32 NCHW."""
    assert stride in (1, 2)
    N, CIN, H, W = x.shape
    MID = w1.shape[0]
    CP = w2.shape[0]
    assert 9 * CIN <= LANE, "TODO(synk): partial tap packing for CIN > 14"
    assert MID <= LANE and CP <= LANE
    HO = (H - 1) // stride + 1
    WO = (W - 1) // stride + 1
    HP, WP = HO + 2, WO + 2                  # zero-haloed output frame
    F = HP * WP
    RFULL = N * F
    GUARD = _round_up(WP + 1, 16)

    x_nhwc = jnp.transpose(x, (0, 2, 3, 1))                   # (N, H, W, CIN)

    # ---- glue: conv1 input with the 9 taps packed along lanes ---------------
    s = stride
    pf = s + 1                              # front spatial pad (halo + conv pad)
    pbh = s * HO + 2 - H
    pbw = s * WO + 2 - W
    xpad = jnp.pad(x_nhwc, ((0, 0), (pf, pbh), (pf, pbw), (0, 0)))
    taps = []
    for kh in range(3):
        for kw in range(3):
            t = xpad[:, kh:kh + s * HP:s, kw:kw + s * WP:s, :]
            taps.append(t[:, :HP, :WP, :])
    packed = jnp.concatenate(taps, axis=-1)                   # (N,HP,WP,9*CIN)
    packed = jnp.pad(packed, ((0, 0), (0, 0), (0, 0), (0, LANE - 9 * CIN)))
    packed = packed.reshape(RFULL, LANE).astype(jnp.bfloat16)

    # ---- glue: weights, lane padded, bf16 ------------------------------------
    # conv1: row = (kh*3+kw)*CIN + c, padded to (LANE, LANE)
    w1k = jnp.transpose(w1, (2, 3, 1, 0)).reshape(9 * CIN, MID)
    w1k = jnp.pad(w1k, ((0, LANE - 9 * CIN), (0, LANE - MID))).astype(jnp.bfloat16)
    # conv2: rows = k*LANE + c (per-tap lane-padded) to match the lane-concat lhs
    w2k = jnp.transpose(w2, (2, 3, 1, 0)).reshape(9, MID, CP)
    w2k = jnp.pad(w2k, ((0, 0), (0, LANE - MID), (0, LANE - CP)))
    w2k = w2k.reshape(9 * LANE, LANE).astype(jnp.bfloat16)

    bn1 = jnp.stack([jnp.pad(gamma1, (0, LANE - MID)),
                     jnp.pad(beta1, (0, LANE - MID))], axis=0)
    bn2 = jnp.stack([jnp.pad(gamma2, (0, LANE - CP)),
                     jnp.pad(beta2, (0, LANE - CP))], axis=0)

    # ---- glue: shortcut (LambdaLayer) on the same zero-haloed frame ----------
    if stride != 1 or CIN != CP:
        scx = x_nhwc[:, ::2, ::2, :] if stride != 1 else x_nhwc
        lo = (CP - CIN) // 2
        hi = CP - CIN - lo
        sc = jnp.pad(scx, ((0, 0), (0, 0), (0, 0), (lo, hi)))
    else:
        sc = x_nhwc
    sc = jnp.pad(sc, ((0, 0), (1, 1), (1, 1), (0, LANE - CP)))
    sc = sc.reshape(RFULL, LANE)

    # ---- glue: row-validity mask (interior of the frame) ---------------------
    hv = (jnp.arange(HP) >= 1) & (jnp.arange(HP) <= HO)
    wv = (jnp.arange(WP) >= 1) & (jnp.arange(WP) <= WO)
    mask = (hv[:, None] & wv[None, :]).astype(jnp.float32).reshape(1, F)
    mask = jnp.tile(mask, (N, 1)).reshape(RFULL, 1)

    # ---- glue: static row-shift table for conv2 taps -------------------------
    c2_starts = tuple(GUARD + (kh - 1) * WP + (kw - 1)
                      for kh in range(3) for kw in range(3))

    kernel = _make_kernel(RFULL, GUARD, c2_starts, 1.0 / float(N * HO * WO))
    vmem = pl.BlockSpec(memory_space=pltpu.MemorySpace.VMEM)
    out = pl.pallas_call(
        kernel,
        out_shape=jax.ShapeDtypeStruct((RFULL, LANE), jnp.float32),
        in_specs=[vmem] * 7,
        out_specs=vmem,
        scratch_shapes=[pltpu.VMEM((RFULL + 2 * GUARD, LANE), jnp.bfloat16)],
        compiler_params=pltpu.CompilerParams(
            vmem_limit_bytes=32 * 1024 * 1024),
    )(packed, w1k, bn1, w2k, bn2, sc, mask)

    out = out.reshape(N, HP, WP, LANE)[:, 1:1 + HO, 1:1 + WO, :CP]
    return jnp.transpose(out, (0, 3, 1, 2))


# ------------------------- pure-JAX reference (for checking) -----------------
def _reference(x, w1, gamma1, beta1, w2, gamma2, beta2, stride):
    """Reference with matching bf16 conv operands / f32 accumulation."""
    def conv(xx, ww, s):
        return jax.lax.conv_general_dilated(
            xx.astype(jnp.bfloat16), ww.astype(jnp.bfloat16), (s, s),
            ((1, 1), (1, 1)), dimension_numbers=("NCHW", "OIHW", "NCHW"),
            preferred_element_type=jnp.float32)

    def bn(xx, g, b):
        mu = jnp.mean(xx, axis=(0, 2, 3), keepdims=True)
        var = jnp.mean((xx - mu) ** 2, axis=(0, 2, 3), keepdims=True)
        return ((xx - mu) * jax.lax.rsqrt(var + EPS)
                * g[None, :, None, None] + b[None, :, None, None])

    out = jax.nn.relu(bn(conv(x, w1, stride), gamma1, beta1))
    out = bn(conv(out, w2, 1), gamma2, beta2)
    cin, cp = x.shape[1], w2.shape[0]
    if stride != 1 or cin != cp:
        scx = x[:, :, ::2, ::2] if stride != 1 else x
        lo = (cp - cin) // 2
        sc = jnp.pad(scx, ((0, 0), (lo, cp - cin - lo), (0, 0), (0, 0)))
    else:
        sc = x
    return jax.nn.relu(out + sc)


if __name__ == "__main__":
    configs = [
        # BasicBlock(midplanes=4, inplanes=4, planes=8, stride=2): downsample
        dict(N=2, CIN=4, H=16, W=16, MID=4, CP=8, stride=2),
        # BasicBlock(midplanes=8, inplanes=8, planes=8, stride=1): identity
        dict(N=2, CIN=8, H=8, W=8, MID=8, CP=8, stride=1),
    ]
    key = jax.random.PRNGKey(0)
    for cfg in configs:
        key, *ks = jax.random.split(key, 8)
        N, CIN, H, W = cfg["N"], cfg["CIN"], cfg["H"], cfg["W"]
        MID, CP, STRIDE = cfg["MID"], cfg["CP"], cfg["stride"]

        x = jax.random.normal(ks[0], (N, CIN, H, W), jnp.float32)
        w1 = 0.1 * jax.random.normal(ks[1], (MID, CIN, 3, 3), jnp.float32)
        w2 = 0.1 * jax.random.normal(ks[2], (CP, MID, 3, 3), jnp.float32)
        gamma1 = 1.0 + 0.1 * jax.random.normal(ks[3], (MID,), jnp.float32)
        beta1 = 0.1 * jax.random.normal(ks[4], (MID,), jnp.float32)
        gamma2 = 1.0 + 0.1 * jax.random.normal(ks[5], (CP,), jnp.float32)
        beta2 = 0.1 * jax.random.normal(ks[6], (CP,), jnp.float32)

        out = basic_block_forward(x, w1, gamma1, beta1, w2, gamma2, beta2,
                                  stride=STRIDE)
        out = jax.block_until_ready(out)

        ref = _reference(x, w1, gamma1, beta1, w2, gamma2, beta2, STRIDE)
        assert out.shape == ref.shape, (out.shape, ref.shape)
        max_err = float(jnp.max(jnp.abs(out - ref)))
        # bf16 matmul operands -> compare at bf16-class tolerance.
        assert jnp.allclose(out, ref, atol=1e-2, rtol=1e-2), max_err

    print("KERNEL_OK")
</pallas_src>

<mosaic_0001>
module attributes {stable_mosaic.version = 11 : i64} {
  func.func @kernel(%arg0: memref<200x128xbf16, #tpu.memory_space<vmem>>, %arg1: memref<128x128xbf16, #tpu.memory_space<vmem>>, %arg2: memref<2x128xf32, #tpu.memory_space<vmem>>, %arg3: memref<1152x128xbf16, #tpu.memory_space<vmem>>, %arg4: memref<2x128xf32, #tpu.memory_space<vmem>>, %arg5: memref<200x128xf32, #tpu.memory_space<vmem>>, %arg6: memref<200x1xf32, #tpu.memory_space<vmem>>, %arg7: memref<200x128xf32, #tpu.memory_space<vmem>>, %arg8: memref<232x128xbf16, #tpu.memory_space<vmem>>) attributes {dimension_semantics = [], scalar_prefetch = 0 : i64, scratch_operands = 1 : i64, tpu.core_type = #tpu.core_type<tc>} {
    %c0 = arith.constant 0 : index
    %c0_0 = arith.constant 0 : index
    %0 = vector.load %arg6[%c0, %c0_0] : memref<200x1xf32, #tpu.memory_space<vmem>>, vector<200x1xf32>
    %1 = vector.shape_cast %0 : vector<200x1xf32> to vector<200x1xf32>
    %2 = vector.broadcast %1 : vector<200x1xf32> to vector<200x128xf32>
    %c0_1 = arith.constant 0 : index
    %c0_2 = arith.constant 0 : index
    %3 = vector.load %arg0[%c0_1, %c0_2] : memref<200x128xbf16, #tpu.memory_space<vmem>>, vector<200x128xbf16>
    %c0_3 = arith.constant 0 : index
    %c0_4 = arith.constant 0 : index
    %4 = vector.load %arg1[%c0_3, %c0_4] : memref<128x128xbf16, #tpu.memory_space<vmem>>, vector<128x128xbf16>
    %cst = arith.constant dense<0.000000e+00> : vector<200x128xf32>
    %5 = tpu.matmul %3, %4, %cst {dimension_numbers = #tpu.dot_dimension_numbers<[1], [0], [0], [1], [0, 0, 1, 1], [], []>} : vector<200x128xbf16>, vector<128x128xbf16>, vector<200x128xf32> -> vector<200x128xf32>
    %6 = arith.mulf %5, %2 : vector<200x128xf32>
    %cst_5 = arith.constant dense<0.000000e+00> : vector<128xf32>
    %7 = vector.multi_reduction <add>, %6, %cst_5 [0] : vector<200x128xf32> to vector<128xf32>
    %8 = vector.shape_cast %7 : vector<128xf32> to vector<1x128xf32>
    %9 = arith.mulf %6, %6 : vector<200x128xf32>
    %cst_6 = arith.constant dense<0.000000e+00> : vector<128xf32>
    %10 = vector.multi_reduction <add>, %9, %cst_6 [0] : vector<200x128xf32> to vector<128xf32>
    %11 = vector.shape_cast %10 : vector<128xf32> to vector<1x128xf32>
    %cst_7 = arith.constant 7.812500e-03 : f32
    %12 = vector.broadcast %cst_7 : f32 to vector<1x128xf32>
    %13 = arith.mulf %8, %12 : vector<1x128xf32>
    %cst_8 = arith.constant 7.812500e-03 : f32
    %14 = vector.broadcast %cst_8 : f32 to vector<1x128xf32>
    %15 = arith.mulf %11, %14 : vector<1x128xf32>
    %16 = arith.mulf %13, %13 : vector<1x128xf32>
    %17 = arith.subf %15, %16 : vector<1x128xf32>
    %cst_9 = arith.constant 0.000000e+00 : f32
    %18 = vector.broadcast %cst_9 : f32 to vector<1x128xf32>
    %19 = arith.maximumf %17, %18 : vector<1x128xf32>
    %c0_10 = arith.constant 0 : index
    %c0_11 = arith.constant 0 : index
    %20 = vector.load %arg2[%c0_10, %c0_11] : memref<2x128xf32, #tpu.memory_space<vmem>>, vector<1x128xf32>
    %cst_12 = arith.constant 9.99999974E-6 : f32
    %21 = vector.broadcast %cst_12 : f32 to vector<1x128xf32>
    %22 = arith.addf %19, %21 : vector<1x128xf32>
    %23 = math.rsqrt %22 : vector<1x128xf32>
    %24 = arith.mulf %20, %23 : vector<1x128xf32>
    %c1 = arith.constant 1 : index
    %c0_13 = arith.constant 0 : index
    %25 = vector.load %arg2[%c1, %c0_13] : memref<2x128xf32, #tpu.memory_space<vmem>>, vector<1x128xf32>
    %26 = arith.mulf %13, %24 : vector<1x128xf32>
    %27 = arith.subf %25, %26 : vector<1x128xf32>
    %28 = vector.broadcast %24 : vector<1x128xf32> to vector<200x128xf32>
    %29 = arith.mulf %6, %28 : vector<200x128xf32>
    %30 = vector.broadcast %27 : vector<1x128xf32> to vector<200x128xf32>
    %31 = arith.addf %29, %30 : vector<200x128xf32>
    %cst_14 = arith.constant 0.000000e+00 : f32
    %32 = vector.broadcast %cst_14 : f32 to vector<200x128xf32>
    %33 = arith.maximumf %31, %32 : vector<200x128xf32>
    %34 = arith.mulf %33, %2 : vector<200x128xf32>
    %cst_15 = arith.constant 0.000000e+00 : bf16
    %35 = vector.broadcast %cst_15 : bf16 to vector<16x128xbf16>
    %c0_16 = arith.constant 0 : index
    %c0_17 = arith.constant 0 : index
    %36 = vector.load %arg8[%c0_16, %c0_17] : memref<232x128xbf16, #tpu.memory_space<vmem>>, vector<16x128xbf16>
    tpu.vector_store %arg8[%c0_16, %c0_17], %35 {strides = array<i32>} : memref<232x128xbf16, #tpu.memory_space<vmem>>, vector<16x128xbf16>,
    %cst_18 = arith.constant 0.000000e+00 : bf16
    %37 = vector.broadcast %cst_18 : bf16 to vector<16x128xbf16>
    %c216 = arith.constant 216 : index
    %c0_19 = arith.constant 0 : index
    %38 = vector.load %arg8[%c216, %c0_19] : memref<232x128xbf16, #tpu.memory_space<vmem>>, vector<16x128xbf16>
    tpu.vector_store %arg8[%c216, %c0_19], %37 {strides = array<i32>} : memref<232x128xbf16, #tpu.memory_space<vmem>>, vector<16x128xbf16>,
    %39 = arith.truncf %34 : vector<200x128xf32> to vector<200x128xbf16>
    %c16 = arith.constant 16 : index
    %c0_20 = arith.constant 0 : index
    %40 = vector.load %arg8[%c16, %c0_20] : memref<232x128xbf16, #tpu.memory_space<vmem>>, vector<200x128xbf16>
    tpu.vector_store %arg8[%c16, %c0_20], %39 {strides = array<i32>} : memref<232x128xbf16, #tpu.memory_space<vmem>>, vector<200x128xbf16>,
    %c5 = arith.constant 5 : index
    %c0_21 = arith.constant 0 : index
    %41 = vector.load %arg8[%c5, %c0_21] : memref<232x128xbf16, #tpu.memory_space<vmem>>, vector<200x128xbf16>
    %c6 = arith.constant 6 : index
    %c0_22 = arith.constant 0 : index
    %42 = vector.load %arg8[%c6, %c0_22] : memref<232x128xbf16, #tpu.memory_space<vmem>>, vector<200x128xbf16>
    %c7 = arith.constant 7 : index
    %c0_23 = arith.constant 0 : index
    %43 = vector.load %arg8[%c7, %c0_23] : memref<232x128xbf16, #tpu.memory_space<vmem>>, vector<200x128xbf16>
    %c15 = arith.constant 15 : index
    %c0_24 = arith.constant 0 : index
    %44 = vector.load %arg8[%c15, %c0_24] : memref<232x128xbf16, #tpu.memory_space<vmem>>, vector<200x128xbf16>
    %c16_25 = arith.constant 16 : index
    %c0_26 = arith.constant 0 : index
    %45 = vector.load %arg8[%c16_25, %c0_26] : memref<232x128xbf16, #tpu.memory_space<vmem>>, vector<200x128xbf16>
    %c17 = arith.constant 17 : index
    %c0_27 = arith.constant 0 : index
    %46 = vector.load %arg8[%c17, %c0_27] : memref<232x128xbf16, #tpu.memory_space<vmem>>, vector<200x128xbf16>
    %c25 = arith.constant 25 : index
    %c0_28 = arith.constant 0 : index
    %47 = vector.load %arg8[%c25, %c0_28] : memref<232x128xbf16, #tpu.memory_space<vmem>>, vector<200x128xbf16>
    %c26 = arith.constant 26 : index
    %c0_29 = arith.constant 0 : index
    %48 = vector.load %arg8[%c26, %c0_29] : memref<232x128xbf16, #tpu.memory_space<vmem>>, vector<200x128xbf16>
    %c27 = arith.constant 27 : index
    %c0_30 = arith.constant 0 : index
    %49 = vector.load %arg8[%c27, %c0_30] : memref<232x128xbf16, #tpu.memory_space<vmem>>, vector<200x128xbf16>
    %50 = tpu.concatenate %41, %42, %43, %44, %45, %46, %47, %48, %49 in 1 : vector<200x128xbf16>, vector<200x128xbf16>, vector<200x128xbf16>, vector<200x128xbf16>, vector<200x128xbf16>, vector<200x128xbf16>, vector<200x128xbf16>, vector<200x128xbf16>, vector<200x128xbf16> -> vector<200x1152xbf16>
    %c0_31 = arith.constant 0 : index
    %c0_32 = arith.constant 0 : index
    %51 = vector.load %arg3[%c0_31, %c0_32] : memref<1152x128xbf16, #tpu.memory_space<vmem>>, vector<1152x128xbf16>
    %cst_33 = arith.constant dense<0.000000e+00> : vector<200x128xf32>
    %52 = tpu.matmul %50, %51, %cst_33 {dimension_numbers = #tpu.dot_dimension_numbers<[1], [0], [0], [1], [0, 0, 1, 1], [], []>} : vector<200x1152xbf16>, vector<1152x128xbf16>, vector<200x128xf32> -> vector<200x128xf32>
    %53 = arith.mulf %52, %2 : vector<200x128xf32>
    %cst_34 = arith.constant dense<0.000000e+00> : vector<128xf32>
    %54 = vector.multi_reduction <add>, %53, %cst_34 [0] : vector<200x128xf32> to vector<128xf32>
    %55 = vector.shape_cast %54 : vector<128xf32> to vector<1x128xf32>
    %56 = arith.mulf %53, %53 : vector<200x128xf32>
    %cst_35 = arith.constant dense<0.000000e+00> : vector<128xf32>
    %57 = vector.multi_reduction <add>, %56, %cst_35 [0] : vector<200x128xf32> to vector<128xf32>
    %58 = vector.shape_cast %57 : vector<128xf32> to vector<1x128xf32>
    %cst_36 = arith.constant 7.812500e-03 : f32
    %59 = vector.broadcast %cst_36 : f32 to vector<1x128xf32>
    %60 = arith.mulf %55, %59 : vector<1x128xf32>
    %cst_37 = arith.constant 7.812500e-03 : f32
    %61 = vector.broadcast %cst_37 : f32 to vector<1x128xf32>
    %62 = arith.mulf %58, %61 : vector<1x128xf32>
    %63 = arith.mulf %60, %60 : vector<1x128xf32>
    %64 = arith.subf %62, %63 : vector<1x128xf32>
    %cst_38 = arith.constant 0.000000e+00 : f32
    %65 = vector.broadcast %cst_38 : f32 to vector<1x128xf32>
    %66 = arith.maximumf %64, %65 : vector<1x128xf32>
    %c0_39 = arith.constant 0 : index
    %c0_40 = arith.constant 0 : index
    %67 = vector.load %arg4[%c0_39, %c0_40] : memref<2x128xf32, #tpu.memory_space<vmem>>, vector<1x128xf32>
    %cst_41 = arith.constant 9.99999974E-6 : f32
    %68 = vector.broadcast %cst_41 : f32 to vector<1x128xf32>
    %69 = arith.addf %66, %68 : vector<1x128xf32>
    %70 = math.rsqrt %69 : vector<1x128xf32>
    %71 = arith.mulf %67, %70 : vector<1x128xf32>
    %c1_42 = arith.constant 1 : index
    %c0_43 = arith.constant 0 : index
    %72 = vector.load %arg4[%c1_42, %c0_43] : memref<2x128xf32, #tpu.memory_space<vmem>>, vector<1x128xf32>
    %73 = arith.mulf %60, %71 : vector<1x128xf32>
    %74 = arith.subf %72, %73 : vector<1x128xf32>
    %75 = vector.broadcast %71 : vector<1x128xf32> to vector<200x128xf32>
    %76 = arith.mulf %53, %75 : vector<200x128xf32>
    %77 = vector.broadcast %74 : vector<1x128xf32> to vector<200x128xf32>
    %78 = arith.addf %76, %77 : vector<200x128xf32>
    %c0_44 = arith.constant 0 : index
    %c0_45 = arith.constant 0 : index
    %79 = vector.load %arg5[%c0_44, %c0_45] : memref<200x128xf32, #tpu.memory_space<vmem>>, vector<200x128xf32>
    %80 = arith.addf %78, %79 : vector<200x128xf32>
    %cst_46 = arith.constant 0.000000e+00 : f32
    %81 = vector.broadcast %cst_46 : f32 to vector<200x128xf32>
    %82 = arith.maximumf %80, %81 : vector<200x128xf32>
    %c0_47 = arith.constant 0 : index
    %c0_48 = arith.constant 0 : index
    %83 = vector.load %arg7[%c0_47, %c0_48] : memref<200x128xf32, #tpu.memory_space<vmem>>, vector<200x128xf32>
    tpu.vector_store %arg7[%c0_47, %c0_48], %82 {strides = array<i32>} : memref<200x128xf32, #tpu.memory_space<vmem>>, vector<200x128xf32>,
    return
  }
}

</mosaic_0001>

<llo_original>
// kernel: tile.6
$region0: #{tile.6}
  #allocation0 [shape = 's32[1]{0}', space=sflag, size = 0x4, scoped, tag = 'scoped memory for tile.6']
  %s0 = inlined_call_operand.vmem [shape: f32[100], index: 0, kind: input, shape index: {}]
  %s1 = inlined_call_operand.vmem [shape: f32[2,1,1,100], index: 1, kind: output, shape index: {}]
  // Predicated region
  $region2: #{tile.6} parent=0 // pred_check
    _
  $region3: #{tile.6} parent=0 // pred_check_branch
    %3 = sbr.rel (0) target = $region5
  $region4: #{tile.6} parent=0 // pred_region
    _
  $region5: #{tile.6} parent=0 // pred_fallthru
    _
  %v4 = vld [vmem:[%s0] ss:$0 sm:$0xff]
  %5 = vst [vmem:[%s1] sm:$0x3] %v4

// kernel: tile.0
$region0: #{tile.0}
  %s0 = inlined_call_operand.vmem [shape: f32[2,1,1,100], index: 0, kind: input, shape index: {}]
  %s1 = inlined_call_operand.vmem [shape: f32[200,1], index: 1, kind: output, shape index: {}]
  $region1: #{tile.0} parent=0
    #allocation0 [shape = 'u8[4096]{0}', space=vmem, size = 0x1000, scoped, tag = 'scoped mem for input reshape']
    %s3 = sshll.u32 1, 2
    %s4 = ssub.s32 %s3, 1
    %v5 = vld [vmem:[%s0] sm:%s4]
    %6 = vst [vmem:[#allocation0] sm:%s4] %v5
    %v7 = vld [vmem:[#allocation0] sm:$0x3]
    %vm8 = vcmask 7168
    %9 = vst.msk [vmem:[%s1] ss:$100 sm:$0x3] %vm8, %v7
    %v10 = vld [vmem:[#allocation0] sm:$0x3]
    %11 = vrot.lane.b32.xlu0 %v10, 127
    %v12 = vpop.permute.xlu0 %11
    %vm13 = vcmask 7168
    %s14 = scalar_lea.vmem %s1, 1
    %15 = vst.msk [vmem:[%s14] ss:$100 sm:$0x3] %vm13, %v12
    %v16 = vld [vmem:[#allocation0] sm:$0x3]
    %17 = vrot.lane.b32.xlu0 %v16, 126
    %v18 = vpop.permute.xlu0 %17
    %vm19 = vcmask 7168
    %s20 = scalar_lea.vmem %s1, 2
    %21 = vst.msk [vmem:[%s20] ss:$100 sm:$0x3] %vm19, %v18
    %v22 = vld [vmem:[#allocation0] sm:$0x3]
    %23 = vrot.lane.b32.xlu0 %v22, 125
    %v24 = vpop.permute.xlu0 %23
    %vm25 = vcmask 7168
    %s26 = scalar_lea.vmem %s1, 3
    %27 = vst.msk [vmem:[%s26] ss:$100 sm:$0x3] %vm25, %v24
    %v28 = vld [vmem:[#allocation0] sm:$0x3]
    %29 = vrot.lane.b32.xlu0 %v28, 124
    %v30 = vpop.permute.xlu0 %29
    %vm31 = vcmask 7168
    %s32 = scalar_lea.vmem %s1, 4
    %33 = vst.msk [vmem:[%s32] ss:$100 sm:$0x3] %vm31, %v30
    %v34 = vld [vmem:[#allocation0] sm:$0x3]
    %35 = vrot.lane.b32.xlu0 %v34, 123
    %v36 = vpop.permute.xlu0 %35
    %vm37 = vcmask 7168
    %s38 = scalar_lea.vmem %s1, 5
    %39 = vst.msk [vmem:[%s38] ss:$100 sm:$0x3] %vm37, %v36
    %v40 = vld [vmem:[#allocation0] sm:$0x3]
    %41 = vrot.lane.b32.xlu0 %v40, 122
    %v42 = vpop.permute.xlu0 %41
    %vm43 = vcmask 7168
    %s44 = scalar_lea.vmem %s1, 6
    %45 = vst.msk [vmem:[%s44] ss:$100 sm:$0x3] %vm43, %v42
    %v46 = vld [vmem:[#allocation0] sm:$0x3]
    %47 = vrot.lane.b32.xlu0 %v46, 121
    %v48 = vpop.permute.xlu0 %47
    %vm49 = vcmask 7168
    %s50 = scalar_lea.vmem %s1, 7
    %51 = vst.msk [vmem:[%s50] ss:$100 sm:$0x3] %vm49, %v48
    %v52 = vld [vmem:[#allocation0] sm:$0x3]
    %53 = vrot.lane.b32.xlu0 %v52, 120
    %v54 = vpop.permute.xlu0 %53
    %vm55 = vcmask 7168
    %s56 = scalar_lea.vmem %s1, 8
    %57 = vst.msk [vmem:[%s56] ss:$100 sm:$0x3] %vm55, %v54
    %v58 = vld [vmem:[#allocation0] sm:$0x3]
    %59 = vrot.lane.b32.xlu0 %v58, 119
    %v60 = vpop.permute.xlu0 %59
    %vm61 = vcmask 7168
    %s62 = scalar_lea.vmem %s1, 9
    %63 = vst.msk [vmem:[%s62] ss:$100 sm:$0x3] %vm61, %v60
    %v64 = vld [vmem:[#allocation0] sm:$0x3]
    %65 = vrot.lane.b32.xlu0 %v64, 118
    %v66 = vpop.permute.xlu0 %65
    %vm67 = vcmask 7168
    %s68 = scalar_lea.vmem %s1, 10
    %69 = vst.msk [vmem:[%s68] ss:$100 sm:$0x3] %vm67, %v66
    %v70 = vld [vmem:[#allocation0] sm:$0x3]
    %71 = vrot.lane.b32.xlu0 %v70, 117
    %v72 = vpop.permute.xlu0 %71
    %vm73 = vcmask 7168
    %s74 = scalar_lea.vmem %s1, 11
    %75 = vst.msk [vmem:[%s74] ss:$100 sm:$0x3] %vm73, %v72
    %v76 = vld [vmem:[#allocation0] sm:$0x3]
    %77 = vrot.lane.b32.xlu0 %v76, 116
    %v78 = vpop.permute.xlu0 %77
    %vm79 = vcmask 7168
    %s80 = scalar_lea.vmem %s1, 12
    %81 = vst.msk [vmem:[%s80] ss:$100 sm:$0x3] %vm79, %v78
    %v82 = vld [vmem:[#allocation0] sm:$0x3]
    %83 = vrot.lane.b32.xlu0 %v82, 115
    %v84 = vpop.permute.xlu0 %83
    %vm85 = vcmask 7168
    %s86 = scalar_lea.vmem %s1, 13
    %87 = vst.msk [vmem:[%s86] ss:$100 sm:$0x3] %vm85, %v84
    %v88 = vld [vmem:[#allocation0] sm:$0x3]
    %89 = vrot.lane.b32.xlu0 %v88, 114
    %v90 = vpop.permute.xlu0 %89
    %vm91 = vcmask 7168
    %s92 = scalar_lea.vmem %s1, 14
    %93 = vst.msk [vmem:[%s92] ss:$100 sm:$0x3] %vm91, %v90
    %v94 = vld [vmem:[#allocation0] sm:$0x3]
    %95 = vrot.lane.b32.xlu0 %v94, 113
    %v96 = vpop.permute.xlu0 %95
    %vm97 = vcmask 7168
    %s98 = scalar_lea.vmem %s1, 15
    %99 = vst.msk [vmem:[%s98] ss:$100 sm:$0x3] %vm97, %v96
    %v100 = vld [vmem:[#allocation0] sm:$0x3]
    %101 = vrot.lane.b32.xlu0 %v100, 112
    %v102 = vpop.permute.xlu0 %101
    %vm103 = vcmask 7168
    %s104 = scalar_lea.vmem %s1, 16
    %105 = vst.msk [vmem:[%s104] ss:$100 sm:$0x3] %vm103, %v102
    %v106 = vld [vmem:[#allocation0] sm:$0x3]
    %107 = vrot.lane.b32.xlu0 %v106, 111
    %v108 = vpop.permute.xlu0 %107
    %vm109 = vcmask 7168
    %s110 = scalar_lea.vmem %s1, 17
    %111 = vst.msk [vmem:[%s110] ss:$100 sm:$0x3] %vm109, %v108
    %v112 = vld [vmem:[#allocation0] sm:$0x3]
    %113 = vrot.lane.b32.xlu0 %v112, 110
    %v114 = vpop.permute.xlu0 %113
    %vm115 = vcmask 7168
    %s116 = scalar_lea.vmem %s1, 18
    %117 = vst.msk [vmem:[%s116] ss:$100 sm:$0x3] %vm115, %v114
    %v118 = vld [vmem:[#allocation0] sm:$0x3]
    %119 = vrot.lane.b32.xlu0 %v118, 109
    %v120 = vpop.permute.xlu0 %119
    %vm121 = vcmask 7168
    %s122 = scalar_lea.vmem %s1, 19
    %123 = vst.msk [vmem:[%s122] ss:$100 sm:$0x3] %vm121, %v120
    %v124 = vld [vmem:[#allocation0] sm:$0x3]
    %125 = vrot.lane.b32.xlu0 %v124, 108
    %v126 = vpop.permute.xlu0 %125
    %vm127 = vcmask 7168
    %s128 = scalar_lea.vmem %s1, 20
    %129 = vst.msk [vmem:[%s128] ss:$100 sm:$0x3] %vm127, %v126
    %v130 = vld [vmem:[#allocation0] sm:$0x3]
    %131 = vrot.lane.b32.xlu0 %v130, 107
    %v132 = vpop.permute.xlu0 %131
    %vm133 = vcmask 7168
    %s134 = scalar_lea.vmem %s1, 21
    %135 = vst.msk [vmem:[%s134] ss:$100 sm:$0x3] %vm133, %v132
    %v136 = vld [vmem:[#allocation0] sm:$0x3]
    %137 = vrot.lane.b32.xlu0 %v136, 106
    %v138 = vpop.permute.xlu0 %137
    %vm139 = vcmask 7168
    %s140 = scalar_lea.vmem %s1, 22
    %141 = vst.msk [vmem:[%s140] ss:$100 sm:$0x3] %vm139, %v138
    %v142 = vld [vmem:[#allocation0] sm:$0x3]
    %143 = vrot.lane.b32.xlu0 %v142, 105
    %v144 = vpop.permute.xlu0 %143
    %vm145 = vcmask 7168
    %s146 = scalar_lea.vmem %s1, 23
    %147 = vst.msk [vmem:[%s146] ss:$100 sm:$0x3] %vm145, %v144
    %v148 = vld [vmem:[#allocation0] sm:$0x3]
    %149 = vrot.lane.b32.xlu0 %v148, 104
    %v150 = vpop.permute.xlu0 %149
    %vm151 = vcmask 7168
    %s152 = scalar_lea.vmem %s1, 24
    %153 = vst.msk [vmem:[%s152] ss:$100 sm:$0x3] %vm151, %v150
    %v154 = vld [vmem:[#allocation0] sm:$0x3]
    %155 = vrot.lane.b32.xlu0 %v154, 103
    %v156 = vpop.permute.xlu0 %155
    %vm157 = vcmask 7168
    %s158 = scalar_lea.vmem %s1, 25
    %159 = vst.msk [vmem:[%s158] ss:$100 sm:$0x3] %vm157, %v156
    %v160 = vld [vmem:[#allocation0] sm:$0x3]
    %161 = vrot.lane.b32.xlu0 %v160, 102
    %v162 = vpop.permute.xlu0 %161
    %vm163 = vcmask 7168
    %s164 = scalar_lea.vmem %s1, 26
    %165 = vst.msk [vmem:[%s164] ss:$100 sm:$0x3] %vm163, %v162
    %v166 = vld [vmem:[#allocation0] sm:$0x3]
    %167 = vrot.lane.b32.xlu0 %v166, 101
    %v168 = vpop.permute.xlu0 %167
    %vm169 = vcmask 7168
    %s170 = scalar_lea.vmem %s1, 27
    %171 = vst.msk [vmem:[%s170] ss:$100 sm:$0x3] %vm169, %v168
    %s172 = scalar_lea.vmem [#allocation0], 1
    %s173 = smov 3
    %v174 = vld [vmem:[%s172] ss:$-1 sm:%s173]
    %175 = vrot.lane.b32.xlu0 %v174, 100
    %v176 = vpop.permute.xlu0 %175
    %vm177 = vcmask 7168
    %s178 = scalar_lea.vmem %s1, 128
    %179 = vst.msk [vmem:[%s178] ss:$-100 sm:$0x3] %vm177, %v176
    %s180 = scalar_lea.vmem [#allocation0], 1
    %s181 = smov 3
    %v182 = vld [vmem:[%s180] ss:$-1 sm:%s181]
    %183 = vrot.lane.b32.xlu0 %v182, 99
    %v184 = vpop.permute.xlu0 %183
    %vm185 = vcmask 7168
    %s186 = scalar_lea.vmem %s1, 129
    %187 = vst.msk [vmem:[%s186] ss:$-100 sm:$0x3] %vm185, %v184
    %s188 = scalar_lea.vmem [#allocation0], 1
    %s189 = smov 3
    %v190 = vld [vmem:[%s188] ss:$-1 sm:%s189]
    %191 = vrot.lane.b32.xlu0 %v190, 98
    %v192 = vpop.permute.xlu0 %191
    %vm193 = vcmask 7168
    %s194 = scalar_lea.vmem %s1, 130
    %195 = vst.msk [vmem:[%s194] ss:$-100 sm:$0x3] %vm193, %v192
    %s196 = scalar_lea.vmem [#allocation0], 1
    %s197 = smov 3
    %v198 = vld [vmem:[%s196] ss:$-1 sm:%s197]
    %199 = vrot.lane.b32.xlu0 %v198, 97
    %v200 = vpop.permute.xlu0 %199
    %vm201 = vcmask 7168
    %s202 = scalar_lea.vmem %s1, 131
    %203 = vst.msk [vmem:[%s202] ss:$-100 sm:$0x3] %vm201, %v200
    %v204 = vld [vmem:[#allocation0] sm:$0x3]
    %205 = vrot.lane.b32.xlu0 %v204, 96
    %v206 = vpop.permute.xlu0 %205
    %vm207 = vcmask 7168
    %s208 = scalar_lea.vmem %s1, 32
    %209 = vst.msk [vmem:[%s208] ss:$100 sm:$0x3] %vm207, %v206
    %v210 = vld [vmem:[#allocation0] sm:$0x3]
    %211 = vrot.lane.b32.xlu0 %v210, 95
    %v212 = vpop.permute.xlu0 %211
    %vm213 = vcmask 7168
    %s214 = scalar_lea.vmem %s1, 33
    %215 = vst.msk [vmem:[%s214] ss:$100 sm:$0x3] %vm213, %v212
    %v216 = vld [vmem:[#allocation0] sm:$0x3]
    %217 = vrot.lane.b32.xlu0 %v216, 94
    %v218 = vpop.permute.xlu0 %217
    %vm219 = vcmask 7168
    %s220 = scalar_lea.vmem %s1, 34
    %221 = vst.msk [vmem:[%s220] ss:$100 sm:$0x3] %vm219, %v218
    %v222 = vld [vmem:[#allocation0] sm:$0x3]
    %223 = vrot.lane.b32.xlu0 %v222, 93
    %v224 = vpop.permute.xlu0 %223
    %vm225 = vcmask 7168
    %s226 = scalar_lea.vmem %s1, 35
    %227 = vst.msk [vmem:[%s226] ss:$100 sm:$0x3] %vm225, %v224
    %v228 = vld [vmem:[#allocation0] sm:$0x3]
    %229 = vrot.lane.b32.xlu0 %v228, 92
    %v230 = vpop.permute.xlu0 %229
    %vm231 = vcmask 7168
    %s232 = scalar_lea.vmem %s1, 36
    %233 = vst.msk [vmem:[%s232] ss:$100 sm:$0x3] %vm231, %v230
    %v234 = vld [vmem:[#allocation0] sm:$0x3]
    %235 = vrot.lane.b32.xlu0 %v234, 91
    %v236 = vpop.permute.xlu0 %235
    %vm237 = vcmask 7168
    %s238 = scalar_lea.vmem %s1, 37
    %239 = vst.msk [vmem:[%s238] ss:$100 sm:$0x3] %vm237, %v236
    %v240 = vld [vmem:[#allocation0] sm:$0x3]
    %241 = vrot.lane.b32.xlu0 %v240, 90
    %v242 = vpop.permute.xlu0 %241
    %vm243 = vcmask 7168
    %s244 = scalar_lea.vmem %s1, 38
    %245 = vst.msk [vmem:[%s244] ss:$100 sm:$0x3] %vm243, %v242
    %v246 = vld [vmem:[#allocation0] sm:$0x3]
    %247 = vrot.lane.b32.xlu0 %v246, 89
    %v248 = vpop.permute.xlu0 %247
    %vm249 = vcmask 7168
    %s250 = scalar_lea.vmem %s1, 39
    %251 = vst.msk [vmem:[%s250] ss:$100 sm:$0x3] %vm249, %v248
    %v252 = vld [vmem:[#allocation0] sm:$0x3]
    %253 = vrot.lane.b32.xlu0 %v252, 88
    %v254 = vpop.permute.xlu0 %253
    %vm255 = vcmask 7168
    %s256 = scalar_lea.vmem %s1, 40
    %257 = vst.msk [vmem:[%s256] ss:$100 sm:$0x3] %vm255, %v254
    %v258 = vld [vmem:[#allocation0] sm:$0x3]
    %259 = vrot.lane.b32.xlu0 %v258, 87
    %v260 = vpop.permute.xlu0 %259
    %vm261 = vcmask 7168
    %s262 = scalar_lea.vmem %s1, 41
    %263 = vst.msk [vmem:[%s262] ss:$100 sm:$0x3] %vm261, %v260
    %v264 = vld [vmem:[#allocation0] sm:$0x3]
    %265 = vrot.lane.b32.xlu0 %v264, 86
    %v266 = vpop.permute.xlu0 %265
    %vm267 = vcmask 7168
    %s268 = scalar_lea.vmem %s1, 42
    %269 = vst.msk [vmem:[%s268] ss:$100 sm:$0x3] %vm267, %v266
    %v270 = vld [vmem:[#allocation0] sm:$0x3]
    %271 = vrot.lane.b32.xlu0 %v270, 85
    %v272 = vpop.permute.xlu0 %271
    %vm273 = vcmask 7168
    %s274 = scalar_lea.vmem %s1, 43
    %275 = vst.msk [vmem:[%s274] ss:$100 sm:$0x3] %vm273, %v272
    %v276 = vld [vmem:[#allocation0] sm:$0x3]
    %277 = vrot.lane.b32.xlu0 %v276, 84
    %v278 = vpop.permute.xlu0 %277
    %vm279 = vcmask 7168
    %s280 = scalar_lea.vmem %s1, 44
    %281 = vst.msk [vmem:[%s280] ss:$100 sm:$0x3] %vm279, %v278
    %v282 = vld [vmem:[#allocation0] sm:$0x3]
    %283 = vrot.lane.b32.xlu0 %v282, 83
    %v284 = vpop.permute.xlu0 %283
    %vm285 = vcmask 7168
    %s286 = scalar_lea.vmem %s1, 45
    %287 = vst.msk [vmem:[%s286] ss:$100 sm:$0x3] %vm285, %v284
    %v288 = vld [vmem:[#allocation0] sm:$0x3]
    %289 = vrot.lane.b32.xlu0 %v288, 82
    %v290 = vpop.permute.xlu0 %289
    %vm291 = vcmask 7168
    %s292 = scalar_lea.vmem %s1, 46
    %293 = vst.msk [vmem:[%s292] ss:$100 sm:$0x3] %vm291, %v290
    %v294 = vld [vmem:[#allocation0] sm:$0x3]
    %295 = vrot.lane.b32.xlu0 %v294, 81
    %v296 = vpop.permute.xlu0 %295
    %vm297 = vcmask 7168
    %s298 = scalar_lea.vmem %s1, 47
    %299 = vst.msk [vmem:[%s298] ss:$100 sm:$0x3] %vm297, %v296
    %v300 = vld [vmem:[#allocation0] sm:$0x3]
    %301 = vrot.lane.b32.xlu0 %v300, 80
    %v302 = vpop.permute.xlu0 %301
    %vm303 = vcmask 7168
    %s304 = scalar_lea.vmem %s1, 48
    %305 = vst.msk [vmem:[%s304] ss:$100 sm:$0x3] %vm303, %v302
    %v306 = vld [vmem:[#allocation0] sm:$0x3]
    %307 = vrot.lane.b32.xlu0 %v306, 79
    %v308 = vpop.permute.xlu0 %307
    %vm309 = vcmask 7168
    %s310 = scalar_lea.vmem %s1, 49
    %311 = vst.msk [vmem:[%s310] ss:$100 sm:$0x3] %vm309, %v308
    %v312 = vld [vmem:[#allocation0] sm:$0x3]
    %313 = vrot.lane.b32.xlu0 %v312, 78
    %v314 = vpop.permute.xlu0 %313
    %vm315 = vcmask 7168
    %s316 = scalar_lea.vmem %s1, 50
    %317 = vst.msk [vmem:[%s316] ss:$100 sm:$0x3] %vm315, %v314
    %v318 = vld [vmem:[#allocation0] sm:$0x3]
    %319 = vrot.lane.b32.xlu0 %v318, 77
    %v320 = vpop.permute.xlu0 %319
    %vm321 = vcmask 7168
    %s322 = scalar_lea.vmem %s1, 51
    %323 = vst.msk [vmem:[%s322] ss:$100 sm:$0x3] %vm321, %v320
    %v324 = vld [vmem:[#allocation0] sm:$0x3]
    %325 = vrot.lane.b32.xlu0 %v324, 76
    %v326 = vpop.permute.xlu0 %325
    %vm327 = vcmask 7168
    %s328 = scalar_lea.vmem %s1, 52
    %329 = vst.msk [vmem:[%s328] ss:$100 sm:$0x3] %vm327, %v326
    %v330 = vld [vmem:[#allocation0] sm:$0x3]
    %331 = vrot.lane.b32.xlu0 %v330, 75
    %v332 = vpop.permute.xlu0 %331
    %vm333 = vcmask 7168
    %s334 = scalar_lea.vmem %s1, 53
    %335 = vst.msk [vmem:[%s334] ss:$100 sm:$0x3] %vm333, %v332
    %v336 = vld [vmem:[#allocation0] sm:$0x3]
    %337 = vrot.lane.b32.xlu0 %v336, 74
    %v338 = vpop.permute.xlu0 %337
    %vm339 = vcmask 7168
    %s340 = scalar_lea.vmem %s1, 54
    %341 = vst.msk [vmem:[%s340] ss:$100 sm:$0x3] %vm339, %v338
    %v342 = vld [vmem:[#allocation0] sm:$0x3]
    %343 = vrot.lane.b32.xlu0 %v342, 73
    %v344 = vpop.permute.xlu0 %343
    %vm345 = vcmask 7168
    %s346 = scalar_lea.vmem %s1, 55
    %347 = vst.msk [vmem:[%s346] ss:$100 sm:$0x3] %vm345, %v344
    %v348 = vld [vmem:[#allocation0] sm:$0x3]
    %349 = vrot.lane.b32.xlu0 %v348, 72
    %v350 = vpop.permute.xlu0 %349
    %vm351 = vcmask 7168
    %s352 = scalar_lea.vmem %s1, 56
    %353 = vst.msk [vmem:[%s352] ss:$100 sm:$0x3] %vm351, %v350
    %v354 = vld [vmem:[#allocation0] sm:$0x3]
    %355 = vrot.lane.b32.xlu0 %v354, 71
    %v356 = vpop.permute.xlu0 %355
    %vm357 = vcmask 7168
    %s358 = scalar_lea.vmem %s1, 57
    %359 = vst.msk [vmem:[%s358] ss:$100 sm:$0x3] %vm357, %v356
    %v360 = vld [vmem:[#allocation0] sm:$0x3]
    %361 = vrot.lane.b32.xlu0 %v360, 70
    %v362 = vpop.permute.xlu0 %361
    %vm363 = vcmask 7168
    %s364 = scalar_lea.vmem %s1, 58
    %365 = vst.msk [vmem:[%s364] ss:$100 sm:$0x3] %vm363, %v362
    %v366 = vld [vmem:[#allocation0] sm:$0x3]
    %367 = vrot.lane.b32.xlu0 %v366, 69
    %v368 = vpop.permute.xlu0 %367
    %vm369 = vcmask 7168
    %s370 = scalar_lea.vmem %s1, 59
    %371 = vst.msk [vmem:[%s370] ss:$100 sm:$0x3] %vm369, %v368
    %s372 = scalar_lea.vmem [#allocation0], 1
    %s373 = smov 3
    %v374 = vld [vmem:[%s372] ss:$-1 sm:%s373]
    %375 = vrot.lane.b32.xlu0 %v374, 68
    %v376 = vpop.permute.xlu0 %375
    %vm377 = vcmask 7168
    %s378 = scalar_lea.vmem %s1, 160
    %379 = vst.msk [vmem:[%s378] ss:$-100 sm:$0x3] %vm377, %v376
    %s380 = scalar_lea.vmem [#allocation0], 1
    %s381 = smov 3
    %v382 = vld [vmem:[%s380] ss:$-1 sm:%s381]
    %383 = vrot.lane.b32.xlu0 %v382, 67
    %v384 = vpop.permute.xlu0 %383
    %vm385 = vcmask 7168
    %s386 = scalar_lea.vmem %s1, 161
    %387 = vst.msk [vmem:[%s386] ss:$-100 sm:$0x3] %vm385, %v384
    %s388 = scalar_lea.vmem [#allocation0], 1
    %s389 = smov 3
    %v390 = vld [vmem:[%s388] ss:$-1 sm:%s389]
    %391 = vrot.lane.b32.xlu0 %v390, 66
    %v392 = vpop.permute.xlu0 %391
    %vm393 = vcmask 7168
    %s394 = scalar_lea.vmem %s1, 162
    %395 = vst.msk [vmem:[%s394] ss:$-100 sm:$0x3] %vm393, %v392
    %s396 = scalar_lea.vmem [#allocation0], 1
    %s397 = smov 3
    %v398 = vld [vmem:[%s396] ss:$-1 sm:%s397]
    %399 = vrot.lane.b32.xlu0 %v398, 65
    %v400 = vpop.permute.xlu0 %399
    %vm401 = vcmask 7168
    %s402 = scalar_lea.vmem %s1, 163
    %403 = vst.msk [vmem:[%s402] ss:$-100 sm:$0x3] %vm401, %v400
    %v404 = vld [vmem:[#allocation0] sm:$0x3]
    %405 = vrot.lane.b32.xlu0 %v404, 64
    %v406 = vpop.permute.xlu0 %405
    %vm407 = vcmask 7168
    %s408 = scalar_lea.vmem %s1, 64
    %409 = vst.msk [vmem:[%s408] ss:$100 sm:$0x3] %vm407, %v406
    %v410 = vld [vmem:[#allocation0] sm:$0x3]
    %411 = vrot.lane.b32.xlu0 %v410, 63
    %v412 = vpop.permute.xlu0 %411
    %vm413 = vcmask 7168
    %s414 = scalar_lea.vmem %s1, 65
    %415 = vst.msk [vmem:[%s414] ss:$100 sm:$0x3] %vm413, %v412
    %v416 = vld [vmem:[#allocation0] sm:$0x3]
    %417 = vrot.lane.b32.xlu0 %v416, 62
    %v418 = vpop.permute.xlu0 %417
    %vm419 = vcmask 7168
    %s420 = scalar_lea.vmem %s1, 66
    %421 = vst.msk [vmem:[%s420] ss:$100 sm:$0x3] %vm419, %v418
    %v422 = vld [vmem:[#allocation0] sm:$0x3]
    %423 = vrot.lane.b32.xlu0 %v422, 61
    %v424 = vpop.permute.xlu0 %423
    %vm425 = vcmask 7168
    %s426 = scalar_lea.vmem %s1, 67
    %427 = vst.msk [vmem:[%s426] ss:$100 sm:$0x3] %vm425, %v424
    %v428 = vld [vmem:[#allocation0] sm:$0x3]
    %429 = vrot.lane.b32.xlu0 %v428, 60
    %v430 = vpop.permute.xlu0 %429
    %vm431 = vcmask 7168
    %s432 = scalar_lea.vmem %s1, 68
    %433 = vst.msk [vmem:[%s432] ss:$100 sm:$0x3] %vm431, %v430
    %v434 = vld [vmem:[#allocation0] sm:$0x3]
    %435 = vrot.lane.b32.xlu0 %v434, 59
    %v436 = vpop.permute.xlu0 %435
    %vm437 = vcmask 7168
    %s438 = scalar_lea.vmem %s1, 69
    %439 = vst.msk [vmem:[%s438] ss:$100 sm:$0x3] %vm437, %v436
    %v440 = vld [vmem:[#allocation0] sm:$0x3]
    %441 = vrot.lane.b32.xlu0 %v440, 58
    %v442 = vpop.permute.xlu0 %441
    %vm443 = vcmask 7168
    %s444 = scalar_lea.vmem %s1, 70
    %445 = vst.msk [vmem:[%s444] ss:$100 sm:$0x3] %vm443, %v442
    %v446 = vld [vmem:[#allocation0] sm:$0x3]
    %447 = vrot.lane.b32.xlu0 %v446, 57
    %v448 = vpop.permute.xlu0 %447
    %vm449 = vcmask 7168
    %s450 = scalar_lea.vmem %s1, 71
    %451 = vst.msk [vmem:[%s450] ss:$100 sm:$0x3] %vm449, %v448
    %v452 = vld [vmem:[#allocation0] sm:$0x3]
    %453 = vrot.lane.b32.xlu0 %v452, 56
    %v454 = vpop.permute.xlu0 %453
    %vm455 = vcmask 7168
    %s456 = scalar_lea.vmem %s1, 72
    %457 = vst.msk [vmem:[%s456] ss:$100 sm:$0x3] %vm455, %v454
    %v458 = vld [vmem:[#allocation0] sm:$0x3]
    %459 = vrot.lane.b32.xlu0 %v458, 55
    %v460 = vpop.permute.xlu0 %459
    %vm461 = vcmask 7168
    %s462 = scalar_lea.vmem %s1, 73
    %463 = vst.msk [vmem:[%s462] ss:$100 sm:$0x3] %vm461, %v460
    %v464 = vld [vmem:[#allocation0] sm:$0x3]
    %465 = vrot.lane.b32.xlu0 %v464, 54
    %v466 = vpop.permute.xlu0 %465
    %vm467 = vcmask 7168
    %s468 = scalar_lea.vmem %s1, 74
    %469 = vst.msk [vmem:[%s468] ss:$100 sm:$0x3] %vm467, %v466
    %v470 = vld [vmem:[#allocation0] sm:$0x3]
    %471 = vrot.lane.b32.xlu0 %v470, 53
    %v472 = vpop.permute.xlu0 %471
    %vm473 = vcmask 7168
    %s474 = scalar_lea.vmem %s1, 75
    %475 = vst.msk [vmem:[%s474] ss:$100 sm:$0x3] %vm473, %v472
    %v476 = vld [vmem:[#allocation0] sm:$0x3]
    %477 = vrot.lane.b32.xlu0 %v476, 52
    %v478 = vpop.permute.xlu0 %477
    %vm479 = vcmask 7168
    %s480 = scalar_lea.vmem %s1, 76
    %481 = vst.msk [vmem:[%s480] ss:$100 sm:$0x3] %vm479, %v478
    %v482 = vld [vmem:[#allocation0] sm:$0x3]
    %483 = vrot.lane.b32.xlu0 %v482, 51
    %v484 = vpop.permute.xlu0 %483
    %vm485 = vcmask 7168
    %s486 = scalar_lea.vmem %s1, 77
    %487 = vst.msk [vmem:[%s486] ss:$100 sm:$0x3] %vm485, %v484
    %v488 = vld [vmem:[#allocation0] sm:$0x3]
    %489 = vrot.lane.b32.xlu0 %v488, 50
    %v490 = vpop.permute.xlu0 %489
    %vm491 = vcmask 7168
    %s492 = scalar_lea.vmem %s1, 78
    %493 = vst.msk [vmem:[%s492] ss:$100 sm:$0x3] %vm491, %v490
    %v494 = vld [vmem:[#allocation0] sm:$0x3]
    %495 = vrot.lane.b32.xlu0 %v494, 49
    %v496 = vpop.permute.xlu0 %495
    %vm497 = vcmask 7168
    %s498 = scalar_lea.vmem %s1, 79
    %499 = vst.msk [vmem:[%s498] ss:$100 sm:$0x3] %vm497, %v496
    %v500 = vld [vmem:[#allocation0] sm:$0x3]
    %501 = vrot.lane.b32.xlu0 %v500, 48
    %v502 = vpop.permute.xlu0 %501
    %vm503 = vcmask 7168
    %s504 = scalar_lea.vmem %s1, 80
    %505 = vst.msk [vmem:[%s504] ss:$100 sm:$0x3] %vm503, %v502
    %v506 = vld [vmem:[#allocation0] sm:$0x3]
    %507 = vrot.lane.b32.xlu0 %v506, 47
    %v508 = vpop.permute.xlu0 %507
    %vm509 = vcmask 7168
    %s510 = scalar_lea.vmem %s1, 81
    %511 = vst.msk [vmem:[%s510] ss:$100 sm:$0x3] %vm509, %v508
    %v512 = vld [vmem:[#allocation0] sm:$0x3]
    %513 = vrot.lane.b32.xlu0 %v512, 46
    %v514 = vpop.permute.xlu0 %513
    %vm515 = vcmask 7168
    %s516 = scalar_lea.vmem %s1, 82
    %517 = vst.msk [vmem:[%s516] ss:$100 sm:$0x3] %vm515, %v514
    %v518 = vld [vmem:[#allocation0] sm:$0x3]
    %519 = vrot.lane.b32.xlu0 %v518, 45
    %v520 = vpop.permute.xlu0 %519
    %vm521 = vcmask 7168
    %s522 = scalar_lea.vmem %s1, 83
    %523 = vst.msk [vmem:[%s522] ss:$100 sm:$0x3] %vm521, %v520
    %v524 = vld [vmem:[#allocation0] sm:$0x3]
    %525 = vrot.lane.b32.xlu0 %v524, 44
    %v526 = vpop.permute.xlu0 %525
    %vm527 = vcmask 7168
    %s528 = scalar_lea.vmem %s1, 84
    %529 = vst.msk [vmem:[%s528] ss:$100 sm:$0x3] %vm527, %v526
    %v530 = vld [vmem:[#allocation0] sm:$0x3]
    %531 = vrot.lane.b32.xlu0 %v530, 43
    %v532 = vpop.permute.xlu0 %531
    %vm533 = vcmask 7168
    %s534 = scalar_lea.vmem %s1, 85
    %535 = vst.msk [vmem:[%s534] ss:$100 sm:$0x3] %vm533, %v532
    %v536 = vld [vmem:[#allocation0] sm:$0x3]
    %537 = vrot.lane.b32.xlu0 %v536, 42
    %v538 = vpop.permute.xlu0 %537
    %vm539 = vcmask 7168
    %s540 = scalar_lea.vmem %s1, 86
    %541 = vst.msk [vmem:[%s540] ss:$100 sm:$0x3] %vm539, %v538
    %v542 = vld [vmem:[#allocation0] sm:$0x3]
    %543 = vrot.lane.b32.xlu0 %v542, 41
    %v544 = vpop.permute.xlu0 %543
    %vm545 = vcmask 7168
    %s546 = scalar_lea.vmem %s1, 87
    %547 = vst.msk [vmem:[%s546] ss:$100 sm:$0x3] %vm545, %v544
    %v548 = vld [vmem:[#allocation0] sm:$0x3]
    %549 = vrot.lane.b32.xlu0 %v548, 40
    %v550 = vpop.permute.xlu0 %549
    %vm551 = vcmask 7168
    %s552 = scalar_lea.vmem %s1, 88
    %553 = vst.msk [vmem:[%s552] ss:$100 sm:$0x3] %vm551, %v550
    %v554 = vld [vmem:[#allocation0] sm:$0x3]
    %555 = vrot.lane.b32.xlu0 %v554, 39
    %v556 = vpop.permute.xlu0 %555
    %vm557 = vcmask 7168
    %s558 = scalar_lea.vmem %s1, 89
    %559 = vst.msk [vmem:[%s558] ss:$100 sm:$0x3] %vm557, %v556
    %v560 = vld [vmem:[#allocation0] sm:$0x3]
    %561 = vrot.lane.b32.xlu0 %v560, 38
    %v562 = vpop.permute.xlu0 %561
    %vm563 = vcmask 7168
    %s564 = scalar_lea.vmem %s1, 90
    %565 = vst.msk [vmem:[%s564] ss:$100 sm:$0x3] %vm563, %v562
    %v566 = vld [vmem:[#allocation0] sm:$0x3]
    %567 = vrot.lane.b32.xlu0 %v566, 37
    %v568 = vpop.permute.xlu0 %567
    %vm569 = vcmask 7168
    %s570 = scalar_lea.vmem %s1, 91
    %571 = vst.msk [vmem:[%s570] ss:$100 sm:$0x3] %vm569, %v568
    %s572 = scalar_lea.vmem [#allocation0], 1
    %s573 = smov 3
    %v574 = vld [vmem:[%s572] ss:$-1 sm:%s573]
    %575 = vrot.lane.b32.xlu0 %v574, 36
    %v576 = vpop.permute.xlu0 %575
    %vm577 = vcmask 7168
    %s578 = scalar_lea.vmem %s1, 192
    %579 = vst.msk [vmem:[%s578] ss:$-100 sm:$0x3] %vm577, %v576
    %s580 = scalar_lea.vmem [#allocation0], 1
    %s581 = smov 3
    %v582 = vld [vmem:[%s580] ss:$-1 sm:%s581]
    %583 = vrot.lane.b32.xlu0 %v582, 35
    %v584 = vpop.permute.xlu0 %583
    %vm585 = vcmask 7168
    %s586 = scalar_lea.vmem %s1, 193
    %587 = vst.msk [vmem:[%s586] ss:$-100 sm:$0x3] %vm585, %v584
    %s588 = scalar_lea.vmem [#allocation0], 1
    %s589 = smov 3
    %v590 = vld [vmem:[%s588] ss:$-1 sm:%s589]
    %591 = vrot.lane.b32.xlu0 %v590, 34
    %v592 = vpop.permute.xlu0 %591
    %vm593 = vcmask 7168
    %s594 = scalar_lea.vmem %s1, 194
    %595 = vst.msk [vmem:[%s594] ss:$-100 sm:$0x3] %vm593, %v592
    %s596 = scalar_lea.vmem [#allocation0], 1
    %s597 = smov 3
    %v598 = vld [vmem:[%s596] ss:$-1 sm:%s597]
    %599 = vrot.lane.b32.xlu0 %v598, 33
    %v600 = vpop.permute.xlu0 %599
    %vm601 = vcmask 7168
    %s602 = scalar_lea.vmem %s1, 195
    %603 = vst.msk [vmem:[%s602] ss:$-100 sm:$0x3] %vm601, %v600
    %v604 = vld [vmem:[#allocation0] sm:$0x3]
    %605 = vrot.lane.b32.xlu0 %v604, 32
    %v606 = vpop.permute.xlu0 %605
    %vm607 = vcmask 7168
    %s608 = scalar_lea.vmem %s1, 96
    %609 = vst.msk [vmem:[%s608] ss:$100 sm:$0x3] %vm607, %v606
    %v610 = vld [vmem:[#allocation0] sm:$0x3]
    %611 = vrot.lane.b32.xlu0 %v610, 31
    %v612 = vpop.permute.xlu0 %611
    %vm613 = vcmask 7168
    %s614 = scalar_lea.vmem %s1, 97
    %615 = vst.msk [vmem:[%s614] ss:$100 sm:$0x3] %vm613, %v612
    %v616 = vld [vmem:[#allocation0] sm:$0x3]
    %617 = vrot.lane.b32.xlu0 %v616, 30
    %v618 = vpop.permute.xlu0 %617
    %vm619 = vcmask 7168
    %s620 = scalar_lea.vmem %s1, 98
    %621 = vst.msk [vmem:[%s620] ss:$100 sm:$0x3] %vm619, %v618
    %v622 = vld [vmem:[#allocation0] sm:$0x3]
    %623 = vrot.lane.b32.xlu0 %v622, 29
    %v624 = vpop.permute.xlu0 %623
    %vm625 = vcmask 7168
    %s626 = scalar_lea.vmem %s1, 99
    %627 = vst.msk [vmem:[%s626] ss:$100 sm:$0x3] %vm625, %v624

// kernel: basic_block_forward.1
$region0: #{basic_block_forward.1}
  #allocation0 [shape = 'u32[]', space=smem, size = 0x4, offset = 0x4, fixed_abs, tag = 'smem constant byte address 0x4 - core index']
  #allocation1 [shape = 'u32[144,128]{1,0:T(1,128)}', space=vmem, size = 0x12000, scoped, tag = 'internal scratch']
  #allocation2 [shape = 'bf16[232,128]{1,0:T(8,128)(2,1)}', space=vmem, size = 0xe800, scoped, tag = 'scratch operand']
  %s0 = inlined_call_operand.vmem [shape: bf16[200,128], index: 0, kind: input, shape index: {}]
  %s1 = inlined_call_operand.vmem [shape: bf16[128,128], index: 1, kind: input, shape index: {}]
  %s2 = inlined_call_operand.vmem [shape: f32[2,128], index: 2, kind: input, shape index: {}]
  %s3 = inlined_call_operand.vmem [shape: bf16[1152,128], index: 3, kind: input, shape index: {}]
  %s4 = inlined_call_operand.vmem [shape: f32[2,128], index: 4, kind: input, shape index: {}]
  %s5 = inlined_call_operand.vmem [shape: f32[200,128], index: 5, kind: input, shape index: {}]
  %s6 = inlined_call_operand.vmem [shape: f32[200,1], index: 6, kind: input, shape index: {}]
  %s7 = inlined_call_operand.vmem [shape: f32[200,128], index: 7, kind: output, shape index: {}]
  %s8 = sld [smem:[#allocation0]]
  $region38: #{basic_block_forward.1} parent=0
    _
  %s10 = ssub.s32 1, %s8
  %s11 = scalar_select 0, %s10, %s8
  // Predicated region
  $region2: #{basic_block_forward.1} parent=0 // pred_check
    _
  $region3: #{basic_block_forward.1} parent=0 // pred_check_branch
    %13 = sbr.rel (0) target = $region5
  $region4: #{basic_block_forward.1} parent=0 // pred_region
    _
  $region5: #{basic_block_forward.1} parent=0 // pred_fallthru
    _
  // Predicated region
  $region6: #{basic_block_forward.1} parent=0 // pred_check
    _
  $region7: #{basic_block_forward.1} parent=0 // pred_check_branch
    %15 = sbr.rel (0) target = $region9
  $region8: #{basic_block_forward.1} parent=0 // pred_region
    _
  $region9: #{basic_block_forward.1} parent=0 // pred_fallthru
    _
  // Predicated region
  $region10: #{basic_block_forward.1} parent=0 // pred_check
    _
  $region11: #{basic_block_forward.1} parent=0 // pred_check_branch
    %17 = sbr.rel (0) target = $region13
  $region12: #{basic_block_forward.1} parent=0 // pred_region
    _
  $region13: #{basic_block_forward.1} parent=0 // pred_fallthru
    _
  // Predicated region
  $region14: #{basic_block_forward.1} parent=0 // pred_check
    _
  $region15: #{basic_block_forward.1} parent=0 // pred_check_branch
    %19 = sbr.rel (0) target = $region17
  $region16: #{basic_block_forward.1} parent=0 // pred_region
    _
  $region17: #{basic_block_forward.1} parent=0 // pred_fallthru
    _
  // Predicated region
  $region18: #{basic_block_forward.1} parent=0 // pred_check
    _
  $region19: #{basic_block_forward.1} parent=0 // pred_check_branch
    %21 = sbr.rel (0) target = $region21
  $region20: #{basic_block_forward.1} parent=0 // pred_region
    _
  $region21: #{basic_block_forward.1} parent=0 // pred_fallthru
    _
  // Predicated region
  $region22: #{basic_block_forward.1} parent=0 // pred_check
    _
  $region23: #{basic_block_forward.1} parent=0 // pred_check_branch
    %23 = sbr.rel (0) target = $region25
  $region24: #{basic_block_forward.1} parent=0 // pred_region
    _
  $region25: #{basic_block_forward.1} parent=0 // pred_fallthru
    _
  // Predicated region
  $region26: #{basic_block_forward.1} parent=0 // pred_check
    _
  $region27: #{basic_block_forward.1} parent=0 // pred_check_branch
    %25 = sbr.rel (0) target = $region29
  $region28: #{basic_block_forward.1} parent=0 // pred_region
    _
  $region29: #{basic_block_forward.1} parent=0 // pred_fallthru
    _
  %v27 = vld [vmem:[%s6] sm:$0xff]
  %v28 = vld [vmem:[%s6 + $0x8] sm:$0xff]
  %v29 = vld [vmem:[%s6 + $0x10] sm:$0xff]
  %v30 = vld [vmem:[%s6 + $0x18] sm:$0xff]
  %v31 = vld [vmem:[%s6 + $0x20] sm:$0xff]
  %v32 = vld [vmem:[%s6 + $0x28] sm:$0xff]
  %v33 = vld [vmem:[%s6 + $0x30] sm:$0xff]
  %v34 = vld [vmem:[%s6 + $0x38] sm:$0xff]
  %v35 = vld [vmem:[%s6 + $0x40] sm:$0xff]
  %v36 = vld [vmem:[%s6 + $0x48] sm:$0xff]
  %v37 = vld [vmem:[%s6 + $0x50] sm:$0xff]
  %v38 = vld [vmem:[%s6 + $0x58] sm:$0xff]
  %v39 = vld [vmem:[%s6 + $0x60] sm:$0xff]
  %v40 = vld [vmem:[%s6 + $0x68] sm:$0xff]
  %v41 = vld [vmem:[%s6 + $0x70] sm:$0xff]
  %v42 = vld [vmem:[%s6 + $0x78] sm:$0xff]
  %v43 = vld [vmem:[%s6 + $0x80] sm:$0xff]
  %v44 = vld [vmem:[%s6 + $0x88] sm:$0xff]
  %v45 = vld [vmem:[%s6 + $0x90] sm:$0xff]
  %v46 = vld [vmem:[%s6 + $0x98] sm:$0xff]
  %v47 = vld [vmem:[%s6 + $0xa0] sm:$0xff]
  %v48 = vld [vmem:[%s6 + $0xa8] sm:$0xff]
  %v49 = vld [vmem:[%s6 + $0xb0] sm:$0xff]
  %v50 = vld [vmem:[%s6 + $0xb8] sm:$0xff]
  %v51 = vld [vmem:[%s6 + $0xc0] sm:$0xff]
  %53 = vset.pattern.permute.xlu0 0
  %54 = vperm.xlu0 %53, %v27
  %v55 = vpop.permute.xlu0 %54
  %58 = vset.pattern.permute.xlu0 0
  %59 = vperm.xlu0 %58, %v28
  %v60 = vpop.permute.xlu0 %59
  %63 = vset.pattern.permute.xlu0 0
  %64 = vperm.xlu0 %63, %v29
  %v65 = vpop.permute.xlu0 %64
  %68 = vset.pattern.permute.xlu0 0
  %69 = vperm.xlu0 %68, %v30
  %v70 = vpop.permute.xlu0 %69
  %73 = vset.pattern.permute.xlu0 0
  %74 = vperm.xlu0 %73, %v31
  %v75 = vpop.permute.xlu0 %74
  %78 = vset.pattern.permute.xlu0 0
  %79 = vperm.xlu0 %78, %v32
  %v80 = vpop.permute.xlu0 %79
  %83 = vset.pattern.permute.xlu0 0
  %84 = vperm.xlu0 %83, %v33
  %v85 = vpop.permute.xlu0 %84
  %88 = vset.pattern.permute.xlu0 0
  %89 = vperm.xlu0 %88, %v34
  %v90 = vpop.permute.xlu0 %89
  %93 = vset.pattern.permute.xlu0 0
  %94 = vperm.xlu0 %93, %v35
  %v95 = vpop.permute.xlu0 %94
  %98 = vset.pattern.permute.xlu0 0
  %99 = vperm.xlu0 %98, %v36
  %v100 = vpop.permute.xlu0 %99
  %103 = vset.pattern.permute.xlu0 0
  %104 = vperm.xlu0 %103, %v37
  %v105 = vpop.permute.xlu0 %104
  %108 = vset.pattern.permute.xlu0 0
  %109 = vperm.xlu0 %108, %v38
  %v110 = vpop.permute.xlu0 %109
  %113 = vset.pattern.permute.xlu0 0
  %114 = vperm.xlu0 %113, %v39
  %v115 = vpop.permute.xlu0 %114
  %118 = vset.pattern.permute.xlu0 0
  %119 = vperm.xlu0 %118, %v40
  %v120 = vpop.permute.xlu0 %119
  %123 = vset.pattern.permute.xlu0 0
  %124 = vperm.xlu0 %123, %v41
  %v125 = vpop.permute.xlu0 %124
  %128 = vset.pattern.permute.xlu0 0
  %129 = vperm.xlu0 %128, %v42
  %v130 = vpop.permute.xlu0 %129
  %133 = vset.pattern.permute.xlu0 0
  %134 = vperm.xlu0 %133, %v43
  %v135 = vpop.permute.xlu0 %134
  %138 = vset.pattern.permute.xlu0 0
  %139 = vperm.xlu0 %138, %v44
  %v140 = vpop.permute.xlu0 %139
  %143 = vset.pattern.permute.xlu0 0
  %144 = vperm.xlu0 %143, %v45
  %v145 = vpop.permute.xlu0 %144
  %148 = vset.pattern.permute.xlu0 0
  %149 = vperm.xlu0 %148, %v46
  %v150 = vpop.permute.xlu0 %149
  %153 = vset.pattern.permute.xlu0 0
  %154 = vperm.xlu0 %153, %v47
  %v155 = vpop.permute.xlu0 %154
  %158 = vset.pattern.permute.xlu0 0
  %159 = vperm.xlu0 %158, %v48
  %v160 = vpop.permute.xlu0 %159
  %163 = vset.pattern.permute.xlu0 0
  %164 = vperm.xlu0 %163, %v49
  %v165 = vpop.permute.xlu0 %164
  %168 = vset.pattern.permute.xlu0 0
  %169 = vperm.xlu0 %168, %v50
  %v170 = vpop.permute.xlu0 %169
  %173 = vset.pattern.permute.xlu0 0
  %174 = vperm.xlu0 %173, %v51
  %v175 = vpop.permute.xlu0 %174
  %v177 = vld [vmem:[%s0] sm:$0xf]
  %v178 = vld [vmem:[%s0 + $0x4] sm:$0xf]
  %v179 = vld [vmem:[%s0 + $0x8] sm:$0xf]
  %v180 = vld [vmem:[%s0 + $0xc] sm:$0xf]
  %v181 = vld [vmem:[%s0 + $0x10] sm:$0xf]
  %v182 = vld [vmem:[%s0 + $0x14] sm:$0xf]
  %v183 = vld [vmem:[%s0 + $0x18] sm:$0xf]
  %v184 = vld [vmem:[%s0 + $0x1c] sm:$0xf]
  %v185 = vld [vmem:[%s0 + $0x20] sm:$0xf]
  %v186 = vld [vmem:[%s0 + $0x24] sm:$0xf]
  %v187 = vld [vmem:[%s0 + $0x28] sm:$0xf]
  %v188 = vld [vmem:[%s0 + $0x2c] sm:$0xf]
  %v189 = vld [vmem:[%s0 + $0x30] sm:$0xf]
  %v190 = vld [vmem:[%s0 + $0x34] sm:$0xf]
  %v191 = vld [vmem:[%s0 + $0x38] sm:$0xf]
  %v192 = vld [vmem:[%s0 + $0x3c] sm:$0xf]
  %v193 = vld [vmem:[%s0 + $0x40] sm:$0xf]
  %v194 = vld [vmem:[%s0 + $0x44] sm:$0xf]
  %v195 = vld [vmem:[%s0 + $0x48] sm:$0xf]
  %v196 = vld [vmem:[%s0 + $0x4c] sm:$0xf]
  %v197 = vld [vmem:[%s0 + $0x50] sm:$0xf]
  %v198 = vld [vmem:[%s0 + $0x54] sm:$0xf]
  %v199 = vld [vmem:[%s0 + $0x58] sm:$0xf]
  %v200 = vld [vmem:[%s0 + $0x5c] sm:$0xf]
  %v201 = vld [vmem:[%s0 + $0x60] sm:$0xf]
  %v202 = vld [vmem:[%s1] sm:$0xf]
  %v203 = vld [vmem:[%s1 + $0x4] sm:$0xf]
  %v204 = vld [vmem:[%s1 + $0x8] sm:$0xf]
  %v205 = vld [vmem:[%s1 + $0xc] sm:$0xf]
  %v206 = vld [vmem:[%s1 + $0x10] sm:$0xf]
  %v207 = vld [vmem:[%s1 + $0x14] sm:$0xf]
  %v208 = vld [vmem:[%s1 + $0x18] sm:$0xf]
  %v209 = vld [vmem:[%s1 + $0x1c] sm:$0xf]
  %v210 = vld [vmem:[%s1 + $0x20] sm:$0xf]
  %v211 = vld [vmem:[%s1 + $0x24] sm:$0xf]
  %v212 = vld [vmem:[%s1 + $0x28] sm:$0xf]
  %v213 = vld [vmem:[%s1 + $0x2c] sm:$0xf]
  %v214 = vld [vmem:[%s1 + $0x30] sm:$0xf]
  %v215 = vld [vmem:[%s1 + $0x34] sm:$0xf]
  %v216 = vld [vmem:[%s1 + $0x38] sm:$0xf]
  %v217 = vld [vmem:[%s1 + $0x3c] sm:$0xf]
  %v243 = vunpack.c.l.b16 %v177
  %v244 = vunpack.c.l.b16 %v178
  %v245 = vunpack.c.l.b16 %v179
  %v246 = vunpack.c.l.b16 %v180
  %v247 = vunpack.c.l.b16 %v181
  %v248 = vunpack.c.l.b16 %v182
  %v249 = vunpack.c.l.b16 %v183
  %v250 = vunpack.c.l.b16 %v184
  %v251 = vunpack.c.l.b16 %v185
  %v252 = vunpack.c.l.b16 %v186
  %v253 = vunpack.c.l.b16 %v187
  %v254 = vunpack.c.l.b16 %v188
  %v255 = vunpack.c.l.b16 %v189
  %v256 = vunpack.c.l.b16 %v190
  %v257 = vunpack.c.l.b16 %v191
  %v258 = vunpack.c.l.b16 %v192
  %v259 = vunpack.c.l.b16 %v193
  %v260 = vunpack.c.l.b16 %v194
  %v261 = vunpack.c.l.b16 %v195
  %v262 = vunpack.c.l.b16 %v196
  %v263 = vunpack.c.l.b16 %v197
  %v264 = vunpack.c.l.b16 %v198
  %v265 = vunpack.c.l.b16 %v199
  %v266 = vunpack.c.l.b16 %v200
  %v267 = vunpack.c.l.b16 %v201
  %v268 = vpack.c.b16 %v244, %v243
  %v269 = vpack.c.b16 %v246, %v245
  %v270 = vpack.c.b16 %v248, %v247
  %v271 = vpack.c.b16 %v250, %v249
  %v272 = vpack.c.b16 %v252, %v251
  %v273 = vpack.c.b16 %v254, %v253
  %v274 = vpack.c.b16 %v256, %v255
  %v275 = vpack.c.b16 %v258, %v257
  %v276 = vpack.c.b16 %v260, %v259
  %v277 = vpack.c.b16 %v262, %v261
  %v278 = vpack.c.b16 %v264, %v263
  %v279 = vpack.c.b16 %v266, %v265
  %v280 = vpack.c.b16 %v267, %v267
  %v310 = vunpack.c.l.b16 %v202
  %v311 = vunpack.c.l.b16 %v203
  %v312 = vunpack.c.l.b16 %v204
  %v313 = vunpack.c.l.b16 %v205
  %v314 = vunpack.c.l.b16 %v206
  %v315 = vunpack.c.l.b16 %v207
  %v316 = vunpack.c.l.b16 %v208
  %v317 = vunpack.c.l.b16 %v209
  %v318 = vunpack.c.l.b16 %v210
  %v319 = vunpack.c.l.b16 %v211
  %v320 = vunpack.c.l.b16 %v212
  %v321 = vunpack.c.l.b16 %v213
  %v322 = vunpack.c.l.b16 %v214
  %v323 = vunpack.c.l.b16 %v215
  %v324 = vunpack.c.l.b16 %v216
  %v325 = vunpack.c.l.b16 %v217
  %v326 = vpack.c.b16 %v311, %v310
  %v327 = vpack.c.b16 %v313, %v312
  %v328 = vpack.c.b16 %v315, %v314
  %v329 = vpack.c.b16 %v317, %v316
  %v330 = vpack.c.b16 %v319, %v318
  %v331 = vpack.c.b16 %v321, %v320
  %v332 = vpack.c.b16 %v323, %v322
  %v333 = vpack.c.b16 %v325, %v324
  %342 = vmatprep.subr.bf16.mxu0 0
  %343 = vmatpush1.bf16.msra.mxu0 %v333
  %344 = vmatprep.subr.bf16.mxu0 0
  %345 = vmatpush1.bf16.msra.mxu0 %v332
  %346 = vmatprep.subr.bf16.mxu0 0
  %347 = vmatpush1.bf16.msra.mxu0 %v331
  %348 = vmatprep.subr.bf16.mxu0 0
  %349 = vmatpush1.bf16.msra.mxu0 %v330
  %350 = vmatprep.subr.bf16.mxu0 0
  %351 = vmatpush1.bf16.msra.mxu0 %v329
  %352 = vmatprep.subr.bf16.mxu0 0
  %353 = vmatpush1.bf16.msra.mxu0 %v328
  %354 = vmatprep.subr.bf16.mxu0 0
  %355 = vmatpush1.bf16.msra.mxu0 %v327
  %356 = vmatprep.subr.bf16.mxu0 0
  %357 = vmatpush1.bf16.msra.mxu0 %v326
  %358 = vmatprep.subr.bf16.mxu0 0
  %359 = vmatpush2.bf16.msra.mxu0 0
  %360 = vmatprep.subr.bf16.mxu0 0
  %361 = vmatpush2.bf16.msra.mxu0 0
  %362 = vmatprep.subr.bf16.mxu0 0
  %363 = vmatpush2.bf16.msra.mxu0 0
  %364 = vmatprep.subr.bf16.mxu0 0
  %365 = vmatpush2.bf16.msra.mxu0 0
  %366 = vmatprep.subr.bf16.mxu0 0
  %367 = vmatpush2.bf16.msra.mxu0 0
  %368 = vmatprep.subr.bf16.mxu0 0
  %369 = vmatpush2.bf16.msra.mxu0 0
  %370 = vmatprep.subr.bf16.mxu0 0
  %371 = vmatpush2.bf16.msra.mxu0 0
  %372 = vmatprep.subr.bf16.mxu0 0
  %373 = vmatpush2.bf16.msra.mxu0 0
  %374 = vmatprep.mubr.bf16.mxu0 0
  %375 = vmatmul.mubr.bf16.gmra.mxu0 %v268
  %v376 = vpop.f32.mrf.mxu0
  %v377 = vadd.f32 0.0, %v376
  %v378 = vpop.f32.mrf.mxu0
  %v379 = vpop.f32.mrf.mxu0
  %v380 = vadd.f32 0.0, %v379
  %v381 = vpop.f32.mrf.mxu0
  %382 = vmatprep.mubr.bf16.mxu0 0
  %383 = vmatmul.mubr.bf16.gmra.mxu0 %v269
  %v384 = vpop.f32.mrf.mxu0
  %v385 = vadd.f32 0.0, %v384
  %v386 = vpop.f32.mrf.mxu0
  %v387 = vpop.f32.mrf.mxu0
  %v388 = vadd.f32 0.0, %v387
  %v389 = vpop.f32.mrf.mxu0
  %390 = vmatprep.mubr.bf16.mxu0 0
  %391 = vmatmul.mubr.bf16.gmra.mxu0 %v270
  %v392 = vpop.f32.mrf.mxu0
  %v393 = vadd.f32 0.0, %v392
  %v394 = vpop.f32.mrf.mxu0
  %v395 = vpop.f32.mrf.mxu0
  %v396 = vadd.f32 0.0, %v395
  %v397 = vpop.f32.mrf.mxu0
  %398 = vmatprep.mubr.bf16.mxu0 0
  %399 = vmatmul.mubr.bf16.gmra.mxu0 %v271
  %v400 = vpop.f32.mrf.mxu0
  %v401 = vadd.f32 0.0, %v400
  %v402 = vpop.f32.mrf.mxu0
  %v403 = vpop.f32.mrf.mxu0
  %v404 = vadd.f32 0.0, %v403
  %v405 = vpop.f32.mrf.mxu0
  %406 = vmatprep.mubr.bf16.mxu0 0
  %407 = vmatmul.mubr.bf16.gmra.mxu0 %v272
  %v408 = vpop.f32.mrf.mxu0
  %v409 = vadd.f32 0.0, %v408
  %v410 = vpop.f32.mrf.mxu0
  %v411 = vpop.f32.mrf.mxu0
  %v412 = vadd.f32 0.0, %v411
  %v413 = vpop.f32.mrf.mxu0
  %414 = vmatprep.mubr.bf16.mxu0 0
  %415 = vmatmul.mubr.bf16.gmra.mxu0 %v273
  %v416 = vpop.f32.mrf.mxu0
  %v417 = vadd.f32 0.0, %v416
  %v418 = vpop.f32.mrf.mxu0
  %v419 = vpop.f32.mrf.mxu0
  %v420 = vadd.f32 0.0, %v419
  %v421 = vpop.f32.mrf.mxu0
  %422 = vmatprep.mubr.bf16.mxu0 0
  %423 = vmatmul.mubr.bf16.gmra.mxu0 %v274
  %v424 = vpop.f32.mrf.mxu0
  %v425 = vadd.f32 0.0, %v424
  %v426 = vpop.f32.mrf.mxu0
  %v427 = vpop.f32.mrf.mxu0
  %v428 = vadd.f32 0.0, %v427
  %v429 = vpop.f32.mrf.mxu0
  %430 = vmatprep.mubr.bf16.mxu0 0
  %431 = vmatmul.mubr.bf16.gmra.mxu0 %v275
  %v432 = vpop.f32.mrf.mxu0
  %v433 = vadd.f32 0.0, %v432
  %v434 = vpop.f32.mrf.mxu0
  %v435 = vpop.f32.mrf.mxu0
  %v436 = vadd.f32 0.0, %v435
  %v437 = vpop.f32.mrf.mxu0
  %438 = vmatprep.mubr.bf16.mxu0 0
  %439 = vmatmul.mubr.bf16.gmra.mxu0 %v276
  %v440 = vpop.f32.mrf.mxu0
  %v441 = vadd.f32 0.0, %v440
  %v442 = vpop.f32.mrf.mxu0
  %v443 = vpop.f32.mrf.mxu0
  %v444 = vadd.f32 0.0, %v443
  %v445 = vpop.f32.mrf.mxu0
  %446 = vmatprep.mubr.bf16.mxu0 0
  %447 = vmatmul.mubr.bf16.gmra.mxu0 %v277
  %v448 = vpop.f32.mrf.mxu0
  %v449 = vadd.f32 0.0, %v448
  %v450 = vpop.f32.mrf.mxu0
  %v451 = vpop.f32.mrf.mxu0
  %v452 = vadd.f32 0.0, %v451
  %v453 = vpop.f32.mrf.mxu0
  %454 = vmatprep.mubr.bf16.mxu0 0
  %455 = vmatmul.mubr.bf16.gmra.mxu0 %v278
  %v456 = vpop.f32.mrf.mxu0
  %v457 = vadd.f32 0.0, %v456
  %v458 = vpop.f32.mrf.mxu0
  %v459 = vpop.f32.mrf.mxu0
  %v460 = vadd.f32 0.0, %v459
  %v461 = vpop.f32.mrf.mxu0
  %462 = vmatprep.mubr.bf16.mxu0 0
  %463 = vmatmul.mubr.bf16.gmra.mxu0 %v279
  %v464 = vpop.f32.mrf.mxu0
  %v465 = vadd.f32 0.0, %v464
  %v466 = vpop.f32.mrf.mxu0
  %v467 = vpop.f32.mrf.mxu0
  %v468 = vadd.f32 0.0, %v467
  %v469 = vpop.f32.mrf.mxu0
  %470 = vmatprep.mubr.bf16.mxu0 0
  %471 = vmatmul.mubr.bf16.gmra.mxu0 %v280
  %v472 = vpop.f32.mrf.mxu0
  %v473 = vadd.f32 0.0, %v472
  %v474 = vpop.f32.mrf.mxu0
  %v475 = vpop.f32.mrf.mxu0
  %v476 = vpop.f32.mrf.mxu0
  %477 = vdwg.mxu0
  %v478 = vmul.f32 %v377, %v55
  %v479 = vmul.f32 %v380, %v60
  %v480 = vmul.f32 %v385, %v65
  %v481 = vmul.f32 %v388, %v70
  %v482 = vmul.f32 %v393, %v75
  %v483 = vmul.f32 %v396, %v80
  %v484 = vmul.f32 %v401, %v85
  %v485 = vmul.f32 %v404, %v90
  %v486 = vmul.f32 %v409, %v95
  %v487 = vmul.f32 %v412, %v100
  %v488 = vmul.f32 %v417, %v105
  %v489 = vmul.f32 %v420, %v110
  %v490 = vmul.f32 %v425, %v115
  %v491 = vmul.f32 %v428, %v120
  %v492 = vmul.f32 %v433, %v125
  %v493 = vmul.f32 %v436, %v130
  %v494 = vmul.f32 %v441, %v135
  %v495 = vmul.f32 %v444, %v140
  %v496 = vmul.f32 %v449, %v145
  %v497 = vmul.f32 %v452, %v150
  %v498 = vmul.f32 %v457, %v155
  %v499 = vmul.f32 %v460, %v160
  %v500 = vmul.f32 %v465, %v165
  %v501 = vmul.f32 %v468, %v170
  %v502 = vmul.f32 %v473, %v175
  %v503 = vadd.f32 %v478, %v479
  %v504 = vadd.f32 %v503, %v480
  %v505 = vadd.f32 %v504, %v481
  %v506 = vadd.f32 %v505, %v482
  %v507 = vadd.f32 %v506, %v483
  %v508 = vadd.f32 %v507, %v484
  %v509 = vadd.f32 %v508, %v485
  %v510 = vadd.f32 %v509, %v486
  %v511 = vadd.f32 %v510, %v487
  %v512 = vadd.f32 %v511, %v488
  %v513 = vadd.f32 %v512, %v489
  %v514 = vadd.f32 %v513, %v490
  %v515 = vadd.f32 %v514, %v491
  %v516 = vadd.f32 %v515, %v492
  %v517 = vadd.f32 %v516, %v493
  %v518 = vadd.f32 %v517, %v494
  %v519 = vadd.f32 %v518, %v495
  %v520 = vadd.f32 %v519, %v496
  %v521 = vadd.f32 %v520, %v497
  %v522 = vadd.f32 %v521, %v498
  %v523 = vadd.f32 %v522, %v499
  %v524 = vadd.f32 %v523, %v500
  %v525 = vadd.f32 %v524, %v501
  %v526 = vadd.f32 %v525, %v502
  %v527 = vrot.slane %v526, 4
  %v528 = vadd.f32 %v526, %v527
  %v529 = vrot.slane %v528, 2
  %v530 = vadd.f32 %v528, %v529
  %v531 = vrot.slane %v530, 1
  %v532 = vadd.f32 %v530, %v531
  %v533 = vmul.f32 %v478, %v478
  %v534 = vmul.f32 %v479, %v479
  %v535 = vmul.f32 %v480, %v480
  %v536 = vmul.f32 %v481, %v481
  %v537 = vmul.f32 %v482, %v482
  %v538 = vmul.f32 %v483, %v483
  %v539 = vmul.f32 %v484, %v484
  %v540 = vmul.f32 %v485, %v485
  %v541 = vmul.f32 %v486, %v486
  %v542 = vmul.f32 %v487, %v487
  %v543 = vmul.f32 %v488, %v488
  %v544 = vmul.f32 %v489, %v489
  %v545 = vmul.f32 %v490, %v490
  %v546 = vmul.f32 %v491, %v491
  %v547 = vmul.f32 %v492, %v492
  %v548 = vmul.f32 %v493, %v493
  %v549 = vmul.f32 %v494, %v494
  %v550 = vmul.f32 %v495, %v495
  %v551 = vmul.f32 %v496, %v496
  %v552 = vmul.f32 %v497, %v497
  %v553 = vmul.f32 %v498, %v498
  %v554 = vmul.f32 %v499, %v499
  %v555 = vmul.f32 %v500, %v500
  %v556 = vmul.f32 %v501, %v501
  %v557 = vmul.f32 %v502, %v502
  %v558 = vadd.f32 %v533, %v534
  %v559 = vadd.f32 %v558, %v535
  %v560 = vadd.f32 %v559, %v536
  %v561 = vadd.f32 %v560, %v537
  %v562 = vadd.f32 %v561, %v538
  %v563 = vadd.f32 %v562, %v539
  %v564 = vadd.f32 %v563, %v540
  %v565 = vadd.f32 %v564, %v541
  %v566 = vadd.f32 %v565, %v542
  %v567 = vadd.f32 %v566, %v543
  %v568 = vadd.f32 %v567, %v544
  %v569 = vadd.f32 %v568, %v545
  %v570 = vadd.f32 %v569, %v546
  %v571 = vadd.f32 %v570, %v547
  %v572 = vadd.f32 %v571, %v548
  %v573 = vadd.f32 %v572, %v549
  %v574 = vadd.f32 %v573, %v550
  %v575 = vadd.f32 %v574, %v551
  %v576 = vadd.f32 %v575, %v552
  %v577 = vadd.f32 %v576, %v553
  %v578 = vadd.f32 %v577, %v554
  %v579 = vadd.f32 %v578, %v555
  %v580 = vadd.f32 %v579, %v556
  %v581 = vadd.f32 %v580, %v557
  %v582 = vrot.slane %v581, 4
  %v583 = vadd.f32 %v581, %v582
  %v584 = vrot.slane %v583, 2
  %v585 = vadd.f32 %v583, %v584
  %v586 = vrot.slane %v585, 1
  %v587 = vadd.f32 %v585, %v586
  %v588 = vmul.f32 %v532, 0.0078125
  %v589 = vmul.f32 %v587, 0.0078125
  %v590 = vmul.f32 %v588, %v588
  %v591 = vsub.f32 %v589, %v590
  %v592 = vmax.f32 %v591, 0.0
  %v593 = vld [vmem:[%s2] sm:$0x1]
  %v594 = vadd.f32 %v592, 1e-05
  %v595 = vrsqrt.pop %v594
  %v596 = vmul.f32 %v593, %v595
  %v597 = vld [vmem:[%s2 + $0x1] sm:$0x1]
  %v598 = vmul.f32 %v588, %v596
  %v599 = vsub.f32 %v597, %v598
  %v600 = vlaneseq
  %v601 = vshrl.u32 %v600, 7
  %v602 = vsub.s32 0, %v601
  %v603 = vrot.slane %v596, %v602
  %v604 = vmul.f32 %v478, %v603
  %v605 = vmul.f32 %v479, %v603
  %v606 = vmul.f32 %v480, %v603
  %v607 = vmul.f32 %v481, %v603
  %v608 = vmul.f32 %v482, %v603
  %v609 = vmul.f32 %v483, %v603
  %v610 = vmul.f32 %v484, %v603
  %v611 = vmul.f32 %v485, %v603
  %v612 = vmul.f32 %v486, %v603
  %v613 = vmul.f32 %v487, %v603
  %v614 = vmul.f32 %v488, %v603
  %v615 = vmul.f32 %v489, %v603
  %v616 = vmul.f32 %v490, %v603
  %v617 = vmul.f32 %v491, %v603
  %v618 = vmul.f32 %v492, %v603
  %v619 = vmul.f32 %v493, %v603
  %v620 = vmul.f32 %v494, %v603
  %v621 = vmul.f32 %v495, %v603
  %v622 = vmul.f32 %v496, %v603
  %v623 = vmul.f32 %v497, %v603
  %v624 = vmul.f32 %v498, %v603
  %v625 = vmul.f32 %v499, %v603
  %v626 = vmul.f32 %v500, %v603
  %v627 = vmul.f32 %v501, %v603
  %v628 = vmul.f32 %v502, %v603
  %v629 = vlaneseq
  %v630 = vshrl.u32 %v629, 7
  %v631 = vsub.s32 0, %v630
  %v632 = vrot.slane %v599, %v631
  %v633 = vadd.f32 %v604, %v632
  %v634 = vadd.f32 %v605, %v632
  %v635 = vadd.f32 %v606, %v632
  %v636 = vadd.f32 %v607, %v632
  %v637 = vadd.f32 %v608, %v632
  %v638 = vadd.f32 %v609, %v632
  %v639 = vadd.f32 %v610, %v632
  %v640 = vadd.f32 %v611, %v632
  %v641 = vadd.f32 %v612, %v632
  %v642 = vadd.f32 %v613, %v632
  %v643 = vadd.f32 %v614, %v632
  %v644 = vadd.f32 %v615, %v632
  %v645 = vadd.f32 %v616, %v632
  %v646 = vadd.f32 %v617, %v632
  %v647 = vadd.f32 %v618, %v632
  %v648 = vadd.f32 %v619, %v632
  %v649 = vadd.f32 %v620, %v632
  %v650 = vadd.f32 %v621, %v632
  %v651 = vadd.f32 %v622, %v632
  %v652 = vadd.f32 %v623, %v632
  %v653 = vadd.f32 %v624, %v632
  %v654 = vadd.f32 %v625, %v632
  %v655 = vadd.f32 %v626, %v632
  %v656 = vadd.f32 %v627, %v632
  %v657 = vadd.f32 %v628, %v632
  %v658 = vmax.f32 %v633, 0.0
  %v659 = vmax.f32 %v634, 0.0
  %v660 = vmax.f32 %v635, 0.0
  %v661 = vmax.f32 %v636, 0.0
  %v662 = vmax.f32 %v637, 0.0
  %v663 = vmax.f32 %v638, 0.0
  %v664 = vmax.f32 %v639, 0.0
  %v665 = vmax.f32 %v640, 0.0
  %v666 = vmax.f32 %v641, 0.0
  %v667 = vmax.f32 %v642, 0.0
  %v668 = vmax.f32 %v643, 0.0
  %v669 = vmax.f32 %v644, 0.0
  %v670 = vmax.f32 %v645, 0.0
  %v671 = vmax.f32 %v646, 0.0
  %v672 = vmax.f32 %v647, 0.0
  %v673 = vmax.f32 %v648, 0.0
  %v674 = vmax.f32 %v649, 0.0
  %v675 = vmax.f32 %v650, 0.0
  %v676 = vmax.f32 %v651, 0.0
  %v677 = vmax.f32 %v652, 0.0
  %v678 = vmax.f32 %v653, 0.0
  %v679 = vmax.f32 %v654, 0.0
  %v680 = vmax.f32 %v655, 0.0
  %v681 = vmax.f32 %v656, 0.0
  %v682 = vmax.f32 %v657, 0.0
  %v683 = vmul.f32 %v658, %v55
  %v684 = vmul.f32 %v659, %v60
  %v685 = vmul.f32 %v660, %v65
  %v686 = vmul.f32 %v661, %v70
  %v687 = vmul.f32 %v662, %v75
  %v688 = vmul.f32 %v663, %v80
  %v689 = vmul.f32 %v664, %v85
  %v690 = vmul.f32 %v665, %v90
  %v691 = vmul.f32 %v666, %v95
  %v692 = vmul.f32 %v667, %v100
  %v693 = vmul.f32 %v668, %v105
  %v694 = vmul.f32 %v669, %v110
  %v695 = vmul.f32 %v670, %v115
  %v696 = vmul.f32 %v671, %v120
  %v697 = vmul.f32 %v672, %v125
  %v698 = vmul.f32 %v673, %v130
  %v699 = vmul.f32 %v674, %v135
  %v700 = vmul.f32 %v675, %v140
  %v701 = vmul.f32 %v676, %v145
  %v702 = vmul.f32 %v677, %v150
  %v703 = vmul.f32 %v678, %v155
  %v704 = vmul.f32 %v679, %v160
  %v705 = vmul.f32 %v680, %v165
  %v706 = vmul.f32 %v681, %v170
  %v707 = vmul.f32 %v682, %v175
  %708 = vst [vmem:[#allocation2] sm:$0xf] 0
  %709 = vst [vmem:[#allocation2 + $0x4] sm:$0xf] 0
  %710 = vst [vmem:[#allocation2 + $0x6c] sm:$0xf] 0
  %711 = vst [vmem:[#allocation2 + $0x70] sm:$0xf] 0
  %v712 = vpack.c.bf16 %v684, %v683
  %v713 = vpack.c.bf16 %v686, %v685
  %v714 = vpack.c.bf16 %v688, %v687
  %v715 = vpack.c.bf16 %v690, %v689
  %v716 = vpack.c.bf16 %v692, %v691
  %v717 = vpack.c.bf16 %v694, %v693
  %v718 = vpack.c.bf16 %v696, %v695
  %v719 = vpack.c.bf16 %v698, %v697
  %v720 = vpack.c.bf16 %v700, %v699
  %v721 = vpack.c.bf16 %v702, %v701
  %v722 = vpack.c.bf16 %v704, %v703
  %v723 = vpack.c.bf16 %v706, %v705
  %v724 = vpack.c.bf16 %v707, %v707
  %v738 = vunpack.c.l.b16 %v712
  %v739 = vunpack.c.h.b16 %v712
  %v740 = vunpack.c.l.b16 %v713
  %v741 = vunpack.c.h.b16 %v713
  %v742 = vunpack.c.l.b16 %v714
  %v743 = vunpack.c.h.b16 %v714
  %v744 = vunpack.c.l.b16 %v715
  %v745 = vunpack.c.h.b16 %v715
  %v746 = vunpack.c.l.b16 %v716
  %v747 = vunpack.c.h.b16 %v716
  %v748 = vunpack.c.l.b16 %v717
  %v749 = vunpack.c.h.b16 %v717
  %v750 = vunpack.c.l.b16 %v718
  %v751 = vunpack.c.h.b16 %v718
  %v752 = vunpack.c.l.b16 %v719
  %v753 = vunpack.c.h.b16 %v719
  %v754 = vunpack.c.l.b16 %v720
  %v755 = vunpack.c.h.b16 %v720
  %v756 = vunpack.c.l.b16 %v721
  %v757 = vunpack.c.h.b16 %v721
  %v758 = vunpack.c.l.b16 %v722
  %v759 = vunpack.c.h.b16 %v722
  %v760 = vunpack.c.l.b16 %v723
  %v761 = vunpack.c.h.b16 %v723
  %v762 = vunpack.c.l.b16 %v724
  %v763 = vpack.c.b16 %v738, %v738
  %v764 = vpack.c.b16 %v739, %v739
  %v765 = vpack.c.b16 %v740, %v740
  %v766 = vpack.c.b16 %v741, %v741
  %v767 = vpack.c.b16 %v742, %v742
  %v768 = vpack.c.b16 %v743, %v743
  %v769 = vpack.c.b16 %v744, %v744
  %v770 = vpack.c.b16 %v745, %v745
  %v771 = vpack.c.b16 %v746, %v746
  %v772 = vpack.c.b16 %v747, %v747
  %v773 = vpack.c.b16 %v748, %v748
  %v774 = vpack.c.b16 %v749, %v749
  %v775 = vpack.c.b16 %v750, %v750
  %v776 = vpack.c.b16 %v751, %v751
  %v777 = vpack.c.b16 %v752, %v752
  %v778 = vpack.c.b16 %v753, %v753
  %v779 = vpack.c.b16 %v754, %v754
  %v780 = vpack.c.b16 %v755, %v755
  %v781 = vpack.c.b16 %v756, %v756
  %v782 = vpack.c.b16 %v757, %v757
  %v783 = vpack.c.b16 %v758, %v758
  %v784 = vpack.c.b16 %v759, %v759
  %v785 = vpack.c.b16 %v760, %v760
  %v786 = vpack.c.b16 %v761, %v761
  %v787 = vpack.c.b16 %v762, %v762
  %813 = vst [vmem:[#allocation2 + $0x8] sm:$0xf] %v763
  %814 = vst [vmem:[#allocation2 + $0xc] sm:$0xf] %v764
  %815 = vst [vmem:[#allocation2 + $0x10] sm:$0xf] %v765
  %816 = vst [vmem:[#allocation2 + $0x14] sm:$0xf] %v766
  %817 = vst [vmem:[#allocation2 + $0x18] sm:$0xf] %v767
  %818 = vst [vmem:[#allocation2 + $0x1c] sm:$0xf] %v768
  %819 = vst [vmem:[#allocation2 + $0x20] sm:$0xf] %v769
  %820 = vst [vmem:[#allocation2 + $0x24] sm:$0xf] %v770
  %821 = vst [vmem:[#allocation2 + $0x28] sm:$0xf] %v771
  %822 = vst [vmem:[#allocation2 + $0x2c] sm:$0xf] %v772
  %823 = vst [vmem:[#allocation2 + $0x30] sm:$0xf] %v773
  %824 = vst [vmem:[#allocation2 + $0x34] sm:$0xf] %v774
  %825 = vst [vmem:[#allocation2 + $0x38] sm:$0xf] %v775
  %826 = vst [vmem:[#allocation2 + $0x3c] sm:$0xf] %v776
  %827 = vst [vmem:[#allocation2 + $0x40] sm:$0xf] %v777
  %828 = vst [vmem:[#allocation2 + $0x44] sm:$0xf] %v778
  %829 = vst [vmem:[#allocation2 + $0x48] sm:$0xf] %v779
  %830 = vst [vmem:[#allocation2 + $0x4c] sm:$0xf] %v780
  %831 = vst [vmem:[#allocation2 + $0x50] sm:$0xf] %v781
  %832 = vst [vmem:[#allocation2 + $0x54] sm:$0xf] %v782
  %833 = vst [vmem:[#allocation2 + $0x58] sm:$0xf] %v783
  %834 = vst [vmem:[#allocation2 + $0x5c] sm:$0xf] %v784
  %835 = vst [vmem:[#allocation2 + $0x60] sm:$0xf] %v785
  %836 = vst [vmem:[#allocation2 + $0x64] sm:$0xf] %v786
  %837 = vst [vmem:[#allocation2 + $0x68] sm:$0xf] %v787
  %v838 = vld [vmem:[#allocation2] sm:$0xc]
  %v839 = vld [vmem:[#allocation2 + $0x4] sm:$0xf]
  %v840 = vld [vmem:[#allocation2 + $0x8] sm:$0xf]
  %v841 = vld [vmem:[#allocation2 + $0xc] sm:$0xf]
  %v842 = vld [vmem:[#allocation2 + $0x10] sm:$0xf]
  %v843 = vld [vmem:[#allocation2 + $0x14] sm:$0xf]
  %v844 = vld [vmem:[#allocation2 + $0x18] sm:$0xf]
  %v845 = vld [vmem:[#allocation2 + $0x1c] sm:$0xf]
  %v846 = vld [vmem:[#allocation2 + $0x20] sm:$0xf]
  %v847 = vld [vmem:[#allocation2 + $0x24] sm:$0xf]
  %v848 = vld [vmem:[#allocation2 + $0x28] sm:$0xf]
  %v849 = vld [vmem:[#allocation2 + $0x2c] sm:$0xf]
  %v850 = vld [vmem:[#allocation2 + $0x30] sm:$0xf]
  %v851 = vld [vmem:[#allocation2 + $0x34] sm:$0xf]
  %v852 = vld [vmem:[#allocation2 + $0x38] sm:$0xf]
  %v853 = vld [vmem:[#allocation2 + $0x3c] sm:$0xf]
  %v854 = vld [vmem:[#allocation2 + $0x40] sm:$0xf]
  %v855 = vld [vmem:[#allocation2 + $0x44] sm:$0xf]
  %v856 = vld [vmem:[#allocation2 + $0x48] sm:$0xf]
  %v857 = vld [vmem:[#allocation2 + $0x4c] sm:$0xf]
  %v858 = vld [vmem:[#allocation2 + $0x50] sm:$0xf]
  %v859 = vld [vmem:[#allocation2 + $0x54] sm:$0xf]
  %v860 = vld [vmem:[#allocation2 + $0x58] sm:$0xf]
  %v861 = vld [vmem:[#allocation2 + $0x5c] sm:$0xf]
  %v862 = vld [vmem:[#allocation2 + $0x60] sm:$0xf]
  %v863 = vld [vmem:[#allocation2 + $0x64] sm:$0x7]
  %v864 = vld [vmem:[#allocation2] sm:$0x8]
  %v865 = vld [vmem:[#allocation2 + $0x64] sm:$0xf]
  %v866 = vld [vmem:[#allocation2 + $0x4] sm:$0x8]
  %v867 = vld [vmem:[#allocation2 + $0x68] sm:$0xf]
  %v868 = vld [vmem:[#allocation2 + $0x6c] sm:$0x1]
  %v869 = vld [vmem:[#allocation2 + $0xc] sm:$0xf]
  %v870 = vld [vmem:[#allocation2 + $0x10] sm:$0xf]
  %v871 = vld [vmem:[#allocation2 + $0x14] sm:$0xf]
  %v872 = vld [vmem:[#allocation2 + $0x18] sm:$0xf]
  %v873 = vld [vmem:[#allocation2 + $0x1c] sm:$0xf]
  %v874 = vld [vmem:[#allocation2 + $0x20] sm:$0xf]
  %v875 = vld [vmem:[#allocation2 + $0x24] sm:$0xf]
  %v876 = vld [vmem:[#allocation2 + $0x28] sm:$0xf]
  %v877 = vld [vmem:[#allocation2 + $0x2c] sm:$0xf]
  %v878 = vld [vmem:[#allocation2 + $0x30] sm:$0xf]
  %v879 = vld [vmem:[#allocation2 + $0x34] sm:$0xf]
  %v880 = vld [vmem:[#allocation2 + $0x38] sm:$0xf]
  %v881 = vld [vmem:[#allocation2 + $0x3c] sm:$0xf]
  %v882 = vld [vmem:[#allocation2 + $0x40] sm:$0xf]
  %v883 = vld [vmem:[#allocation2 + $0x44] sm:$0xf]
  %v884 = vld [vmem:[#allocation2 + $0x48] sm:$0xf]
  %v885 = vld [vmem:[#allocation2 + $0x4c] sm:$0xf]
  %v886 = vld [vmem:[#allocation2 + $0x50] sm:$0xf]
  %v887 = vld [vmem:[#allocation2 + $0x54] sm:$0xf]
  %v888 = vld [vmem:[#allocation2 + $0x58] sm:$0xf]
  %v889 = vld [vmem:[#allocation2 + $0x5c] sm:$0xf]
  %v890 = vld [vmem:[#allocation2 + $0x60] sm:$0xf]
  %v891 = vld [vmem:[#allocation2 + $0x64] sm:$0xf]
  %v892 = vld [vmem:[#allocation2 + $0x68] sm:$0xf]
  %v893 = vld [vmem:[#allocation2 + $0x6c] sm:$0xf]
  %v894 = vld [vmem:[#allocation2 + $0x70] sm:$0x1]
  %v895 = vld [vmem:[#allocation2 + $0xc] sm:$0xe]
  %v896 = vld [vmem:[#allocation2 + $0x70] sm:$0x3]
  %v923 = vunpack.c.l.b16 %v838
  %v924 = vunpack.c.l.b16 %v839
  %v925 = vunpack.c.l.b16 %v840
  %v926 = vunpack.c.l.b16 %v841
  %v927 = vunpack.c.l.b16 %v842
  %v928 = vunpack.c.l.b16 %v843
  %v929 = vunpack.c.l.b16 %v844
  %v930 = vunpack.c.l.b16 %v845
  %v931 = vunpack.c.l.b16 %v846
  %v932 = vunpack.c.l.b16 %v847
  %v933 = vunpack.c.l.b16 %v848
  %v934 = vunpack.c.l.b16 %v849
  %v935 = vunpack.c.l.b16 %v850
  %v936 = vunpack.c.l.b16 %v851
  %v937 = vunpack.c.l.b16 %v852
  %v938 = vunpack.c.l.b16 %v853
  %v939 = vunpack.c.l.b16 %v854
  %v940 = vunpack.c.l.b16 %v855
  %v941 = vunpack.c.l.b16 %v856
  %v942 = vunpack.c.l.b16 %v857
  %v943 = vunpack.c.l.b16 %v858
  %v944 = vunpack.c.l.b16 %v859
  %v945 = vunpack.c.l.b16 %v860
  %v946 = vunpack.c.l.b16 %v861
  %v947 = vunpack.c.l.b16 %v862
  %v948 = vunpack.c.l.b16 %v863
  %v949 = vpack.c.b16 %v924, %v923
  %v950 = vpack.c.b16 %v926, %v925
  %v951 = vpack.c.b16 %v928, %v927
  %v952 = vpack.c.b16 %v930, %v929
  %v953 = vpack.c.b16 %v932, %v931
  %v954 = vpack.c.b16 %v934, %v933
  %v955 = vpack.c.b16 %v936, %v935
  %v956 = vpack.c.b16 %v938, %v937
  %v957 = vpack.c.b16 %v940, %v939
  %v958 = vpack.c.b16 %v942, %v941
  %v959 = vpack.c.b16 %v944, %v943
  %v960 = vpack.c.b16 %v946, %v945
  %v961 = vpack.c.b16 %v948, %v947
  %v963 = vunpack.c.l.b16 %v864
  %v964 = vpack.c.b16 %v924, %v963
  %vm965 = vsmask.f32 7424
  %v967 = vshrl.u32 %v964, 16
  %v969 = vshll.u32 %v964, 16
  %v971 = vrot.slane %v969, 1
  %v972 = vor.u32 %v967, %v971
  %v974 = vshll.u32 %v950, 16
  %v976 = vrot.slane %v974, 1
  %v977 = vsel %vm965, %v972, %v976
  %v978 = vshrl.u32 %v950, 16
  %v980 = vor.u32 %v978, %v976
  %v982 = vshll.u32 %v951, 16
  %v984 = vrot.slane %v982, 1
  %v985 = vsel %vm965, %v980, %v984
  %v986 = vshrl.u32 %v951, 16
  %v988 = vor.u32 %v986, %v984
  %v990 = vshll.u32 %v952, 16
  %v992 = vrot.slane %v990, 1
  %v993 = vsel %vm965, %v988, %v992
  %v994 = vshrl.u32 %v952, 16
  %v996 = vor.u32 %v994, %v992
  %v998 = vshll.u32 %v953, 16
  %v1000 = vrot.slane %v998, 1
  %v1001 = vsel %vm965, %v996, %v1000
  %v1002 = vshrl.u32 %v953, 16
  %v1004 = vor.u32 %v1002, %v1000
  %v1006 = vshll.u32 %v954, 16
  %v1008 = vrot.slane %v1006, 1
  %v1009 = vsel %vm965, %v1004, %v1008
  %v1010 = vshrl.u32 %v954, 16
  %v1012 = vor.u32 %v1010, %v1008
  %v1014 = vshll.u32 %v955, 16
  %v1016 = vrot.slane %v1014, 1
  %v1017 = vsel %vm965, %v1012, %v1016
  %v1018 = vshrl.u32 %v955, 16
  %v1020 = vor.u32 %v1018, %v1016
  %v1022 = vshll.u32 %v956, 16
  %v1024 = vrot.slane %v1022, 1
  %v1025 = vsel %vm965, %v1020, %v1024
  %v1026 = vshrl.u32 %v956, 16
  %v1028 = vor.u32 %v1026, %v1024
  %v1030 = vshll.u32 %v957, 16
  %v1032 = vrot.slane %v1030, 1
  %v1033 = vsel %vm965, %v1028, %v1032
  %v1034 = vshrl.u32 %v957, 16
  %v1036 = vor.u32 %v1034, %v1032
  %v1038 = vshll.u32 %v958, 16
  %v1040 = vrot.slane %v1038, 1
  %v1041 = vsel %vm965, %v1036, %v1040
  %v1042 = vshrl.u32 %v958, 16
  %v1044 = vor.u32 %v1042, %v1040
  %v1046 = vshll.u32 %v959, 16
  %v1048 = vrot.slane %v1046, 1
  %v1049 = vsel %vm965, %v1044, %v1048
  %v1050 = vshrl.u32 %v959, 16
  %v1052 = vor.u32 %v1050, %v1048
  %v1054 = vshll.u32 %v960, 16
  %v1056 = vrot.slane %v1054, 1
  %v1057 = vsel %vm965, %v1052, %v1056
  %v1058 = vshrl.u32 %v960, 16
  %v1060 = vor.u32 %v1058, %v1056
  %v1062 = vshll.u32 %v961, 16
  %v1064 = vrot.slane %v1062, 1
  %v1065 = vsel %vm965, %v1060, %v1064
  %v1066 = vshrl.u32 %v961, 16
  %v1068 = vor.u32 %v1066, %v1064
  %v1070 = vunpack.c.l.b16 %v865
  %v1071 = vpack.c.b16 %v1070, %v947
  %vm1072 = vcmask 1046528
  %v1073 = vrot.slane %v964, 1
  %v1074 = vrot.slane %v950, 1
  %v1075 = vsel %vm1072, %v1073, %v1074
  %v1076 = vrot.slane %v951, 1
  %v1077 = vsel %vm1072, %v1074, %v1076
  %v1078 = vrot.slane %v952, 1
  %v1079 = vsel %vm1072, %v1076, %v1078
  %v1080 = vrot.slane %v953, 1
  %v1081 = vsel %vm1072, %v1078, %v1080
  %v1082 = vrot.slane %v954, 1
  %v1083 = vsel %vm1072, %v1080, %v1082
  %v1084 = vrot.slane %v955, 1
  %v1085 = vsel %vm1072, %v1082, %v1084
  %v1086 = vrot.slane %v956, 1
  %v1087 = vsel %vm1072, %v1084, %v1086
  %v1088 = vrot.slane %v957, 1
  %v1089 = vsel %vm1072, %v1086, %v1088
  %v1090 = vrot.slane %v958, 1
  %v1091 = vsel %vm1072, %v1088, %v1090
  %v1092 = vrot.slane %v959, 1
  %v1093 = vsel %vm1072, %v1090, %v1092
  %v1094 = vrot.slane %v960, 1
  %v1095 = vsel %vm1072, %v1092, %v1094
  %v1096 = vrot.slane %v1071, 1
  %v1097 = vsel %vm1072, %v1094, %v1096
  %v1100 = vunpack.c.l.b16 %v866
  %v1101 = vunpack.c.l.b16 %v867
  %v1102 = vpack.c.b16 %v925, %v1100
  %v1103 = vpack.c.b16 %v927, %v926
  %v1104 = vpack.c.b16 %v929, %v928
  %v1105 = vpack.c.b16 %v931, %v930
  %v1106 = vpack.c.b16 %v933, %v932
  %v1107 = vpack.c.b16 %v935, %v934
  %v1108 = vpack.c.b16 %v937, %v936
  %v1109 = vpack.c.b16 %v939, %v938
  %v1110 = vpack.c.b16 %v941, %v940
  %v1111 = vpack.c.b16 %v943, %v942
  %v1112 = vpack.c.b16 %v945, %v944
  %v1113 = vpack.c.b16 %v947, %v946
  %v1114 = vpack.c.b16 %v1101, %v1070
  %v1115 = vrot.slane %v1102, 1
  %v1116 = vrot.slane %v1103, 1
  %v1117 = vsel %vm1072, %v1115, %v1116
  %v1118 = vrot.slane %v1104, 1
  %v1119 = vsel %vm1072, %v1116, %v1118
  %v1120 = vrot.slane %v1105, 1
  %v1121 = vsel %vm1072, %v1118, %v1120
  %v1122 = vrot.slane %v1106, 1
  %v1123 = vsel %vm1072, %v1120, %v1122
  %v1124 = vrot.slane %v1107, 1
  %v1125 = vsel %vm1072, %v1122, %v1124
  %v1126 = vrot.slane %v1108, 1
  %v1127 = vsel %vm1072, %v1124, %v1126
  %v1128 = vrot.slane %v1109, 1
  %v1129 = vsel %vm1072, %v1126, %v1128
  %v1130 = vrot.slane %v1110, 1
  %v1131 = vsel %vm1072, %v1128, %v1130
  %v1132 = vrot.slane %v1111, 1
  %v1133 = vsel %vm1072, %v1130, %v1132
  %v1134 = vrot.slane %v1112, 1
  %v1135 = vsel %vm1072, %v1132, %v1134
  %v1136 = vrot.slane %v1113, 1
  %v1137 = vsel %vm1072, %v1134, %v1136
  %v1138 = vrot.slane %v1114, 1
  %v1139 = vsel %vm1072, %v1136, %v1138
  %v1140 = vpack.c.b16 %v1101, %v1101
  %vm1141 = vsmask.f32 2304
  %v1142 = vrot.slane %v978, 5
  %v1143 = vrot.slane %v974, 6
  %v1144 = vor.u32 %v1142, %v1143
  %v1145 = vrot.slane %v986, 5
  %v1146 = vrot.slane %v982, 6
  %v1147 = vor.u32 %v1145, %v1146
  %v1148 = vsel %vm1141, %v1144, %v1147
  %v1149 = vrot.slane %v994, 5
  %v1150 = vrot.slane %v990, 6
  %v1151 = vor.u32 %v1149, %v1150
  %v1152 = vsel %vm1141, %v1147, %v1151
  %v1153 = vrot.slane %v1002, 5
  %v1154 = vrot.slane %v998, 6
  %v1155 = vor.u32 %v1153, %v1154
  %v1156 = vsel %vm1141, %v1151, %v1155
  %v1157 = vrot.slane %v1010, 5
  %v1158 = vrot.slane %v1006, 6
  %v1159 = vor.u32 %v1157, %v1158
  %v1160 = vsel %vm1141, %v1155, %v1159
  %v1161 = vrot.slane %v1018, 5
  %v1162 = vrot.slane %v1014, 6
  %v1163 = vor.u32 %v1161, %v1162
  %v1164 = vsel %vm1141, %v1159, %v1163
  %v1165 = vrot.slane %v1026, 5
  %v1166 = vrot.slane %v1022, 6
  %v1167 = vor.u32 %v1165, %v1166
  %v1168 = vsel %vm1141, %v1163, %v1167
  %v1169 = vrot.slane %v1034, 5
  %v1170 = vrot.slane %v1030, 6
  %v1171 = vor.u32 %v1169, %v1170
  %v1172 = vsel %vm1141, %v1167, %v1171
  %v1173 = vrot.slane %v1042, 5
  %v1174 = vrot.slane %v1038, 6
  %v1175 = vor.u32 %v1173, %v1174
  %v1176 = vsel %vm1141, %v1171, %v1175
  %v1177 = vrot.slane %v1050, 5
  %v1178 = vrot.slane %v1046, 6
  %v1179 = vor.u32 %v1177, %v1178
  %v1180 = vsel %vm1141, %v1175, %v1179
  %v1181 = vrot.slane %v1058, 5
  %v1182 = vrot.slane %v1054, 6
  %v1183 = vor.u32 %v1181, %v1182
  %v1184 = vsel %vm1141, %v1179, %v1183
  %v1186 = vshrl.u32 %v1071, 16
  %v1188 = vrot.slane %v1186, 5
  %v1189 = vshll.u32 %v1071, 16
  %v1191 = vrot.slane %v1189, 6
  %v1192 = vor.u32 %v1188, %v1191
  %v1193 = vsel %vm1141, %v1183, %v1192
  %v1195 = vshrl.u32 %v1140, 16
  %v1197 = vrot.slane %v1195, 5
  %v1198 = vshll.u32 %v1140, 16
  %v1200 = vrot.slane %v1198, 6
  %v1201 = vor.u32 %v1197, %v1200
  %v1202 = vsel %vm1141, %v1192, %v1201
  %v1204 = vunpack.c.l.b16 %v868
  %v1205 = vpack.c.b16 %v1204, %v1101
  %vm1206 = vcmask 1041408
  %v1207 = vrot.slane %v950, 6
  %v1208 = vrot.slane %v951, 6
  %v1209 = vsel %vm1206, %v1207, %v1208
  %v1210 = vrot.slane %v952, 6
  %v1211 = vsel %vm1206, %v1208, %v1210
  %v1212 = vrot.slane %v953, 6
  %v1213 = vsel %vm1206, %v1210, %v1212
  %v1214 = vrot.slane %v954, 6
  %v1215 = vsel %vm1206, %v1212, %v1214
  %v1216 = vrot.slane %v955, 6
  %v1217 = vsel %vm1206, %v1214, %v1216
  %v1218 = vrot.slane %v956, 6
  %v1219 = vsel %vm1206, %v1216, %v1218
  %v1220 = vrot.slane %v957, 6
  %v1221 = vsel %vm1206, %v1218, %v1220
  %v1222 = vrot.slane %v958, 6
  %v1223 = vsel %vm1206, %v1220, %v1222
  %v1224 = vrot.slane %v959, 6
  %v1225 = vsel %vm1206, %v1222, %v1224
  %v1226 = vrot.slane %v960, 6
  %v1227 = vsel %vm1206, %v1224, %v1226
  %v1228 = vrot.slane %v1071, 6
  %v1229 = vsel %vm1206, %v1226, %v1228
  %v1230 = vrot.slane %v1205, 6
  %v1231 = vsel %vm1206, %v1228, %v1230
  %v1258 = vunpack.c.l.b16 %v869
  %v1259 = vunpack.c.l.b16 %v870
  %v1260 = vunpack.c.l.b16 %v871
  %v1261 = vunpack.c.l.b16 %v872
  %v1262 = vunpack.c.l.b16 %v873
  %v1263 = vunpack.c.l.b16 %v874
  %v1264 = vunpack.c.l.b16 %v875
  %v1265 = vunpack.c.l.b16 %v876
  %v1266 = vunpack.c.l.b16 %v877
  %v1267 = vunpack.c.l.b16 %v878
  %v1268 = vunpack.c.l.b16 %v879
  %v1269 = vunpack.c.l.b16 %v880
  %v1270 = vunpack.c.l.b16 %v881
  %v1271 = vunpack.c.l.b16 %v882
  %v1272 = vunpack.c.l.b16 %v883
  %v1273 = vunpack.c.l.b16 %v884
  %v1274 = vunpack.c.l.b16 %v885
  %v1275 = vunpack.c.l.b16 %v886
  %v1276 = vunpack.c.l.b16 %v887
  %v1277 = vunpack.c.l.b16 %v888
  %v1278 = vunpack.c.l.b16 %v889
  %v1279 = vunpack.c.l.b16 %v890
  %v1280 = vunpack.c.l.b16 %v891
  %v1281 = vunpack.c.l.b16 %v892
  %v1282 = vunpack.c.l.b16 %v893
  %v1283 = vunpack.c.l.b16 %v894
  %v1284 = vpack.c.b16 %v1259, %v1258
  %v1285 = vpack.c.b16 %v1261, %v1260
  %v1286 = vpack.c.b16 %v1263, %v1262
  %v1287 = vpack.c.b16 %v1265, %v1264
  %v1288 = vpack.c.b16 %v1267, %v1266
  %v1289 = vpack.c.b16 %v1269, %v1268
  %v1290 = vpack.c.b16 %v1271, %v1270
  %v1291 = vpack.c.b16 %v1273, %v1272
  %v1292 = vpack.c.b16 %v1275, %v1274
  %v1293 = vpack.c.b16 %v1277, %v1276
  %v1294 = vpack.c.b16 %v1279, %v1278
  %v1295 = vpack.c.b16 %v1281, %v1280
  %v1296 = vpack.c.b16 %v1283, %v1282
  %v1297 = vrot.slane %v1284, 6
  %v1298 = vrot.slane %v1285, 6
  %v1299 = vsel %vm1206, %v1297, %v1298
  %v1300 = vrot.slane %v1286, 6
  %v1301 = vsel %vm1206, %v1298, %v1300
  %v1302 = vrot.slane %v1287, 6
  %v1303 = vsel %vm1206, %v1300, %v1302
  %v1304 = vrot.slane %v1288, 6
  %v1305 = vsel %vm1206, %v1302, %v1304
  %v1306 = vrot.slane %v1289, 6
  %v1307 = vsel %vm1206, %v1304, %v1306
  %v1308 = vrot.slane %v1290, 6
  %v1309 = vsel %vm1206, %v1306, %v1308
  %v1310 = vrot.slane %v1291, 6
  %v1311 = vsel %vm1206, %v1308, %v1310
  %v1312 = vrot.slane %v1292, 6
  %v1313 = vsel %vm1206, %v1310, %v1312
  %v1314 = vrot.slane %v1293, 6
  %v1315 = vsel %vm1206, %v1312, %v1314
  %v1316 = vrot.slane %v1294, 6
  %v1317 = vsel %vm1206, %v1314, %v1316
  %v1318 = vrot.slane %v1295, 6
  %v1319 = vsel %vm1206, %v1316, %v1318
  %v1320 = vrot.slane %v1296, 6
  %v1321 = vsel %vm1206, %v1318, %v1320
  %v1323 = vunpack.c.l.b16 %v895
  %v1324 = vpack.c.b16 %v1259, %v1323
  %vm1325 = vsmask.f32 1280
  %v1327 = vshrl.u32 %v1324, 16
  %v1329 = vrot.slane %v1327, 6
  %v1330 = vshll.u32 %v1324, 16
  %v1332 = vrot.slane %v1330, 7
  %v1333 = vor.u32 %v1329, %v1332
  %v1335 = vshrl.u32 %v1285, 16
  %v1337 = vrot.slane %v1335, 6
  %v1338 = vshll.u32 %v1285, 16
  %v1340 = vrot.slane %v1338, 7
  %v1341 = vor.u32 %v1337, %v1340
  %v1342 = vsel %vm1325, %v1333, %v1341
  %v1344 = vshrl.u32 %v1286, 16
  %v1346 = vrot.slane %v1344, 6
  %v1347 = vshll.u32 %v1286, 16
  %v1349 = vrot.slane %v1347, 7
  %v1350 = vor.u32 %v1346, %v1349
  %v1351 = vsel %vm1325, %v1341, %v1350
  %v1353 = vshrl.u32 %v1287, 16
  %v1355 = vrot.slane %v1353, 6
  %v1356 = vshll.u32 %v1287, 16
  %v1358 = vrot.slane %v1356, 7
  %v1359 = vor.u32 %v1355, %v1358
  %v1360 = vsel %vm1325, %v1350, %v1359
  %v1362 = vshrl.u32 %v1288, 16
  %v1364 = vrot.slane %v1362, 6
  %v1365 = vshll.u32 %v1288, 16
  %v1367 = vrot.slane %v1365, 7
  %v1368 = vor.u32 %v1364, %v1367
  %v1369 = vsel %vm1325, %v1359, %v1368
  %v1371 = vshrl.u32 %v1289, 16
  %v1373 = vrot.slane %v1371, 6
  %v1374 = vshll.u32 %v1289, 16
  %v1376 = vrot.slane %v1374, 7
  %v1377 = vor.u32 %v1373, %v1376
  %v1378 = vsel %vm1325, %v1368, %v1377
  %v1380 = vshrl.u32 %v1290, 16
  %v1382 = vrot.slane %v1380, 6
  %v1383 = vshll.u32 %v1290, 16
  %v1385 = vrot.slane %v1383, 7
  %v1386 = vor.u32 %v1382, %v1385
  %v1387 = vsel %vm1325, %v1377, %v1386
  %v1389 = vshrl.u32 %v1291, 16
  %v1391 = vrot.slane %v1389, 6
  %v1392 = vshll.u32 %v1291, 16
  %v1394 = vrot.slane %v1392, 7
  %v1395 = vor.u32 %v1391, %v1394
  %v1396 = vsel %vm1325, %v1386, %v1395
  %v1398 = vshrl.u32 %v1292, 16
  %v1400 = vrot.slane %v1398, 6
  %v1401 = vshll.u32 %v1292, 16
  %v1403 = vrot.slane %v1401, 7
  %v1404 = vor.u32 %v1400, %v1403
  %v1405 = vsel %vm1325, %v1395, %v1404
  %v1407 = vshrl.u32 %v1293, 16
  %v1409 = vrot.slane %v1407, 6
  %v1410 = vshll.u32 %v1293, 16
  %v1412 = vrot.slane %v1410, 7
  %v1413 = vor.u32 %v1409, %v1412
  %v1414 = vsel %vm1325, %v1404, %v1413
  %v1416 = vshrl.u32 %v1294, 16
  %v1418 = vrot.slane %v1416, 6
  %v1419 = vshll.u32 %v1294, 16
  %v1421 = vrot.slane %v1419, 7
  %v1422 = vor.u32 %v1418, %v1421
  %v1423 = vsel %vm1325, %v1413, %v1422
  %v1425 = vshrl.u32 %v1295, 16
  %v1427 = vrot.slane %v1425, 6
  %v1428 = vshll.u32 %v1295, 16
  %v1430 = vrot.slane %v1428, 7
  %v1431 = vor.u32 %v1427, %v1430
  %v1432 = vsel %vm1325, %v1422, %v1431
  %v1434 = vshrl.u32 %v1296, 16
  %v1436 = vrot.slane %v1434, 6
  %v1437 = vshll.u32 %v1296, 16
  %v1439 = vrot.slane %v1437, 7
  %v1440 = vor.u32 %v1436, %v1439
  %v1441 = vsel %vm1325, %v1431, %v1440
  %v1443 = vunpack.c.l.b16 %v896
  %v1444 = vpack.c.b16 %v1443, %v1282
  %vm1445 = vcmask 1040384
  %v1446 = vrot.slane %v1324, 7
  %v1447 = vrot.slane %v1285, 7
  %v1448 = vsel %vm1445, %v1446, %v1447
  %v1449 = vrot.slane %v1286, 7
  %v1450 = vsel %vm1445, %v1447, %v1449
  %v1451 = vrot.slane %v1287, 7
  %v1452 = vsel %vm1445, %v1449, %v1451
  %v1453 = vrot.slane %v1288, 7
  %v1454 = vsel %vm1445, %v1451, %v1453
  %v1455 = vrot.slane %v1289, 7
  %v1456 = vsel %vm1445, %v1453, %v1455
  %v1457 = vrot.slane %v1290, 7
  %v1458 = vsel %vm1445, %v1455, %v1457
  %v1459 = vrot.slane %v1291, 7
  %v1460 = vsel %vm1445, %v1457, %v1459
  %v1461 = vrot.slane %v1292, 7
  %v1462 = vsel %vm1445, %v1459, %v1461
  %v1463 = vrot.slane %v1293, 7
  %v1464 = vsel %vm1445, %v1461, %v1463
  %v1465 = vrot.slane %v1294, 7
  %v1466 = vsel %vm1445, %v1463, %v1465
  %v1467 = vrot.slane %v1295, 7
  %v1468 = vsel %vm1445, %v1465, %v1467
  %v1469 = vrot.slane %v1444, 7
  %v1470 = vsel %vm1445, %v1467, %v1469
  %v1471 = vld [vmem:[%s3] sm:$0xf]
  %v1472 = vld [vmem:[%s3 + $0x4] sm:$0xf]
  %v1473 = vld [vmem:[%s3 + $0x8] sm:$0xf]
  %v1474 = vld [vmem:[%s3 + $0xc] sm:$0xf]
  %v1475 = vld [vmem:[%s3 + $0x10] sm:$0xf]
  %v1476 = vld [vmem:[%s3 + $0x14] sm:$0xf]
  %v1477 = vld [vmem:[%s3 + $0x18] sm:$0xf]
  %v1478 = vld [vmem:[%s3 + $0x1c] sm:$0xf]
  %v1479 = vld [vmem:[%s3 + $0x20] sm:$0xf]
  %v1480 = vld [vmem:[%s3 + $0x24] sm:$0xf]
  %v1481 = vld [vmem:[%s3 + $0x28] sm:$0xf]
  %v1482 = vld [vmem:[%s3 + $0x2c] sm:$0xf]
  %v1483 = vld [vmem:[%s3 + $0x30] sm:$0xf]
  %v1484 = vld [vmem:[%s3 + $0x34] sm:$0xf]
  %v1485 = vld [vmem:[%s3 + $0x38] sm:$0xf]
  %v1486 = vld [vmem:[%s3 + $0x3c] sm:$0xf]
  %v1487 = vld [vmem:[%s3 + $0x40] sm:$0xf]
  %v1488 = vld [vmem:[%s3 + $0x44] sm:$0xf]
  %v1489 = vld [vmem:[%s3 + $0x48] sm:$0xf]
  %v1490 = vld [vmem:[%s3 + $0x4c] sm:$0xf]
  %v1491 = vld [vmem:[%s3 + $0x50] sm:$0xf]
  %v1492 = vld [vmem:[%s3 + $0x54] sm:$0xf]
  %v1493 = vld [vmem:[%s3 + $0x58] sm:$0xf]
  %v1494 = vld [vmem:[%s3 + $0x5c] sm:$0xf]
  %v1495 = vld [vmem:[%s3 + $0x60] sm:$0xf]
  %v1496 = vld [vmem:[%s3 + $0x64] sm:$0xf]
  %v1497 = vld [vmem:[%s3 + $0x68] sm:$0xf]
  %v1498 = vld [vmem:[%s3 + $0x6c] sm:$0xf]
  %v1499 = vld [vmem:[%s3 + $0x70] sm:$0xf]
  %v1500 = vld [vmem:[%s3 + $0x74] sm:$0xf]
  %v1501 = vld [vmem:[%s3 + $0x78] sm:$0xf]
  %v1502 = vld [vmem:[%s3 + $0x7c] sm:$0xf]
  %v1503 = vld [vmem:[%s3 + $0x80] sm:$0xf]
  %v1504 = vld [vmem:[%s3 + $0x84] sm:$0xf]
  %v1505 = vld [vmem:[%s3 + $0x88] sm:$0xf]
  %v1506 = vld [vmem:[%s3 + $0x8c] sm:$0xf]
  %v1507 = vld [vmem:[%s3 + $0x90] sm:$0xf]
  %v1508 = vld [vmem:[%s3 + $0x94] sm:$0xf]
  %v1509 = vld [vmem:[%s3 + $0x98] sm:$0xf]
  %v1510 = vld [vmem:[%s3 + $0x9c] sm:$0xf]
  %v1511 = vld [vmem:[%s3 + $0xa0] sm:$0xf]
  %v1512 = vld [vmem:[%s3 + $0xa4] sm:$0xf]
  %v1513 = vld [vmem:[%s3 + $0xa8] sm:$0xf]
  %v1514 = vld [vmem:[%s3 + $0xac] sm:$0xf]
  %v1515 = vld [vmem:[%s3 + $0xb0] sm:$0xf]
  %v1516 = vld [vmem:[%s3 + $0xb4] sm:$0xf]
  %v1517 = vld [vmem:[%s3 + $0xb8] sm:$0xf]
  %v1518 = vld [vmem:[%s3 + $0xbc] sm:$0xf]
  %v1519 = vld [vmem:[%s3 + $0xc0] sm:$0xf]
  %v1520 = vld [vmem:[%s3 + $0xc4] sm:$0xf]
  %v1521 = vld [vmem:[%s3 + $0xc8] sm:$0xf]
  %v1522 = vld [vmem:[%s3 + $0xcc] sm:$0xf]
  %v1523 = vld [vmem:[%s3 + $0xd0] sm:$0xf]
  %v1524 = vld [vmem:[%s3 + $0xd4] sm:$0xf]
  %v1525 = vld [vmem:[%s3 + $0xd8] sm:$0xf]
  %v1526 = vld [vmem:[%s3 + $0xdc] sm:$0xf]
  %v1527 = vld [vmem:[%s3 + $0xe0] sm:$0xf]
  %v1528 = vld [vmem:[%s3 + $0xe4] sm:$0xf]
  %v1529 = vld [vmem:[%s3 + $0xe8] sm:$0xf]
  %v1530 = vld [vmem:[%s3 + $0xec] sm:$0xf]
  %v1531 = vld [vmem:[%s3 + $0xf0] sm:$0xf]
  %v1532 = vld [vmem:[%s3 + $0xf4] sm:$0xf]
  %v1533 = vld [vmem:[%s3 + $0xf8] sm:$0xf]
  %v1534 = vld [vmem:[%s3 + $0xfc] sm:$0xf]
  %v1535 = vld [vmem:[%s3 + $0x100] sm:$0xf]
  %v1536 = vld [vmem:[%s3 + $0x104] sm:$0xf]
  %v1537 = vld [vmem:[%s3 + $0x108] sm:$0xf]
  %v1538 = vld [vmem:[%s3 + $0x10c] sm:$0xf]
  %v1539 = vld [vmem:[%s3 + $0x110] sm:$0xf]
  %v1540 = vld [vmem:[%s3 + $0x114] sm:$0xf]
  %v1541 = vld [vmem:[%s3 + $0x118] sm:$0xf]
  %v1542 = vld [vmem:[%s3 + $0x11c] sm:$0xf]
  %v1543 = vld [vmem:[%s3 + $0x120] sm:$0xf]
  %v1544 = vld [vmem:[%s3 + $0x124] sm:$0xf]
  %v1545 = vld [vmem:[%s3 + $0x128] sm:$0xf]
  %v1546 = vld [vmem:[%s3 + $0x12c] sm:$0xf]
  %v1547 = vld [vmem:[%s3 + $0x130] sm:$0xf]
  %v1548 = vld [vmem:[%s3 + $0x134] sm:$0xf]
  %v1549 = vld [vmem:[%s3 + $0x138] sm:$0xf]
  %v1550 = vld [vmem:[%s3 + $0x13c] sm:$0xf]
  %v1551 = vld [vmem:[%s3 + $0x140] sm:$0xf]
  %v1552 = vld [vmem:[%s3 + $0x144] sm:$0xf]
  %v1553 = vld [vmem:[%s3 + $0x148] sm:$0xf]
  %v1554 = vld [vmem:[%s3 + $0x14c] sm:$0xf]
  %v1555 = vld [vmem:[%s3 + $0x150] sm:$0xf]
  %v1556 = vld [vmem:[%s3 + $0x154] sm:$0xf]
  %v1557 = vld [vmem:[%s3 + $0x158] sm:$0xf]
  %v1558 = vld [vmem:[%s3 + $0x15c] sm:$0xf]
  %v1559 = vld [vmem:[%s3 + $0x160] sm:$0xf]
  %v1560 = vld [vmem:[%s3 + $0x164] sm:$0xf]
  %v1561 = vld [vmem:[%s3 + $0x168] sm:$0xf]
  %v1562 = vld [vmem:[%s3 + $0x16c] sm:$0xf]
  %v1563 = vld [vmem:[%s3 + $0x170] sm:$0xf]
  %v1564 = vld [vmem:[%s3 + $0x174] sm:$0xf]
  %v1565 = vld [vmem:[%s3 + $0x178] sm:$0xf]
  %v1566 = vld [vmem:[%s3 + $0x17c] sm:$0xf]
  %v1567 = vld [vmem:[%s3 + $0x180] sm:$0xf]
  %v1568 = vld [vmem:[%s3 + $0x184] sm:$0xf]
  %v1569 = vld [vmem:[%s3 + $0x188] sm:$0xf]
  %v1570 = vld [vmem:[%s3 + $0x18c] sm:$0xf]
  %v1571 = vld [vmem:[%s3 + $0x190] sm:$0xf]
  %v1572 = vld [vmem:[%s3 + $0x194] sm:$0xf]
  %v1573 = vld [vmem:[%s3 + $0x198] sm:$0xf]
  %v1574 = vld [vmem:[%s3 + $0x19c] sm:$0xf]
  %v1575 = vld [vmem:[%s3 + $0x1a0] sm:$0xf]
  %v1576 = vld [vmem:[%s3 + $0x1a4] sm:$0xf]
  %v1577 = vld [vmem:[%s3 + $0x1a8] sm:$0xf]
  %v1578 = vld [vmem:[%s3 + $0x1ac] sm:$0xf]
  %v1579 = vld [vmem:[%s3 + $0x1b0] sm:$0xf]
  %v1580 = vld [vmem:[%s3 + $0x1b4] sm:$0xf]
  %v1581 = vld [vmem:[%s3 + $0x1b8] sm:$0xf]
  %v1582 = vld [vmem:[%s3 + $0x1bc] sm:$0xf]
  %v1583 = vld [vmem:[%s3 + $0x1c0] sm:$0xf]
  %v1584 = vld [vmem:[%s3 + $0x1c4] sm:$0xf]
  %v1585 = vld [vmem:[%s3 + $0x1c8] sm:$0xf]
  %v1586 = vld [vmem:[%s3 + $0x1cc] sm:$0xf]
  %v1587 = vld [vmem:[%s3 + $0x1d0] sm:$0xf]
  %v1588 = vld [vmem:[%s3 + $0x1d4] sm:$0xf]
  %v1589 = vld [vmem:[%s3 + $0x1d8] sm:$0xf]
  %v1590 = vld [vmem:[%s3 + $0x1dc] sm:$0xf]
  %v1591 = vld [vmem:[%s3 + $0x1e0] sm:$0xf]
  %v1592 = vld [vmem:[%s3 + $0x1e4] sm:$0xf]
  %v1593 = vld [vmem:[%s3 + $0x1e8] sm:$0xf]
  %v1594 = vld [vmem:[%s3 + $0x1ec] sm:$0xf]
  %v1595 = vld [vmem:[%s3 + $0x1f0] sm:$0xf]
  %v1596 = vld [vmem:[%s3 + $0x1f4] sm:$0xf]
  %v1597 = vld [vmem:[%s3 + $0x1f8] sm:$0xf]
  %v1598 = vld [vmem:[%s3 + $0x1fc] sm:$0xf]
  %v1599 = vld [vmem:[%s3 + $0x200] sm:$0xf]
  %v1600 = vld [vmem:[%s3 + $0x204] sm:$0xf]
  %v1601 = vld [vmem:[%s3 + $0x208] sm:$0xf]
  %v1602 = vld [vmem:[%s3 + $0x20c] sm:$0xf]
  %v1603 = vld [vmem:[%s3 + $0x210] sm:$0xf]
  %v1604 = vld [vmem:[%s3 + $0x214] sm:$0xf]
  %v1605 = vld [vmem:[%s3 + $0x218] sm:$0xf]
  %v1606 = vld [vmem:[%s3 + $0x21c] sm:$0xf]
  %v1607 = vld [vmem:[%s3 + $0x220] sm:$0xf]
  %v1608 = vld [vmem:[%s3 + $0x224] sm:$0xf]
  %v1609 = vld [vmem:[%s3 + $0x228] sm:$0xf]
  %v1610 = vld [vmem:[%s3 + $0x22c] sm:$0xf]
  %v1611 = vld [vmem:[%s3 + $0x230] sm:$0xf]
  %v1612 = vld [vmem:[%s3 + $0x234] sm:$0xf]
  %v1613 = vld [vmem:[%s3 + $0x238] sm:$0xf]
  %v1614 = vld [vmem:[%s3 + $0x23c] sm:$0xf]
  %vm1615 = vsmask.f32 5376
  %v1617 = vshrl.u32 %v949, 16
  %v1619 = vrot.slane %v1617, 2
  %v1620 = vshll.u32 %v949, 16
  %v1622 = vrot.slane %v1620, 3
  %v1623 = vor.u32 %v1619, %v1622
  %v1624 = vrot.slane %v978, 2
  %v1625 = vrot.slane %v974, 3
  %v1626 = vor.u32 %v1624, %v1625
  %v1627 = vsel %vm1615, %v1623, %v1626
  %v1629 = vshrl.u32 %v977, 16
  %v1631 = vrot.slane %v1629, 2
  %v1632 = vshll.u32 %v977, 16
  %v1634 = vrot.slane %v1632, 3
  %v1635 = vor.u32 %v1631, %v1634
  %v1637 = vshrl.u32 %v985, 16
  %v1639 = vrot.slane %v1637, 2
  %v1640 = vshll.u32 %v985, 16
  %v1642 = vrot.slane %v1640, 3
  %v1643 = vor.u32 %v1639, %v1642
  %v1644 = vsel %vm1615, %v1635, %v1643
  %v1646 = vshrl.u32 %v1075, 16
  %v1648 = vrot.slane %v1646, 2
  %v1649 = vshll.u32 %v1075, 16
  %v1651 = vrot.slane %v1649, 3
  %v1652 = vor.u32 %v1648, %v1651
  %v1654 = vshrl.u32 %v1077, 16
  %v1656 = vrot.slane %v1654, 2
  %v1657 = vshll.u32 %v1077, 16
  %v1659 = vrot.slane %v1657, 3
  %v1660 = vor.u32 %v1656, %v1659
  %v1661 = vsel %vm1615, %v1652, %v1660
  %v1663 = vshrl.u32 %v1117, 16
  %v1665 = vrot.slane %v1663, 2
  %v1666 = vshll.u32 %v1117, 16
  %v1668 = vrot.slane %v1666, 3
  %v1669 = vor.u32 %v1665, %v1668
  %v1671 = vshrl.u32 %v1119, 16
  %v1673 = vrot.slane %v1671, 2
  %v1674 = vshll.u32 %v1119, 16
  %v1676 = vrot.slane %v1674, 3
  %v1677 = vor.u32 %v1673, %v1676
  %v1678 = vsel %vm1615, %v1669, %v1677
  %v1680 = vshrl.u32 %v1144, 16
  %v1682 = vrot.slane %v1680, 2
  %v1683 = vshll.u32 %v1144, 16
  %v1685 = vrot.slane %v1683, 3
  %v1686 = vor.u32 %v1682, %v1685
  %v1688 = vshrl.u32 %v1148, 16
  %v1690 = vrot.slane %v1688, 2
  %v1691 = vshll.u32 %v1148, 16
  %v1693 = vrot.slane %v1691, 3
  %v1694 = vor.u32 %v1690, %v1693
  %v1695 = vsel %vm1615, %v1686, %v1694
  %v1697 = vshrl.u32 %v1207, 16
  %v1699 = vrot.slane %v1697, 2
  %v1700 = vshll.u32 %v1207, 16
  %v1702 = vrot.slane %v1700, 3
  %v1703 = vor.u32 %v1699, %v1702
  %v1705 = vshrl.u32 %v1209, 16
  %v1707 = vrot.slane %v1705, 2
  %v1708 = vshll.u32 %v1209, 16
  %v1710 = vrot.slane %v1708, 3
  %v1711 = vor.u32 %v1707, %v1710
  %v1712 = vsel %vm1615, %v1703, %v1711
  %v1714 = vshrl.u32 %v1297, 16
  %v1716 = vrot.slane %v1714, 2
  %v1717 = vshll.u32 %v1297, 16
  %v1719 = vrot.slane %v1717, 3
  %v1720 = vor.u32 %v1716, %v1719
  %v1722 = vshrl.u32 %v1299, 16
  %v1724 = vrot.slane %v1722, 2
  %v1725 = vshll.u32 %v1299, 16
  %v1727 = vrot.slane %v1725, 3
  %v1728 = vor.u32 %v1724, %v1727
  %v1729 = vsel %vm1615, %v1720, %v1728
  %v1731 = vshrl.u32 %v1333, 16
  %v1733 = vrot.slane %v1731, 2
  %v1734 = vshll.u32 %v1333, 16
  %v1736 = vrot.slane %v1734, 3
  %v1737 = vor.u32 %v1733, %v1736
  %v1739 = vshrl.u32 %v1342, 16
  %v1741 = vrot.slane %v1739, 2
  %v1742 = vshll.u32 %v1342, 16
  %v1744 = vrot.slane %v1742, 3
  %v1745 = vor.u32 %v1741, %v1744
  %v1746 = vsel %vm1615, %v1737, %v1745
  %v1748 = vshrl.u32 %v1446, 16
  %v1750 = vrot.slane %v1748, 2
  %v1751 = vshll.u32 %v1446, 16
  %v1753 = vrot.slane %v1751, 3
  %v1754 = vor.u32 %v1750, %v1753
  %v1756 = vshrl.u32 %v1448, 16
  %v1758 = vrot.slane %v1756, 2
  %v1759 = vshll.u32 %v1448, 16
  %v1761 = vrot.slane %v1759, 3
  %v1762 = vor.u32 %v1758, %v1761
  %v1763 = vsel %vm1615, %v1754, %v1762
  %v1764 = vrot.slane %v986, 2
  %v1765 = vrot.slane %v982, 3
  %v1766 = vor.u32 %v1764, %v1765
  %v1767 = vsel %vm1615, %v1626, %v1766
  %v1769 = vshrl.u32 %v993, 16
  %v1771 = vrot.slane %v1769, 2
  %v1772 = vshll.u32 %v993, 16
  %v1774 = vrot.slane %v1772, 3
  %v1775 = vor.u32 %v1771, %v1774
  %v1776 = vsel %vm1615, %v1643, %v1775
  %v1778 = vshrl.u32 %v1079, 16
  %v1780 = vrot.slane %v1778, 2
  %v1781 = vshll.u32 %v1079, 16
  %v1783 = vrot.slane %v1781, 3
  %v1784 = vor.u32 %v1780, %v1783
  %v1785 = vsel %vm1615, %v1660, %v1784
  %v1787 = vshrl.u32 %v1121, 16
  %v1789 = vrot.slane %v1787, 2
  %v1790 = vshll.u32 %v1121, 16
  %v1792 = vrot.slane %v1790, 3
  %v1793 = vor.u32 %v1789, %v1792
  %v1794 = vsel %vm1615, %v1677, %v1793
  %v1796 = vshrl.u32 %v1152, 16
  %v1798 = vrot.slane %v1796, 2
  %v1799 = vshll.u32 %v1152, 16
  %v1801 = vrot.slane %v1799, 3
  %v1802 = vor.u32 %v1798, %v1801
  %v1803 = vsel %vm1615, %v1694, %v1802
  %v1805 = vshrl.u32 %v1211, 16
  %v1807 = vrot.slane %v1805, 2
  %v1808 = vshll.u32 %v1211, 16
  %v1810 = vrot.slane %v1808, 3
  %v1811 = vor.u32 %v1807, %v1810
  %v1812 = vsel %vm1615, %v1711, %v1811
  %v1814 = vshrl.u32 %v1301, 16
  %v1816 = vrot.slane %v1814, 2
  %v1817 = vshll.u32 %v1301, 16
  %v1819 = vrot.slane %v1817, 3
  %v1820 = vor.u32 %v1816, %v1819
  %v1821 = vsel %vm1615, %v1728, %v1820
  %v1823 = vshrl.u32 %v1351, 16
  %v1825 = vrot.slane %v1823, 2
  %v1826 = vshll.u32 %v1351, 16
  %v1828 = vrot.slane %v1826, 3
  %v1829 = vor.u32 %v1825, %v1828
  %v1830 = vsel %vm1615, %v1745, %v1829
  %v1832 = vshrl.u32 %v1450, 16
  %v1834 = vrot.slane %v1832, 2
  %v1835 = vshll.u32 %v1450, 16
  %v1837 = vrot.slane %v1835, 3
  %v1838 = vor.u32 %v1834, %v1837
  %v1839 = vsel %vm1615, %v1762, %v1838
  %v1840 = vrot.slane %v994, 2
  %v1841 = vrot.slane %v990, 3
  %v1842 = vor.u32 %v1840, %v1841
  %v1843 = vsel %vm1615, %v1766, %v1842
  %v1845 = vshrl.u32 %v1001, 16
  %v1847 = vrot.slane %v1845, 2
  %v1848 = vshll.u32 %v1001, 16
  %v1850 = vrot.slane %v1848, 3
  %v1851 = vor.u32 %v1847, %v1850
  %v1852 = vsel %vm1615, %v1775, %v1851
  %v1854 = vshrl.u32 %v1081, 16
  %v1856 = vrot.slane %v1854, 2
  %v1857 = vshll.u32 %v1081, 16
  %v1859 = vrot.slane %v1857, 3
  %v1860 = vor.u32 %v1856, %v1859
  %v1861 = vsel %vm1615, %v1784, %v1860
  %v1863 = vshrl.u32 %v1123, 16
  %v1865 = vrot.slane %v1863, 2
  %v1866 = vshll.u32 %v1123, 16
  %v1868 = vrot.slane %v1866, 3
  %v1869 = vor.u32 %v1865, %v1868
  %v1870 = vsel %vm1615, %v1793, %v1869
  %v1872 = vshrl.u32 %v1156, 16
  %v1874 = vrot.slane %v1872, 2
  %v1875 = vshll.u32 %v1156, 16
  %v1877 = vrot.slane %v1875, 3
  %v1878 = vor.u32 %v1874, %v1877
  %v1879 = vsel %vm1615, %v1802, %v1878
  %v1881 = vshrl.u32 %v1213, 16
  %v1883 = vrot.slane %v1881, 2
  %v1884 = vshll.u32 %v1213, 16
  %v1886 = vrot.slane %v1884, 3
  %v1887 = vor.u32 %v1883, %v1886
  %v1888 = vsel %vm1615, %v1811, %v1887
  %v1890 = vshrl.u32 %v1303, 16
  %v1892 = vrot.slane %v1890, 2
  %v1893 = vshll.u32 %v1303, 16
  %v1895 = vrot.slane %v1893, 3
  %v1896 = vor.u32 %v1892, %v1895
  %v1897 = vsel %vm1615, %v1820, %v1896
  %v1899 = vshrl.u32 %v1360, 16
  %v1901 = vrot.slane %v1899, 2
  %v1902 = vshll.u32 %v1360, 16
  %v1904 = vrot.slane %v1902, 3
  %v1905 = vor.u32 %v1901, %v1904
  %v1906 = vsel %vm1615, %v1829, %v1905
  %v1908 = vshrl.u32 %v1452, 16
  %v1910 = vrot.slane %v1908, 2
  %v1911 = vshll.u32 %v1452, 16
  %v1913 = vrot.slane %v1911, 3
  %v1914 = vor.u32 %v1910, %v1913
  %v1915 = vsel %vm1615, %v1838, %v1914
  %v1916 = vrot.slane %v1002, 2
  %v1917 = vrot.slane %v998, 3
  %v1918 = vor.u32 %v1916, %v1917
  %v1919 = vsel %vm1615, %v1842, %v1918
  %v1921 = vshrl.u32 %v1009, 16
  %v1923 = vrot.slane %v1921, 2
  %v1924 = vshll.u32 %v1009, 16
  %v1926 = vrot.slane %v1924, 3
  %v1927 = vor.u32 %v1923, %v1926
  %v1928 = vsel %vm1615, %v1851, %v1927
  %v1930 = vshrl.u32 %v1083, 16
  %v1932 = vrot.slane %v1930, 2
  %v1933 = vshll.u32 %v1083, 16
  %v1935 = vrot.slane %v1933, 3
  %v1936 = vor.u32 %v1932, %v1935
  %v1937 = vsel %vm1615, %v1860, %v1936
  %v1939 = vshrl.u32 %v1125, 16
  %v1941 = vrot.slane %v1939, 2
  %v1942 = vshll.u32 %v1125, 16
  %v1944 = vrot.slane %v1942, 3
  %v1945 = vor.u32 %v1941, %v1944
  %v1946 = vsel %vm1615, %v1869, %v1945
  %v1948 = vshrl.u32 %v1160, 16
  %v1950 = vrot.slane %v1948, 2
  %v1951 = vshll.u32 %v1160, 16
  %v1953 = vrot.slane %v1951, 3
  %v1954 = vor.u32 %v1950, %v1953
  %v1955 = vsel %vm1615, %v1878, %v1954
  %v1957 = vshrl.u32 %v1215, 16
  %v1959 = vrot.slane %v1957, 2
  %v1960 = vshll.u32 %v1215, 16
  %v1962 = vrot.slane %v1960, 3
  %v1963 = vor.u32 %v1959, %v1962
  %v1964 = vsel %vm1615, %v1887, %v1963
  %v1966 = vshrl.u32 %v1305, 16
  %v1968 = vrot.slane %v1966, 2
  %v1969 = vshll.u32 %v1305, 16
  %v1971 = vrot.slane %v1969, 3
  %v1972 = vor.u32 %v1968, %v1971
  %v1973 = vsel %vm1615, %v1896, %v1972
  %v1975 = vshrl.u32 %v1369, 16
  %v1977 = vrot.slane %v1975, 2
  %v1978 = vshll.u32 %v1369, 16
  %v1980 = vrot.slane %v1978, 3
  %v1981 = vor.u32 %v1977, %v1980
  %v1982 = vsel %vm1615, %v1905, %v1981
  %v1984 = vshrl.u32 %v1454, 16
  %v1986 = vrot.slane %v1984, 2
  %v1987 = vshll.u32 %v1454, 16
  %v1989 = vrot.slane %v1987, 3
  %v1990 = vor.u32 %v1986, %v1989
  %v1991 = vsel %vm1615, %v1914, %v1990
  %v1992 = vrot.slane %v1010, 2
  %v1993 = vrot.slane %v1006, 3
  %v1994 = vor.u32 %v1992, %v1993
  %v1995 = vsel %vm1615, %v1918, %v1994
  %v1997 = vshrl.u32 %v1017, 16
  %v1999 = vrot.slane %v1997, 2
  %v2000 = vshll.u32 %v1017, 16
  %v2002 = vrot.slane %v2000, 3
  %v2003 = vor.u32 %v1999, %v2002
  %v2004 = vsel %vm1615, %v1927, %v2003
  %v2006 = vshrl.u32 %v1085, 16
  %v2008 = vrot.slane %v2006, 2
  %v2009 = vshll.u32 %v1085, 16
  %v2011 = vrot.slane %v2009, 3
  %v2012 = vor.u32 %v2008, %v2011
  %v2013 = vsel %vm1615, %v1936, %v2012
  %v2015 = vshrl.u32 %v1127, 16
  %v2017 = vrot.slane %v2015, 2
  %v2018 = vshll.u32 %v1127, 16
  %v2020 = vrot.slane %v2018, 3
  %v2021 = vor.u32 %v2017, %v2020
  %v2022 = vsel %vm1615, %v1945, %v2021
  %v2024 = vshrl.u32 %v1164, 16
  %v2026 = vrot.slane %v2024, 2
  %v2027 = vshll.u32 %v1164, 16
  %v2029 = vrot.slane %v2027, 3
  %v2030 = vor.u32 %v2026, %v2029
  %v2031 = vsel %vm1615, %v1954, %v2030
  %v2033 = vshrl.u32 %v1217, 16
  %v2035 = vrot.slane %v2033, 2
  %v2036 = vshll.u32 %v1217, 16
  %v2038 = vrot.slane %v2036, 3
  %v2039 = vor.u32 %v2035, %v2038
  %v2040 = vsel %vm1615, %v1963, %v2039
  %v2042 = vshrl.u32 %v1307, 16
  %v2044 = vrot.slane %v2042, 2
  %v2045 = vshll.u32 %v1307, 16
  %v2047 = vrot.slane %v2045, 3
  %v2048 = vor.u32 %v2044, %v2047
  %v2049 = vsel %vm1615, %v1972, %v2048
  %v2051 = vshrl.u32 %v1378, 16
  %v2053 = vrot.slane %v2051, 2
  %v2054 = vshll.u32 %v1378, 16
  %v2056 = vrot.slane %v2054, 3
  %v2057 = vor.u32 %v2053, %v2056
  %v2058 = vsel %vm1615, %v1981, %v2057
  %v2060 = vshrl.u32 %v1456, 16
  %v2062 = vrot.slane %v2060, 2
  %v2063 = vshll.u32 %v1456, 16
  %v2065 = vrot.slane %v2063, 3
  %v2066 = vor.u32 %v2062, %v2065
  %v2067 = vsel %vm1615, %v1990, %v2066
  %v2068 = vrot.slane %v1018, 2
  %v2069 = vrot.slane %v1014, 3
  %v2070 = vor.u32 %v2068, %v2069
  %v2071 = vsel %vm1615, %v1994, %v2070
  %v2073 = vshrl.u32 %v1025, 16
  %v2075 = vrot.slane %v2073, 2
  %v2076 = vshll.u32 %v1025, 16
  %v2078 = vrot.slane %v2076, 3
  %v2079 = vor.u32 %v2075, %v2078
  %v2080 = vsel %vm1615, %v2003, %v2079
  %v2082 = vshrl.u32 %v1087, 16
  %v2084 = vrot.slane %v2082, 2
  %v2085 = vshll.u32 %v1087, 16
  %v2087 = vrot.slane %v2085, 3
  %v2088 = vor.u32 %v2084, %v2087
  %v2089 = vsel %vm1615, %v2012, %v2088
  %v2091 = vshrl.u32 %v1129, 16
  %v2093 = vrot.slane %v2091, 2
  %v2094 = vshll.u32 %v1129, 16
  %v2096 = vrot.slane %v2094, 3
  %v2097 = vor.u32 %v2093, %v2096
  %v2098 = vsel %vm1615, %v2021, %v2097
  %v2100 = vshrl.u32 %v1168, 16
  %v2102 = vrot.slane %v2100, 2
  %v2103 = vshll.u32 %v1168, 16
  %v2105 = vrot.slane %v2103, 3
  %v2106 = vor.u32 %v2102, %v2105
  %v2107 = vsel %vm1615, %v2030, %v2106
  %v2109 = vshrl.u32 %v1219, 16
  %v2111 = vrot.slane %v2109, 2
  %v2112 = vshll.u32 %v1219, 16
  %v2114 = vrot.slane %v2112, 3
  %v2115 = vor.u32 %v2111, %v2114
  %v2116 = vsel %vm1615, %v2039, %v2115
  %v2118 = vshrl.u32 %v1309, 16
  %v2120 = vrot.slane %v2118, 2
  %v2121 = vshll.u32 %v1309, 16
  %v2123 = vrot.slane %v2121, 3
  %v2124 = vor.u32 %v2120, %v2123
  %v2125 = vsel %vm1615, %v2048, %v2124
  %v2127 = vshrl.u32 %v1387, 16
  %v2129 = vrot.slane %v2127, 2
  %v2130 = vshll.u32 %v1387, 16
  %v2132 = vrot.slane %v2130, 3
  %v2133 = vor.u32 %v2129, %v2132
  %v2134 = vsel %vm1615, %v2057, %v2133
  %v2136 = vshrl.u32 %v1458, 16
  %v2138 = vrot.slane %v2136, 2
  %v2139 = vshll.u32 %v1458, 16
  %v2141 = vrot.slane %v2139, 3
  %v2142 = vor.u32 %v2138, %v2141
  %v2143 = vsel %vm1615, %v2066, %v2142
  %v2144 = vrot.slane %v1026, 2
  %v2145 = vrot.slane %v1022, 3
  %v2146 = vor.u32 %v2144, %v2145
  %v2147 = vsel %vm1615, %v2070, %v2146
  %v2149 = vshrl.u32 %v1033, 16
  %v2151 = vrot.slane %v2149, 2
  %v2152 = vshll.u32 %v1033, 16
  %v2154 = vrot.slane %v2152, 3
  %v2155 = vor.u32 %v2151, %v2154
  %v2156 = vsel %vm1615, %v2079, %v2155
  %v2158 = vshrl.u32 %v1089, 16
  %v2160 = vrot.slane %v2158, 2
  %v2161 = vshll.u32 %v1089, 16
  %v2163 = vrot.slane %v2161, 3
  %v2164 = vor.u32 %v2160, %v2163
  %v2165 = vsel %vm1615, %v2088, %v2164
  %v2167 = vshrl.u32 %v1131, 16
  %v2169 = vrot.slane %v2167, 2
  %v2170 = vshll.u32 %v1131, 16
  %v2172 = vrot.slane %v2170, 3
  %v2173 = vor.u32 %v2169, %v2172
  %v2174 = vsel %vm1615, %v2097, %v2173
  %v2176 = vshrl.u32 %v1172, 16
  %v2178 = vrot.slane %v2176, 2
  %v2179 = vshll.u32 %v1172, 16
  %v2181 = vrot.slane %v2179, 3
  %v2182 = vor.u32 %v2178, %v2181
  %v2183 = vsel %vm1615, %v2106, %v2182
  %v2185 = vshrl.u32 %v1221, 16
  %v2187 = vrot.slane %v2185, 2
  %v2188 = vshll.u32 %v1221, 16
  %v2190 = vrot.slane %v2188, 3
  %v2191 = vor.u32 %v2187, %v2190
  %v2192 = vsel %vm1615, %v2115, %v2191
  %v2194 = vshrl.u32 %v1311, 16
  %v2196 = vrot.slane %v2194, 2
  %v2197 = vshll.u32 %v1311, 16
  %v2199 = vrot.slane %v2197, 3
  %v2200 = vor.u32 %v2196, %v2199
  %v2201 = vsel %vm1615, %v2124, %v2200
  %v2203 = vshrl.u32 %v1396, 16
  %v2205 = vrot.slane %v2203, 2
  %v2206 = vshll.u32 %v1396, 16
  %v2208 = vrot.slane %v2206, 3
  %v2209 = vor.u32 %v2205, %v2208
  %v2210 = vsel %vm1615, %v2133, %v2209
  %v2212 = vshrl.u32 %v1460, 16
  %v2214 = vrot.slane %v2212, 2
  %v2215 = vshll.u32 %v1460, 16
  %v2217 = vrot.slane %v2215, 3
  %v2218 = vor.u32 %v2214, %v2217
  %v2219 = vsel %vm1615, %v2142, %v2218
  %v2220 = vrot.slane %v1034, 2
  %v2221 = vrot.slane %v1030, 3
  %v2222 = vor.u32 %v2220, %v2221
  %v2223 = vsel %vm1615, %v2146, %v2222
  %v2225 = vshrl.u32 %v1041, 16
  %v2227 = vrot.slane %v2225, 2
  %v2228 = vshll.u32 %v1041, 16
  %v2230 = vrot.slane %v2228, 3
  %v2231 = vor.u32 %v2227, %v2230
  %v2232 = vsel %vm1615, %v2155, %v2231
  %v2234 = vshrl.u32 %v1091, 16
  %v2236 = vrot.slane %v2234, 2
  %v2237 = vshll.u32 %v1091, 16
  %v2239 = vrot.slane %v2237, 3
  %v2240 = vor.u32 %v2236, %v2239
  %v2241 = vsel %vm1615, %v2164, %v2240
  %v2243 = vshrl.u32 %v1133, 16
  %v2245 = vrot.slane %v2243, 2
  %v2246 = vshll.u32 %v1133, 16
  %v2248 = vrot.slane %v2246, 3
  %v2249 = vor.u32 %v2245, %v2248
  %v2250 = vsel %vm1615, %v2173, %v2249
  %v2252 = vshrl.u32 %v1176, 16
  %v2254 = vrot.slane %v2252, 2
  %v2255 = vshll.u32 %v1176, 16
  %v2257 = vrot.slane %v2255, 3
  %v2258 = vor.u32 %v2254, %v2257
  %v2259 = vsel %vm1615, %v2182, %v2258
  %v2261 = vshrl.u32 %v1223, 16
  %v2263 = vrot.slane %v2261, 2
  %v2264 = vshll.u32 %v1223, 16
  %v2266 = vrot.slane %v2264, 3
  %v2267 = vor.u32 %v2263, %v2266
  %v2268 = vsel %vm1615, %v2191, %v2267
  %v2270 = vshrl.u32 %v1313, 16
  %v2272 = vrot.slane %v2270, 2
  %v2273 = vshll.u32 %v1313, 16
  %v2275 = vrot.slane %v2273, 3
  %v2276 = vor.u32 %v2272, %v2275
  %v2277 = vsel %vm1615, %v2200, %v2276
  %v2279 = vshrl.u32 %v1405, 16
  %v2281 = vrot.slane %v2279, 2
  %v2282 = vshll.u32 %v1405, 16
  %v2284 = vrot.slane %v2282, 3
  %v2285 = vor.u32 %v2281, %v2284
  %v2286 = vsel %vm1615, %v2209, %v2285
  %v2288 = vshrl.u32 %v1462, 16
  %v2290 = vrot.slane %v2288, 2
  %v2291 = vshll.u32 %v1462, 16
  %v2293 = vrot.slane %v2291, 3
  %v2294 = vor.u32 %v2290, %v2293
  %v2295 = vsel %vm1615, %v2218, %v2294
  %v2296 = vrot.slane %v1042, 2
  %v2297 = vrot.slane %v1038, 3
  %v2298 = vor.u32 %v2296, %v2297
  %v2299 = vsel %vm1615, %v2222, %v2298
  %v2301 = vshrl.u32 %v1049, 16
  %v2303 = vrot.slane %v2301, 2
  %v2304 = vshll.u32 %v1049, 16
  %v2306 = vrot.slane %v2304, 3
  %v2307 = vor.u32 %v2303, %v2306
  %v2308 = vsel %vm1615, %v2231, %v2307
  %v2310 = vshrl.u32 %v1093, 16
  %v2312 = vrot.slane %v2310, 2
  %v2313 = vshll.u32 %v1093, 16
  %v2315 = vrot.slane %v2313, 3
  %v2316 = vor.u32 %v2312, %v2315
  %v2317 = vsel %vm1615, %v2240, %v2316
  %v2319 = vshrl.u32 %v1135, 16
  %v2321 = vrot.slane %v2319, 2
  %v2322 = vshll.u32 %v1135, 16
  %v2324 = vrot.slane %v2322, 3
  %v2325 = vor.u32 %v2321, %v2324
  %v2326 = vsel %vm1615, %v2249, %v2325
  %v2328 = vshrl.u32 %v1180, 16
  %v2330 = vrot.slane %v2328, 2
  %v2331 = vshll.u32 %v1180, 16
  %v2333 = vrot.slane %v2331, 3
  %v2334 = vor.u32 %v2330, %v2333
  %v2335 = vsel %vm1615, %v2258, %v2334
  %v2337 = vshrl.u32 %v1225, 16
  %v2339 = vrot.slane %v2337, 2
  %v2340 = vshll.u32 %v1225, 16
  %v2342 = vrot.slane %v2340, 3
  %v2343 = vor.u32 %v2339, %v2342
  %v2344 = vsel %vm1615, %v2267, %v2343
  %v2346 = vshrl.u32 %v1315, 16
  %v2348 = vrot.slane %v2346, 2
  %v2349 = vshll.u32 %v1315, 16
  %v2351 = vrot.slane %v2349, 3
  %v2352 = vor.u32 %v2348, %v2351
  %v2353 = vsel %vm1615, %v2276, %v2352
  %v2355 = vshrl.u32 %v1414, 16
  %v2357 = vrot.slane %v2355, 2
  %v2358 = vshll.u32 %v1414, 16
  %v2360 = vrot.slane %v2358, 3
  %v2361 = vor.u32 %v2357, %v2360
  %v2362 = vsel %vm1615, %v2285, %v2361
  %v2364 = vshrl.u32 %v1464, 16
  %v2366 = vrot.slane %v2364, 2
  %v2367 = vshll.u32 %v1464, 16
  %v2369 = vrot.slane %v2367, 3
  %v2370 = vor.u32 %v2366, %v2369
  %v2371 = vsel %vm1615, %v2294, %v2370
  %v2372 = vrot.slane %v1050, 2
  %v2373 = vrot.slane %v1046, 3
  %v2374 = vor.u32 %v2372, %v2373
  %v2375 = vsel %vm1615, %v2298, %v2374
  %v2377 = vshrl.u32 %v1057, 16
  %v2379 = vrot.slane %v2377, 2
  %v2380 = vshll.u32 %v1057, 16
  %v2382 = vrot.slane %v2380, 3
  %v2383 = vor.u32 %v2379, %v2382
  %v2384 = vsel %vm1615, %v2307, %v2383
  %v2386 = vshrl.u32 %v1095, 16
  %v2388 = vrot.slane %v2386, 2
  %v2389 = vshll.u32 %v1095, 16
  %v2391 = vrot.slane %v2389, 3
  %v2392 = vor.u32 %v2388, %v2391
  %v2393 = vsel %vm1615, %v2316, %v2392
  %v2395 = vshrl.u32 %v1137, 16
  %v2397 = vrot.slane %v2395, 2
  %v2398 = vshll.u32 %v1137, 16
  %v2400 = vrot.slane %v2398, 3
  %v2401 = vor.u32 %v2397, %v2400
  %v2402 = vsel %vm1615, %v2325, %v2401
  %v2404 = vshrl.u32 %v1184, 16
  %v2406 = vrot.slane %v2404, 2
  %v2407 = vshll.u32 %v1184, 16
  %v2409 = vrot.slane %v2407, 3
  %v2410 = vor.u32 %v2406, %v2409
  %v2411 = vsel %vm1615, %v2334, %v2410
  %v2413 = vshrl.u32 %v1227, 16
  %v2415 = vrot.slane %v2413, 2
  %v2416 = vshll.u32 %v1227, 16
  %v2418 = vrot.slane %v2416, 3
  %v2419 = vor.u32 %v2415, %v2418
  %v2420 = vsel %vm1615, %v2343, %v2419
  %v2422 = vshrl.u32 %v1317, 16
  %v2424 = vrot.slane %v2422, 2
  %v2425 = vshll.u32 %v1317, 16
  %v2427 = vrot.slane %v2425, 3
  %v2428 = vor.u32 %v2424, %v2427
  %v2429 = vsel %vm1615, %v2352, %v2428
  %v2431 = vshrl.u32 %v1423, 16
  %v2433 = vrot.slane %v2431, 2
  %v2434 = vshll.u32 %v1423, 16
  %v2436 = vrot.slane %v2434, 3
  %v2437 = vor.u32 %v2433, %v2436
  %v2438 = vsel %vm1615, %v2361, %v2437
  %v2440 = vshrl.u32 %v1466, 16
  %v2442 = vrot.slane %v2440, 2
  %v2443 = vshll.u32 %v1466, 16
  %v2445 = vrot.slane %v2443, 3
  %v2446 = vor.u32 %v2442, %v2445
  %v2447 = vsel %vm1615, %v2370, %v2446
  %v2448 = vrot.slane %v1058, 2
  %v2449 = vrot.slane %v1054, 3
  %v2450 = vor.u32 %v2448, %v2449
  %v2451 = vsel %vm1615, %v2374, %v2450
  %v2453 = vshrl.u32 %v1065, 16
  %v2455 = vrot.slane %v2453, 2
  %v2456 = vshll.u32 %v1065, 16
  %v2458 = vrot.slane %v2456, 3
  %v2459 = vor.u32 %v2455, %v2458
  %v2460 = vsel %vm1615, %v2383, %v2459
  %v2462 = vshrl.u32 %v1097, 16
  %v2464 = vrot.slane %v2462, 2
  %v2465 = vshll.u32 %v1097, 16
  %v2467 = vrot.slane %v2465, 3
  %v2468 = vor.u32 %v2464, %v2467
  %v2469 = vsel %vm1615, %v2392, %v2468
  %v2471 = vshrl.u32 %v1139, 16
  %v2473 = vrot.slane %v2471, 2
  %v2474 = vshll.u32 %v1139, 16
  %v2476 = vrot.slane %v2474, 3
  %v2477 = vor.u32 %v2473, %v2476
  %v2478 = vsel %vm1615, %v2401, %v2477
  %v2480 = vshrl.u32 %v1193, 16
  %v2482 = vrot.slane %v2480, 2
  %v2483 = vshll.u32 %v1193, 16
  %v2485 = vrot.slane %v2483, 3
  %v2486 = vor.u32 %v2482, %v2485
  %v2487 = vsel %vm1615, %v2410, %v2486
  %v2489 = vshrl.u32 %v1229, 16
  %v2491 = vrot.slane %v2489, 2
  %v2492 = vshll.u32 %v1229, 16
  %v2494 = vrot.slane %v2492, 3
  %v2495 = vor.u32 %v2491, %v2494
  %v2496 = vsel %vm1615, %v2419, %v2495
  %v2498 = vshrl.u32 %v1319, 16
  %v2500 = vrot.slane %v2498, 2
  %v2501 = vshll.u32 %v1319, 16
  %v2503 = vrot.slane %v2501, 3
  %v2504 = vor.u32 %v2500, %v2503
  %v2505 = vsel %vm1615, %v2428, %v2504
  %v2507 = vshrl.u32 %v1432, 16
  %v2509 = vrot.slane %v2507, 2
  %v2510 = vshll.u32 %v1432, 16
  %v2512 = vrot.slane %v2510, 3
  %v2513 = vor.u32 %v2509, %v2512
  %v2514 = vsel %vm1615, %v2437, %v2513
  %v2516 = vshrl.u32 %v1468, 16
  %v2518 = vrot.slane %v2516, 2
  %v2519 = vshll.u32 %v1468, 16
  %v2521 = vrot.slane %v2519, 3
  %v2522 = vor.u32 %v2518, %v2521
  %v2523 = vsel %vm1615, %v2446, %v2522
  %v2524 = vrot.slane %v1066, 2
  %v2525 = vrot.slane %v1062, 3
  %v2526 = vor.u32 %v2524, %v2525
  %v2527 = vsel %vm1615, %v2450, %v2526
  %v2529 = vshrl.u32 %v1068, 16
  %v2531 = vrot.slane %v2529, 2
  %v2532 = vshll.u32 %v1068, 16
  %v2534 = vrot.slane %v2532, 3
  %v2535 = vor.u32 %v2531, %v2534
  %v2536 = vsel %vm1615, %v2459, %v2535
  %v2538 = vshrl.u32 %v1096, 16
  %v2540 = vrot.slane %v2538, 2
  %v2541 = vshll.u32 %v1096, 16
  %v2543 = vrot.slane %v2541, 3
  %v2544 = vor.u32 %v2540, %v2543
  %v2545 = vsel %vm1615, %v2468, %v2544
  %v2547 = vshrl.u32 %v1138, 16
  %v2549 = vrot.slane %v2547, 2
  %v2550 = vshll.u32 %v1138, 16
  %v2552 = vrot.slane %v2550, 3
  %v2553 = vor.u32 %v2549, %v2552
  %v2554 = vsel %vm1615, %v2477, %v2553
  %v2556 = vshrl.u32 %v1202, 16
  %v2558 = vrot.slane %v2556, 2
  %v2559 = vshll.u32 %v1202, 16
  %v2561 = vrot.slane %v2559, 3
  %v2562 = vor.u32 %v2558, %v2561
  %v2563 = vsel %vm1615, %v2486, %v2562
  %v2565 = vshrl.u32 %v1231, 16
  %v2567 = vrot.slane %v2565, 2
  %v2568 = vshll.u32 %v1231, 16
  %v2570 = vrot.slane %v2568, 3
  %v2571 = vor.u32 %v2567, %v2570
  %v2572 = vsel %vm1615, %v2495, %v2571
  %v2574 = vshrl.u32 %v1321, 16
  %v2576 = vrot.slane %v2574, 2
  %v2577 = vshll.u32 %v1321, 16
  %v2579 = vrot.slane %v2577, 3
  %v2580 = vor.u32 %v2576, %v2579
  %v2581 = vsel %vm1615, %v2504, %v2580
  %v2583 = vshrl.u32 %v1441, 16
  %v2585 = vrot.slane %v2583, 2
  %v2586 = vshll.u32 %v1441, 16
  %v2588 = vrot.slane %v2586, 3
  %v2589 = vor.u32 %v2585, %v2588
  %v2590 = vsel %vm1615, %v2513, %v2589
  %v2592 = vshrl.u32 %v1470, 16
  %v2594 = vrot.slane %v2592, 2
  %v2595 = vshll.u32 %v1470, 16
  %v2597 = vrot.slane %v2595, 3
  %v2598 = vor.u32 %v2594, %v2597
  %v2599 = vsel %vm1615, %v2522, %v2598
  %v2861 = vunpack.c.l.b16 %v1471
  %v2862 = vunpack.c.l.b16 %v1472
  %v2863 = vunpack.c.l.b16 %v1473
  %v2864 = vunpack.c.l.b16 %v1474
  %v2865 = vunpack.c.l.b16 %v1475
  %v2866 = vunpack.c.l.b16 %v1476
  %v2867 = vunpack.c.l.b16 %v1477
  %v2868 = vunpack.c.l.b16 %v1478
  %v2869 = vunpack.c.l.b16 %v1479
  %v2870 = vunpack.c.l.b16 %v1480
  %v2871 = vunpack.c.l.b16 %v1481
  %v2872 = vunpack.c.l.b16 %v1482
  %v2873 = vunpack.c.l.b16 %v1483
  %v2874 = vunpack.c.l.b16 %v1484
  %v2875 = vunpack.c.l.b16 %v1485
  %v2876 = vunpack.c.l.b16 %v1486
  %v2877 = vunpack.c.l.b16 %v1487
  %v2878 = vunpack.c.l.b16 %v1488
  %v2879 = vunpack.c.l.b16 %v1489
  %v2880 = vunpack.c.l.b16 %v1490
  %v2881 = vunpack.c.l.b16 %v1491
  %v2882 = vunpack.c.l.b16 %v1492
  %v2883 = vunpack.c.l.b16 %v1493
  %v2884 = vunpack.c.l.b16 %v1494
  %v2885 = vunpack.c.l.b16 %v1495
  %v2886 = vunpack.c.l.b16 %v1496
  %v2887 = vunpack.c.l.b16 %v1497
  %v2888 = vunpack.c.l.b16 %v1498
  %v2889 = vunpack.c.l.b16 %v1499
  %v2890 = vunpack.c.l.b16 %v1500
  %v2891 = vunpack.c.l.b16 %v1501
  %v2892 = vunpack.c.l.b16 %v1502
  %v2893 = vunpack.c.l.b16 %v1503
  %v2894 = vunpack.c.l.b16 %v1504
  %v2895 = vunpack.c.l.b16 %v1505
  %v2896 = vunpack.c.l.b16 %v1506
  %v2897 = vunpack.c.l.b16 %v1507
  %v2898 = vunpack.c.l.b16 %v1508
  %v2899 = vunpack.c.l.b16 %v1509
  %v2900 = vunpack.c.l.b16 %v1510
  %v2901 = vunpack.c.l.b16 %v1511
  %v2902 = vunpack.c.l.b16 %v1512
  %v2903 = vunpack.c.l.b16 %v1513
  %v2904 = vunpack.c.l.b16 %v1514
  %v2905 = vunpack.c.l.b16 %v1515
  %v2906 = vunpack.c.l.b16 %v1516
  %v2907 = vunpack.c.l.b16 %v1517
  %v2908 = vunpack.c.l.b16 %v1518
  %v2909 = vunpack.c.l.b16 %v1519
  %v2910 = vunpack.c.l.b16 %v1520
  %v2911 = vunpack.c.l.b16 %v1521
  %v2912 = vunpack.c.l.b16 %v1522
  %v2913 = vunpack.c.l.b16 %v1523
  %v2914 = vunpack.c.l.b16 %v1524
  %v2915 = vunpack.c.l.b16 %v1525
  %v2916 = vunpack.c.l.b16 %v1526
  %v2917 = vunpack.c.l.b16 %v1527
  %v2918 = vunpack.c.l.b16 %v1528
  %v2919 = vunpack.c.l.b16 %v1529
  %v2920 = vunpack.c.l.b16 %v1530
  %v2921 = vunpack.c.l.b16 %v1531
  %v2922 = vunpack.c.l.b16 %v1532
  %v2923 = vunpack.c.l.b16 %v1533
  %v2924 = vunpack.c.l.b16 %v1534
  %v2925 = vunpack.c.l.b16 %v1535
  %v2926 = vunpack.c.l.b16 %v1536
  %v2927 = vunpack.c.l.b16 %v1537
  %v2928 = vunpack.c.l.b16 %v1538
  %v2929 = vunpack.c.l.b16 %v1539
  %v2930 = vunpack.c.l.b16 %v1540
  %v2931 = vunpack.c.l.b16 %v1541
  %v2932 = vunpack.c.l.b16 %v1542
  %v2933 = vunpack.c.l.b16 %v1543
  %v2934 = vunpack.c.l.b16 %v1544
  %v2935 = vunpack.c.l.b16 %v1545
  %v2936 = vunpack.c.l.b16 %v1546
  %v2937 = vunpack.c.l.b16 %v1547
  %v2938 = vunpack.c.l.b16 %v1548
  %v2939 = vunpack.c.l.b16 %v1549
  %v2940 = vunpack.c.l.b16 %v1550
  %v2941 = vunpack.c.l.b16 %v1551
  %v2942 = vunpack.c.l.b16 %v1552
  %v2943 = vunpack.c.l.b16 %v1553
  %v2944 = vunpack.c.l.b16 %v1554
  %v2945 = vunpack.c.l.b16 %v1555
  %v2946 = vunpack.c.l.b16 %v1556
  %v2947 = vunpack.c.l.b16 %v1557
  %v2948 = vunpack.c.l.b16 %v1558
  %v2949 = vunpack.c.l.b16 %v1559
  %v2950 = vunpack.c.l.b16 %v1560
  %v2951 = vunpack.c.l.b16 %v1561
  %v2952 = vunpack.c.l.b16 %v1562
  %v2953 = vunpack.c.l.b16 %v1563
  %v2954 = vunpack.c.l.b16 %v1564
  %v2955 = vunpack.c.l.b16 %v1565
  %v2956 = vunpack.c.l.b16 %v1566
  %v2957 = vunpack.c.l.b16 %v1567
  %v2958 = vunpack.c.l.b16 %v1568
  %v2959 = vunpack.c.l.b16 %v1569
  %v2960 = vunpack.c.l.b16 %v1570
  %v2961 = vunpack.c.l.b16 %v1571
  %v2962 = vunpack.c.l.b16 %v1572
  %v2963 = vunpack.c.l.b16 %v1573
  %v2964 = vunpack.c.l.b16 %v1574
  %v2965 = vunpack.c.l.b16 %v1575
  %v2966 = vunpack.c.l.b16 %v1576
  %v2967 = vunpack.c.l.b16 %v1577
  %v2968 = vunpack.c.l.b16 %v1578
  %v2969 = vunpack.c.l.b16 %v1579
  %v2970 = vunpack.c.l.b16 %v1580
  %v2971 = vunpack.c.l.b16 %v1581
  %v2972 = vunpack.c.l.b16 %v1582
  %v2973 = vunpack.c.l.b16 %v1583
  %v2974 = vunpack.c.l.b16 %v1584
  %v2975 = vunpack.c.l.b16 %v1585
  %v2976 = vunpack.c.l.b16 %v1586
  %v2977 = vunpack.c.l.b16 %v1587
  %v2978 = vunpack.c.l.b16 %v1588
  %v2979 = vunpack.c.l.b16 %v1589
  %v2980 = vunpack.c.l.b16 %v1590
  %v2981 = vunpack.c.l.b16 %v1591
  %v2982 = vunpack.c.l.b16 %v1592
  %v2983 = vunpack.c.l.b16 %v1593
  %v2984 = vunpack.c.l.b16 %v1594
  %v2985 = vunpack.c.l.b16 %v1595
  %v2986 = vunpack.c.l.b16 %v1596
  %v2987 = vunpack.c.l.b16 %v1597
  %v2988 = vunpack.c.l.b16 %v1598
  %v2989 = vunpack.c.l.b16 %v1599
  %v2990 = vunpack.c.l.b16 %v1600
  %v2991 = vunpack.c.l.b16 %v1601
  %v2992 = vunpack.c.l.b16 %v1602
  %v2993 = vunpack.c.l.b16 %v1603
  %v2994 = vunpack.c.l.b16 %v1604
  %v2995 = vunpack.c.l.b16 %v1605
  %v2996 = vunpack.c.l.b16 %v1606
  %v2997 = vunpack.c.l.b16 %v1607
  %v2998 = vunpack.c.l.b16 %v1608
  %v2999 = vunpack.c.l.b16 %v1609
  %v3000 = vunpack.c.l.b16 %v1610
  %v3001 = vunpack.c.l.b16 %v1611
  %v3002 = vunpack.c.l.b16 %v1612
  %v3003 = vunpack.c.l.b16 %v1613
  %v3004 = vunpack.c.l.b16 %v1614
  %v3005 = vpack.c.b16 %v2862, %v2861
  %v3006 = vpack.c.b16 %v2864, %v2863
  %v3007 = vpack.c.b16 %v2866, %v2865
  %v3008 = vpack.c.b16 %v2868, %v2867
  %v3009 = vpack.c.b16 %v2870, %v2869
  %v3010 = vpack.c.b16 %v2872, %v2871
  %v3011 = vpack.c.b16 %v2874, %v2873
  %v3012 = vpack.c.b16 %v2876, %v2875
  %v3013 = vpack.c.b16 %v2878, %v2877
  %v3014 = vpack.c.b16 %v2880, %v2879
  %v3015 = vpack.c.b16 %v2882, %v2881
  %v3016 = vpack.c.b16 %v2884, %v2883
  %v3017 = vpack.c.b16 %v2886, %v2885
  %v3018 = vpack.c.b16 %v2888, %v2887
  %v3019 = vpack.c.b16 %v2890, %v2889
  %v3020 = vpack.c.b16 %v2892, %v2891
  %v3021 = vpack.c.b16 %v2894, %v2893
  %v3022 = vpack.c.b16 %v2896, %v2895
  %v3023 = vpack.c.b16 %v2898, %v2897
  %v3024 = vpack.c.b16 %v2900, %v2899
  %v3025 = vpack.c.b16 %v2902, %v2901
  %v3026 = vpack.c.b16 %v2904, %v2903
  %v3027 = vpack.c.b16 %v2906, %v2905
  %v3028 = vpack.c.b16 %v2908, %v2907
  %v3029 = vpack.c.b16 %v2910, %v2909
  %v3030 = vpack.c.b16 %v2912, %v2911
  %v3031 = vpack.c.b16 %v2914, %v2913
  %v3032 = vpack.c.b16 %v2916, %v2915
  %v3033 = vpack.c.b16 %v2918, %v2917
  %v3034 = vpack.c.b16 %v2920, %v2919
  %v3035 = vpack.c.b16 %v2922, %v2921
  %v3036 = vpack.c.b16 %v2924, %v2923
  %v3037 = vpack.c.b16 %v2926, %v2925
  %v3038 = vpack.c.b16 %v2928, %v2927
  %v3039 = vpack.c.b16 %v2930, %v2929
  %v3040 = vpack.c.b16 %v2932, %v2931
  %v3041 = vpack.c.b16 %v2934, %v2933
  %v3042 = vpack.c.b16 %v2936, %v2935
  %v3043 = vpack.c.b16 %v2938, %v2937
  %v3044 = vpack.c.b16 %v2940, %v2939
  %v3045 = vpack.c.b16 %v2942, %v2941
  %v3046 = vpack.c.b16 %v2944, %v2943
  %v3047 = vpack.c.b16 %v2946, %v2945
  %v3048 = vpack.c.b16 %v2948, %v2947
  %v3049 = vpack.c.b16 %v2950, %v2949
  %v3050 = vpack.c.b16 %v2952, %v2951
  %v3051 = vpack.c.b16 %v2954, %v2953
  %v3052 = vpack.c.b16 %v2956, %v2955
  %v3053 = vpack.c.b16 %v2958, %v2957
  %v3054 = vpack.c.b16 %v2960, %v2959
  %v3055 = vpack.c.b16 %v2962, %v2961
  %v3056 = vpack.c.b16 %v2964, %v2963
  %v3057 = vpack.c.b16 %v2966, %v2965
  %v3058 = vpack.c.b16 %v2968, %v2967
  %v3059 = vpack.c.b16 %v2970, %v2969
  %v3060 = vpack.c.b16 %v2972, %v2971
  %v3061 = vpack.c.b16 %v2974, %v2973
  %v3062 = vpack.c.b16 %v2976, %v2975
  %v3063 = vpack.c.b16 %v2978, %v2977
  %v3064 = vpack.c.b16 %v2980, %v2979
  %v3065 = vpack.c.b16 %v2982, %v2981
  %v3066 = vpack.c.b16 %v2984, %v2983
  %v3067 = vpack.c.b16 %v2986, %v2985
  %v3068 = vpack.c.b16 %v2988, %v2987
  %v3069 = vpack.c.b16 %v2990, %v2989
  %v3070 = vpack.c.b16 %v2992, %v2991
  %v3071 = vpack.c.b16 %v2994, %v2993
  %v3072 = vpack.c.b16 %v2996, %v2995
  %v3073 = vpack.c.b16 %v2998, %v2997
  %v3074 = vpack.c.b16 %v3000, %v2999
  %v3075 = vpack.c.b16 %v3002, %v3001
  %v3076 = vpack.c.b16 %v3004, %v3003
  %3149 = vmatprep.subr.bf16.mxu0 0
  %3150 = vmatpush1.bf16.msra.mxu0 %v3012
  %3151 = vmatprep.subr.bf16.mxu0 0
  %3152 = vmatpush1.bf16.msra.mxu0 %v3011
  %3153 = vmatprep.subr.bf16.mxu0 0
  %3154 = vmatpush1.bf16.msra.mxu0 %v3010
  %3155 = vmatprep.subr.bf16.mxu0 0
  %3156 = vmatpush1.bf16.msra.mxu0 %v3009
  %3157 = vmatprep.subr.bf16.mxu0 0
  %3158 = vmatpush1.bf16.msra.mxu0 %v3008
  %3159 = vmatprep.subr.bf16.mxu0 0
  %3160 = vmatpush1.bf16.msra.mxu0 %v3007
  %3161 = vmatprep.subr.bf16.mxu0 0
  %3162 = vmatpush1.bf16.msra.mxu0 %v3006
  %3163 = vmatprep.subr.bf16.mxu0 0
  %3164 = vmatpush1.bf16.msra.mxu0 %v3005
  %3165 = vmatprep.subr.bf16.mxu0 0
  %3166 = vmatpush2.bf16.msra.mxu0 %v3020
  %3167 = vmatprep.subr.bf16.mxu0 0
  %3168 = vmatpush2.bf16.msra.mxu0 %v3019
  %3169 = vmatprep.subr.bf16.mxu0 0
  %3170 = vmatpush2.bf16.msra.mxu0 %v3018
  %3171 = vmatprep.subr.bf16.mxu0 0
  %3172 = vmatpush2.bf16.msra.mxu0 %v3017
  %3173 = vmatprep.subr.bf16.mxu0 0
  %3174 = vmatpush2.bf16.msra.mxu0 %v3016
  %3175 = vmatprep.subr.bf16.mxu0 0
  %3176 = vmatpush2.bf16.msra.mxu0 %v3015
  %3177 = vmatprep.subr.bf16.mxu0 0
  %3178 = vmatpush2.bf16.msra.mxu0 %v3014
  %3179 = vmatprep.subr.bf16.mxu0 0
  %3180 = vmatpush2.bf16.msra.mxu0 %v3013
  %3181 = vmatprep.mubr.bf16.mxu0 %v1644
  %3182 = vmatmul.mubr.bf16.gmra.mxu0 %v1627
  %v3183 = vpop.f32.mrf.mxu0
  %v3184 = vadd.f32 0.0, %v3183
  %v3185 = vpop.f32.mrf.mxu0
  %v3186 = vpop.f32.mrf.mxu0
  %v3187 = vadd.f32 0.0, %v3186
  %v3188 = vpop.f32.mrf.mxu0
  %3189 = vmatprep.mubr.bf16.mxu0 %v1776
  %3190 = vmatmul.mubr.bf16.gmra.mxu0 %v1767
  %v3191 = vpop.f32.mrf.mxu0
  %v3192 = vadd.f32 0.0, %v3191
  %v3193 = vpop.f32.mrf.mxu0
  %v3194 = vpop.f32.mrf.mxu0
  %v3195 = vadd.f32 0.0, %v3194
  %v3196 = vpop.f32.mrf.mxu0
  %3197 = vmatprep.mubr.bf16.mxu0 %v1852
  %3198 = vmatmul.mubr.bf16.gmra.mxu0 %v1843
  %v3199 = vpop.f32.mrf.mxu0
  %v3200 = vadd.f32 0.0, %v3199
  %v3201 = vpop.f32.mrf.mxu0
  %v3202 = vpop.f32.mrf.mxu0
  %v3203 = vadd.f32 0.0, %v3202
  %v3204 = vpop.f32.mrf.mxu0
  %3205 = vmatprep.mubr.bf16.mxu0 %v1928
  %3206 = vmatmul.mubr.bf16.gmra.mxu0 %v1919
  %v3207 = vpop.f32.mrf.mxu0
  %v3208 = vadd.f32 0.0, %v3207
  %v3209 = vpop.f32.mrf.mxu0
  %v3210 = vpop.f32.mrf.mxu0
  %v3211 = vadd.f32 0.0, %v3210
  %v3212 = vpop.f32.mrf.mxu0
  %3213 = vmatprep.mubr.bf16.mxu0 %v2004
  %3214 = vmatmul.mubr.bf16.gmra.mxu0 %v1995
  %v3215 = vpop.f32.mrf.mxu0
  %v3216 = vadd.f32 0.0, %v3215
  %v3217 = vpop.f32.mrf.mxu0
  %v3218 = vpop.f32.mrf.mxu0
  %v3219 = vadd.f32 0.0, %v3218
  %v3220 = vpop.f32.mrf.mxu0
  %3221 = vmatprep.mubr.bf16.mxu0 %v2080
  %3222 = vmatmul.mubr.bf16.gmra.mxu0 %v2071
  %v3223 = vpop.f32.mrf.mxu0
  %v3224 = vadd.f32 0.0, %v3223
  %v3225 = vpop.f32.mrf.mxu0
  %v3226 = vpop.f32.mrf.mxu0
  %v3227 = vadd.f32 0.0, %v3226
  %v3228 = vpop.f32.mrf.mxu0
  %3229 = vmatprep.mubr.bf16.mxu0 %v2156
  %3230 = vmatmul.mubr.bf16.gmra.mxu0 %v2147
  %v3231 = vpop.f32.mrf.mxu0
  %v3232 = vadd.f32 0.0, %v3231
  %v3233 = vpop.f32.mrf.mxu0
  %v3234 = vpop.f32.mrf.mxu0
  %v3235 = vadd.f32 0.0, %v3234
  %v3236 = vpop.f32.mrf.mxu0
  %3237 = vmatprep.mubr.bf16.mxu0 %v2232
  %3238 = vmatmul.mubr.bf16.gmra.mxu0 %v2223
  %v3239 = vpop.f32.mrf.mxu0
  %v3240 = vadd.f32 0.0, %v3239
  %v3241 = vpop.f32.mrf.mxu0
  %v3242 = vpop.f32.mrf.mxu0
  %v3243 = vadd.f32 0.0, %v3242
  %v3244 = vpop.f32.mrf.mxu0
  %3245 = vmatprep.mubr.bf16.mxu0 %v2308
  %3246 = vmatmul.mubr.bf16.gmra.mxu0 %v2299
  %v3247 = vpop.f32.mrf.mxu0
  %v3248 = vadd.f32 0.0, %v3247
  %v3249 = vpop.f32.mrf.mxu0
  %v3250 = vpop.f32.mrf.mxu0
  %v3251 = vadd.f32 0.0, %v3250
  %v3252 = vpop.f32.mrf.mxu0
  %3253 = vmatprep.mubr.bf16.mxu0 %v2384
  %3254 = vmatmul.mubr.bf16.gmra.mxu0 %v2375
  %v3255 = vpop.f32.mrf.mxu0
  %v3256 = vadd.f32 0.0, %v3255
  %v3257 = vpop.f32.mrf.mxu0
  %v3258 = vpop.f32.mrf.mxu0
  %v3259 = vadd.f32 0.0, %v3258
  %v3260 = vpop.f32.mrf.mxu0
  %3261 = vmatprep.mubr.bf16.mxu0 %v2460
  %3262 = vmatmul.mubr.bf16.gmra.mxu0 %v2451
  %v3263 = vpop.f32.mrf.mxu0
  %v3264 = vadd.f32 0.0, %v3263
  %v3265 = vpop.f32.mrf.mxu0
  %v3266 = vpop.f32.mrf.mxu0
  %v3267 = vadd.f32 0.0, %v3266
  %v3268 = vpop.f32.mrf.mxu0
  %3269 = vmatprep.mubr.bf16.mxu0 %v2536
  %3270 = vmatmul.mubr.bf16.gmra.mxu0 %v2527
  %v3271 = vpop.f32.mrf.mxu0
  %v3272 = vadd.f32 0.0, %v3271
  %v3273 = vpop.f32.mrf.mxu0
  %v3274 = vpop.f32.mrf.mxu0
  %v3275 = vadd.f32 0.0, %v3274
  %v3276 = vpop.f32.mrf.mxu0
  %3277 = vmatprep.mubr.bf16.mxu0 %v2535
  %3278 = vmatmul.mubr.bf16.gmra.mxu0 %v2526
  %v3279 = vpop.f32.mrf.mxu0
  %v3280 = vadd.f32 0.0, %v3279
  %v3281 = vpop.f32.mrf.mxu0
  %v3282 = vpop.f32.mrf.mxu0
  %v3283 = vpop.f32.mrf.mxu0
  %3284 = vdwg.mxu0
  %3285 = vmatprep.subr.bf16.mxu0 0
  %3286 = vmatpush1.bf16.msra.mxu0 %v3028
  %3287 = vmatprep.subr.bf16.mxu0 0
  %3288 = vmatpush1.bf16.msra.mxu0 %v3027
  %3289 = vmatprep.subr.bf16.mxu0 0
  %3290 = vmatpush1.bf16.msra.mxu0 %v3026
  %3291 = vmatprep.subr.bf16.mxu0 0
  %3292 = vmatpush1.bf16.msra.mxu0 %v3025
  %3293 = vmatprep.subr.bf16.mxu0 0
  %3294 = vmatpush1.bf16.msra.mxu0 %v3024
  %3295 = vmatprep.subr.bf16.mxu0 0
  %3296 = vmatpush1.bf16.msra.mxu0 %v3023
  %3297 = vmatprep.subr.bf16.mxu0 0
  %3298 = vmatpush1.bf16.msra.mxu0 %v3022
  %3299 = vmatprep.subr.bf16.mxu0 0
  %3300 = vmatpush1.bf16.msra.mxu0 %v3021
  %3301 = vmatprep.subr.bf16.mxu0 0
  %3302 = vmatpush2.bf16.msra.mxu0 %v3036
  %3303 = vmatprep.subr.bf16.mxu0 0
  %3304 = vmatpush2.bf16.msra.mxu0 %v3035
  %3305 = vmatprep.subr.bf16.mxu0 0
  %3306 = vmatpush2.bf16.msra.mxu0 %v3034
  %3307 = vmatprep.subr.bf16.mxu0 0
  %3308 = vmatpush2.bf16.msra.mxu0 %v3033
  %3309 = vmatprep.subr.bf16.mxu0 0
  %3310 = vmatpush2.bf16.msra.mxu0 %v3032
  %3311 = vmatprep.subr.bf16.mxu0 0
  %3312 = vmatpush2.bf16.msra.mxu0 %v3031
  %3313 = vmatprep.subr.bf16.mxu0 0
  %3314 = vmatpush2.bf16.msra.mxu0 %v3030
  %3315 = vmatprep.subr.bf16.mxu0 0
  %3316 = vmatpush2.bf16.msra.mxu0 %v3029
  %3317 = vmatprep.mubr.bf16.mxu0 %v1678
  %3318 = vmatmul.mubr.bf16.gmra.mxu0 %v1661
  %v3319 = vpop.f32.mrf.mxu0
  %v3320 = vadd.f32 %v3184, %v3319
  %v3321 = vpop.f32.mrf.mxu0
  %v3322 = vpop.f32.mrf.mxu0
  %v3323 = vadd.f32 %v3187, %v3322
  %v3324 = vpop.f32.mrf.mxu0
  %3325 = vmatprep.mubr.bf16.mxu0 %v1794
  %3326 = vmatmul.mubr.bf16.gmra.mxu0 %v1785
  %v3327 = vpop.f32.mrf.mxu0
  %v3328 = vadd.f32 %v3192, %v3327
  %v3329 = vpop.f32.mrf.mxu0
  %v3330 = vpop.f32.mrf.mxu0
  %v3331 = vadd.f32 %v3195, %v3330
  %v3332 = vpop.f32.mrf.mxu0
  %3333 = vmatprep.mubr.bf16.mxu0 %v1870
  %3334 = vmatmul.mubr.bf16.gmra.mxu0 %v1861
  %v3335 = vpop.f32.mrf.mxu0
  %v3336 = vadd.f32 %v3200, %v3335
  %v3337 = vpop.f32.mrf.mxu0
  %v3338 = vpop.f32.mrf.mxu0
  %v3339 = vadd.f32 %v3203, %v3338
  %v3340 = vpop.f32.mrf.mxu0
  %3341 = vmatprep.mubr.bf16.mxu0 %v1946
  %3342 = vmatmul.mubr.bf16.gmra.mxu0 %v1937
  %v3343 = vpop.f32.mrf.mxu0
  %v3344 = vadd.f32 %v3208, %v3343
  %v3345 = vpop.f32.mrf.mxu0
  %v3346 = vpop.f32.mrf.mxu0
  %v3347 = vadd.f32 %v3211, %v3346
  %v3348 = vpop.f32.mrf.mxu0
  %3349 = vmatprep.mubr.bf16.mxu0 %v2022
  %3350 = vmatmul.mubr.bf16.gmra.mxu0 %v2013
  %v3351 = vpop.f32.mrf.mxu0
  %v3352 = vadd.f32 %v3216, %v3351
  %v3353 = vpop.f32.mrf.mxu0
  %v3354 = vpop.f32.mrf.mxu0
  %v3355 = vadd.f32 %v3219, %v3354
  %v3356 = vpop.f32.mrf.mxu0
  %3357 = vmatprep.mubr.bf16.mxu0 %v2098
  %3358 = vmatmul.mubr.bf16.gmra.mxu0 %v2089
  %v3359 = vpop.f32.mrf.mxu0
  %v3360 = vadd.f32 %v3224, %v3359
  %v3361 = vpop.f32.mrf.mxu0
  %v3362 = vpop.f32.mrf.mxu0
  %v3363 = vadd.f32 %v3227, %v3362
  %v3364 = vpop.f32.mrf.mxu0
  %3365 = vmatprep.mubr.bf16.mxu0 %v2174
  %3366 = vmatmul.mubr.bf16.gmra.mxu0 %v2165
  %v3367 = vpop.f32.mrf.mxu0
  %v3368 = vadd.f32 %v3232, %v3367
  %v3369 = vpop.f32.mrf.mxu0
  %v3370 = vpop.f32.mrf.mxu0
  %v3371 = vadd.f32 %v3235, %v3370
  %v3372 = vpop.f32.mrf.mxu0
  %3373 = vmatprep.mubr.bf16.mxu0 %v2250
  %3374 = vmatmul.mubr.bf16.gmra.mxu0 %v2241
  %v3375 = vpop.f32.mrf.mxu0
  %v3376 = vadd.f32 %v3240, %v3375
  %v3377 = vpop.f32.mrf.mxu0
  %v3378 = vpop.f32.mrf.mxu0
  %v3379 = vadd.f32 %v3243, %v3378
  %v3380 = vpop.f32.mrf.mxu0
  %3381 = vmatprep.mubr.bf16.mxu0 %v2326
  %3382 = vmatmul.mubr.bf16.gmra.mxu0 %v2317
  %v3383 = vpop.f32.mrf.mxu0
  %v3384 = vadd.f32 %v3248, %v3383
  %v3385 = vpop.f32.mrf.mxu0
  %v3386 = vpop.f32.mrf.mxu0
  %v3387 = vadd.f32 %v3251, %v3386
  %v3388 = vpop.f32.mrf.mxu0
  %3389 = vmatprep.mubr.bf16.mxu0 %v2402
  %3390 = vmatmul.mubr.bf16.gmra.mxu0 %v2393
  %v3391 = vpop.f32.mrf.mxu0
  %v3392 = vadd.f32 %v3256, %v3391
  %v3393 = vpop.f32.mrf.mxu0
  %v3394 = vpop.f32.mrf.mxu0
  %v3395 = vadd.f32 %v3259, %v3394
  %v3396 = vpop.f32.mrf.mxu0
  %3397 = vmatprep.mubr.bf16.mxu0 %v2478
  %3398 = vmatmul.mubr.bf16.gmra.mxu0 %v2469
  %v3399 = vpop.f32.mrf.mxu0
  %v3400 = vadd.f32 %v3264, %v3399
  %v3401 = vpop.f32.mrf.mxu0
  %v3402 = vpop.f32.mrf.mxu0
  %v3403 = vadd.f32 %v3267, %v3402
  %v3404 = vpop.f32.mrf.mxu0
  %3405 = vmatprep.mubr.bf16.mxu0 %v2554
  %3406 = vmatmul.mubr.bf16.gmra.mxu0 %v2545
  %v3407 = vpop.f32.mrf.mxu0
  %v3408 = vadd.f32 %v3272, %v3407
  %v3409 = vpop.f32.mrf.mxu0
  %v3410 = vpop.f32.mrf.mxu0
  %v3411 = vadd.f32 %v3275, %v3410
  %v3412 = vpop.f32.mrf.mxu0
  %3413 = vmatprep.mubr.bf16.mxu0 %v2553
  %3414 = vmatmul.mubr.bf16.gmra.mxu0 %v2544
  %v3415 = vpop.f32.mrf.mxu0
  %v3416 = vadd.f32 %v3280, %v3415
  %v3417 = vpop.f32.mrf.mxu0
  %v3418 = vpop.f32.mrf.mxu0
  %v3419 = vpop.f32.mrf.mxu0
  %3420 = vdwg.mxu0
  %3421 = vmatprep.subr.bf16.mxu0 0
  %3422 = vmatpush1.bf16.msra.mxu0 %v3044
  %3423 = vmatprep.subr.bf16.mxu0 0
  %3424 = vmatpush1.bf16.msra.mxu0 %v3043
  %3425 = vmatprep.subr.bf16.mxu0 0
  %3426 = vmatpush1.bf16.msra.mxu0 %v3042
  %3427 = vmatprep.subr.bf16.mxu0 0
  %3428 = vmatpush1.bf16.msra.mxu0 %v3041
  %3429 = vmatprep.subr.bf16.mxu0 0
  %3430 = vmatpush1.bf16.msra.mxu0 %v3040
  %3431 = vmatprep.subr.bf16.mxu0 0
  %3432 = vmatpush1.bf16.msra.mxu0 %v3039
  %3433 = vmatprep.subr.bf16.mxu0 0
  %3434 = vmatpush1.bf16.msra.mxu0 %v3038
  %3435 = vmatprep.subr.bf16.mxu0 0
  %3436 = vmatpush1.bf16.msra.mxu0 %v3037
  %3437 = vmatprep.subr.bf16.mxu0 0
  %3438 = vmatpush2.bf16.msra.mxu0 %v3052
  %3439 = vmatprep.subr.bf16.mxu0 0
  %3440 = vmatpush2.bf16.msra.mxu0 %v3051
  %3441 = vmatprep.subr.bf16.mxu0 0
  %3442 = vmatpush2.bf16.msra.mxu0 %v3050
  %3443 = vmatprep.subr.bf16.mxu0 0
  %3444 = vmatpush2.bf16.msra.mxu0 %v3049
  %3445 = vmatprep.subr.bf16.mxu0 0
  %3446 = vmatpush2.bf16.msra.mxu0 %v3048
  %3447 = vmatprep.subr.bf16.mxu0 0
  %3448 = vmatpush2.bf16.msra.mxu0 %v3047
  %3449 = vmatprep.subr.bf16.mxu0 0
  %3450 = vmatpush2.bf16.msra.mxu0 %v3046
  %3451 = vmatprep.subr.bf16.mxu0 0
  %3452 = vmatpush2.bf16.msra.mxu0 %v3045
  %3453 = vmatprep.mubr.bf16.mxu0 %v1712
  %3454 = vmatmul.mubr.bf16.gmra.mxu0 %v1695
  %v3455 = vpop.f32.mrf.mxu0
  %v3456 = vadd.f32 %v3320, %v3455
  %v3457 = vpop.f32.mrf.mxu0
  %v3458 = vpop.f32.mrf.mxu0
  %v3459 = vadd.f32 %v3323, %v3458
  %v3460 = vpop.f32.mrf.mxu0
  %3461 = vmatprep.mubr.bf16.mxu0 %v1812
  %3462 = vmatmul.mubr.bf16.gmra.mxu0 %v1803
  %v3463 = vpop.f32.mrf.mxu0
  %v3464 = vadd.f32 %v3328, %v3463
  %v3465 = vpop.f32.mrf.mxu0
  %v3466 = vpop.f32.mrf.mxu0
  %v3467 = vadd.f32 %v3331, %v3466
  %v3468 = vpop.f32.mrf.mxu0
  %3469 = vmatprep.mubr.bf16.mxu0 %v1888
  %3470 = vmatmul.mubr.bf16.gmra.mxu0 %v1879
  %v3471 = vpop.f32.mrf.mxu0
  %v3472 = vadd.f32 %v3336, %v3471
  %v3473 = vpop.f32.mrf.mxu0
  %v3474 = vpop.f32.mrf.mxu0
  %v3475 = vadd.f32 %v3339, %v3474
  %v3476 = vpop.f32.mrf.mxu0
  %3477 = vmatprep.mubr.bf16.mxu0 %v1964
  %3478 = vmatmul.mubr.bf16.gmra.mxu0 %v1955
  %v3479 = vpop.f32.mrf.mxu0
  %v3480 = vadd.f32 %v3344, %v3479
  %v3481 = vpop.f32.mrf.mxu0
  %v3482 = vpop.f32.mrf.mxu0
  %v3483 = vadd.f32 %v3347, %v3482
  %v3484 = vpop.f32.mrf.mxu0
  %3485 = vmatprep.mubr.bf16.mxu0 %v2040
  %3486 = vmatmul.mubr.bf16.gmra.mxu0 %v2031
  %v3487 = vpop.f32.mrf.mxu0
  %v3488 = vadd.f32 %v3352, %v3487
  %v3489 = vpop.f32.mrf.mxu0
  %v3490 = vpop.f32.mrf.mxu0
  %v3491 = vadd.f32 %v3355, %v3490
  %v3492 = vpop.f32.mrf.mxu0
  %3493 = vmatprep.mubr.bf16.mxu0 %v2116
  %3494 = vmatmul.mubr.bf16.gmra.mxu0 %v2107
  %v3495 = vpop.f32.mrf.mxu0
  %v3496 = vadd.f32 %v3360, %v3495
  %v3497 = vpop.f32.mrf.mxu0
  %v3498 = vpop.f32.mrf.mxu0
  %v3499 = vadd.f32 %v3363, %v3498
  %v3500 = vpop.f32.mrf.mxu0
  %3501 = vmatprep.mubr.bf16.mxu0 %v2192
  %3502 = vmatmul.mubr.bf16.gmra.mxu0 %v2183
  %v3503 = vpop.f32.mrf.mxu0
  %v3504 = vadd.f32 %v3368, %v3503
  %v3505 = vpop.f32.mrf.mxu0
  %v3506 = vpop.f32.mrf.mxu0
  %v3507 = vadd.f32 %v3371, %v3506
  %v3508 = vpop.f32.mrf.mxu0
  %3509 = vmatprep.mubr.bf16.mxu0 %v2268
  %3510 = vmatmul.mubr.bf16.gmra.mxu0 %v2259
  %v3511 = vpop.f32.mrf.mxu0
  %v3512 = vadd.f32 %v3376, %v3511
  %v3513 = vpop.f32.mrf.mxu0
  %v3514 = vpop.f32.mrf.mxu0
  %v3515 = vadd.f32 %v3379, %v3514
  %v3516 = vpop.f32.mrf.mxu0
  %3517 = vmatprep.mubr.bf16.mxu0 %v2344
  %3518 = vmatmul.mubr.bf16.gmra.mxu0 %v2335
  %v3519 = vpop.f32.mrf.mxu0
  %v3520 = vadd.f32 %v3384, %v3519
  %v3521 = vpop.f32.mrf.mxu0
  %v3522 = vpop.f32.mrf.mxu0
  %v3523 = vadd.f32 %v3387, %v3522
  %v3524 = vpop.f32.mrf.mxu0
  %3525 = vmatprep.mubr.bf16.mxu0 %v2420
  %3526 = vmatmul.mubr.bf16.gmra.mxu0 %v2411
  %v3527 = vpop.f32.mrf.mxu0
  %v3528 = vadd.f32 %v3392, %v3527
  %v3529 = vpop.f32.mrf.mxu0
  %v3530 = vpop.f32.mrf.mxu0
  %v3531 = vadd.f32 %v3395, %v3530
  %v3532 = vpop.f32.mrf.mxu0
  %3533 = vmatprep.mubr.bf16.mxu0 %v2496
  %3534 = vmatmul.mubr.bf16.gmra.mxu0 %v2487
  %v3535 = vpop.f32.mrf.mxu0
  %v3536 = vadd.f32 %v3400, %v3535
  %v3537 = vpop.f32.mrf.mxu0
  %v3538 = vpop.f32.mrf.mxu0
  %v3539 = vadd.f32 %v3403, %v3538
  %v3540 = vpop.f32.mrf.mxu0
  %3541 = vmatprep.mubr.bf16.mxu0 %v2572
  %3542 = vmatmul.mubr.bf16.gmra.mxu0 %v2563
  %v3543 = vpop.f32.mrf.mxu0
  %v3544 = vadd.f32 %v3408, %v3543
  %v3545 = vpop.f32.mrf.mxu0
  %v3546 = vpop.f32.mrf.mxu0
  %v3547 = vadd.f32 %v3411, %v3546
  %v3548 = vpop.f32.mrf.mxu0
  %3549 = vmatprep.mubr.bf16.mxu0 %v2571
  %3550 = vmatmul.mubr.bf16.gmra.mxu0 %v2562
  %v3551 = vpop.f32.mrf.mxu0
  %v3552 = vadd.f32 %v3416, %v3551
  %v3553 = vpop.f32.mrf.mxu0
  %v3554 = vpop.f32.mrf.mxu0
  %v3555 = vpop.f32.mrf.mxu0
  %3556 = vdwg.mxu0
  %3557 = vmatprep.subr.bf16.mxu0 0
  %3558 = vmatpush1.bf16.msra.mxu0 %v3060
  %3559 = vmatprep.subr.bf16.mxu0 0
  %3560 = vmatpush1.bf16.msra.mxu0 %v3059
  %3561 = vmatprep.subr.bf16.mxu0 0
  %3562 = vmatpush1.bf16.msra.mxu0 %v3058
  %3563 = vmatprep.subr.bf16.mxu0 0
  %3564 = vmatpush1.bf16.msra.mxu0 %v3057
  %3565 = vmatprep.subr.bf16.mxu0 0
  %3566 = vmatpush1.bf16.msra.mxu0 %v3056
  %3567 = vmatprep.subr.bf16.mxu0 0
  %3568 = vmatpush1.bf16.msra.mxu0 %v3055
  %3569 = vmatprep.subr.bf16.mxu0 0
  %3570 = vmatpush1.bf16.msra.mxu0 %v3054
  %3571 = vmatprep.subr.bf16.mxu0 0
  %3572 = vmatpush1.bf16.msra.mxu0 %v3053
  %3573 = vmatprep.subr.bf16.mxu0 0
  %3574 = vmatpush2.bf16.msra.mxu0 %v3068
  %3575 = vmatprep.subr.bf16.mxu0 0
  %3576 = vmatpush2.bf16.msra.mxu0 %v3067
  %3577 = vmatprep.subr.bf16.mxu0 0
  %3578 = vmatpush2.bf16.msra.mxu0 %v3066
  %3579 = vmatprep.subr.bf16.mxu0 0
  %3580 = vmatpush2.bf16.msra.mxu0 %v3065
  %3581 = vmatprep.subr.bf16.mxu0 0
  %3582 = vmatpush2.bf16.msra.mxu0 %v3064
  %3583 = vmatprep.subr.bf16.mxu0 0
  %3584 = vmatpush2.bf16.msra.mxu0 %v3063
  %3585 = vmatprep.subr.bf16.mxu0 0
  %3586 = vmatpush2.bf16.msra.mxu0 %v3062
  %3587 = vmatprep.subr.bf16.mxu0 0
  %3588 = vmatpush2.bf16.msra.mxu0 %v3061
  %3589 = vmatprep.mubr.bf16.mxu0 %v1746
  %3590 = vmatmul.mubr.bf16.gmra.mxu0 %v1729
  %v3591 = vpop.f32.mrf.mxu0
  %v3592 = vadd.f32 %v3456, %v3591
  %v3593 = vpop.f32.mrf.mxu0
  %v3594 = vpop.f32.mrf.mxu0
  %v3595 = vadd.f32 %v3459, %v3594
  %v3596 = vpop.f32.mrf.mxu0
  %3597 = vmatprep.mubr.bf16.mxu0 %v1830
  %3598 = vmatmul.mubr.bf16.gmra.mxu0 %v1821
  %v3599 = vpop.f32.mrf.mxu0
  %v3600 = vadd.f32 %v3464, %v3599
  %v3601 = vpop.f32.mrf.mxu0
  %v3602 = vpop.f32.mrf.mxu0
  %v3603 = vadd.f32 %v3467, %v3602
  %v3604 = vpop.f32.mrf.mxu0
  %3605 = vmatprep.mubr.bf16.mxu0 %v1906
  %3606 = vmatmul.mubr.bf16.gmra.mxu0 %v1897
  %v3607 = vpop.f32.mrf.mxu0
  %v3608 = vadd.f32 %v3472, %v3607
  %v3609 = vpop.f32.mrf.mxu0
  %v3610 = vpop.f32.mrf.mxu0
  %v3611 = vadd.f32 %v3475, %v3610
  %v3612 = vpop.f32.mrf.mxu0
  %3613 = vmatprep.mubr.bf16.mxu0 %v1982
  %3614 = vmatmul.mubr.bf16.gmra.mxu0 %v1973
  %v3615 = vpop.f32.mrf.mxu0
  %v3616 = vadd.f32 %v3480, %v3615
  %v3617 = vpop.f32.mrf.mxu0
  %v3618 = vpop.f32.mrf.mxu0
  %v3619 = vadd.f32 %v3483, %v3618
  %v3620 = vpop.f32.mrf.mxu0
  %3621 = vmatprep.mubr.bf16.mxu0 %v2058
  %3622 = vmatmul.mubr.bf16.gmra.mxu0 %v2049
  %v3623 = vpop.f32.mrf.mxu0
  %v3624 = vadd.f32 %v3488, %v3623
  %v3625 = vpop.f32.mrf.mxu0
  %v3626 = vpop.f32.mrf.mxu0
  %v3627 = vadd.f32 %v3491, %v3626
  %v3628 = vpop.f32.mrf.mxu0
  %3629 = vmatprep.mubr.bf16.mxu0 %v2134
  %3630 = vmatmul.mubr.bf16.gmra.mxu0 %v2125
  %v3631 = vpop.f32.mrf.mxu0
  %v3632 = vadd.f32 %v3496, %v3631
  %v3633 = vpop.f32.mrf.mxu0
  %v3634 = vpop.f32.mrf.mxu0
  %v3635 = vadd.f32 %v3499, %v3634
  %v3636 = vpop.f32.mrf.mxu0
  %3637 = vmatprep.mubr.bf16.mxu0 %v2210
  %3638 = vmatmul.mubr.bf16.gmra.mxu0 %v2201
  %v3639 = vpop.f32.mrf.mxu0
  %v3640 = vadd.f32 %v3504, %v3639
  %v3641 = vpop.f32.mrf.mxu0
  %v3642 = vpop.f32.mrf.mxu0
  %v3643 = vadd.f32 %v3507, %v3642
  %v3644 = vpop.f32.mrf.mxu0
  %3645 = vmatprep.mubr.bf16.mxu0 %v2286
  %3646 = vmatmul.mubr.bf16.gmra.mxu0 %v2277
  %v3647 = vpop.f32.mrf.mxu0
  %v3648 = vadd.f32 %v3512, %v3647
  %v3649 = vpop.f32.mrf.mxu0
  %v3650 = vpop.f32.mrf.mxu0
  %v3651 = vadd.f32 %v3515, %v3650
  %v3652 = vpop.f32.mrf.mxu0
  %3653 = vmatprep.mubr.bf16.mxu0 %v2362
  %3654 = vmatmul.mubr.bf16.gmra.mxu0 %v2353
  %v3655 = vpop.f32.mrf.mxu0
  %v3656 = vadd.f32 %v3520, %v3655
  %v3657 = vpop.f32.mrf.mxu0
  %v3658 = vpop.f32.mrf.mxu0
  %v3659 = vadd.f32 %v3523, %v3658
  %v3660 = vpop.f32.mrf.mxu0
  %3661 = vmatprep.mubr.bf16.mxu0 %v2438
  %3662 = vmatmul.mubr.bf16.gmra.mxu0 %v2429
  %v3663 = vpop.f32.mrf.mxu0
  %v3664 = vadd.f32 %v3528, %v3663
  %v3665 = vpop.f32.mrf.mxu0
  %v3666 = vpop.f32.mrf.mxu0
  %v3667 = vadd.f32 %v3531, %v3666
  %v3668 = vpop.f32.mrf.mxu0
  %3669 = vmatprep.mubr.bf16.mxu0 %v2514
  %3670 = vmatmul.mubr.bf16.gmra.mxu0 %v2505
  %v3671 = vpop.f32.mrf.mxu0
  %v3672 = vadd.f32 %v3536, %v3671
  %v3673 = vpop.f32.mrf.mxu0
  %v3674 = vpop.f32.mrf.mxu0
  %v3675 = vadd.f32 %v3539, %v3674
  %v3676 = vpop.f32.mrf.mxu0
  %3677 = vmatprep.mubr.bf16.mxu0 %v2590
  %3678 = vmatmul.mubr.bf16.gmra.mxu0 %v2581
  %v3679 = vpop.f32.mrf.mxu0
  %v3680 = vadd.f32 %v3544, %v3679
  %v3681 = vpop.f32.mrf.mxu0
  %v3682 = vpop.f32.mrf.mxu0
  %v3683 = vadd.f32 %v3547, %v3682
  %v3684 = vpop.f32.mrf.mxu0
  %3685 = vmatprep.mubr.bf16.mxu0 %v2589
  %3686 = vmatmul.mubr.bf16.gmra.mxu0 %v2580
  %v3687 = vpop.f32.mrf.mxu0
  %v3688 = vadd.f32 %v3552, %v3687
  %v3689 = vpop.f32.mrf.mxu0
  %v3690 = vpop.f32.mrf.mxu0
  %v3691 = vpop.f32.mrf.mxu0
  %3692 = vdwg.mxu0
  %3693 = vmatprep.subr.bf16.mxu0 0
  %3694 = vmatpush1.bf16.msra.mxu0 %v3076
  %3695 = vmatprep.subr.bf16.mxu0 0
  %3696 = vmatpush1.bf16.msra.mxu0 %v3075
  %3697 = vmatprep.subr.bf16.mxu0 0
  %3698 = vmatpush1.bf16.msra.mxu0 %v3074
  %3699 = vmatprep.subr.bf16.mxu0 0
  %3700 = vmatpush1.bf16.msra.mxu0 %v3073
  %3701 = vmatprep.subr.bf16.mxu0 0
  %3702 = vmatpush1.bf16.msra.mxu0 %v3072
  %3703 = vmatprep.subr.bf16.mxu0 0
  %3704 = vmatpush1.bf16.msra.mxu0 %v3071
  %3705 = vmatprep.subr.bf16.mxu0 0
  %3706 = vmatpush1.bf16.msra.mxu0 %v3070
  %3707 = vmatprep.subr.bf16.mxu0 0
  %3708 = vmatpush1.bf16.msra.mxu0 %v3069
  %3709 = vmatprep.subr.bf16.mxu0 0
  %3710 = vmatpush2.bf16.msra.mxu0 0
  %3711 = vmatprep.subr.bf16.mxu0 0
  %3712 = vmatpush2.bf16.msra.mxu0 0
  %3713 = vmatprep.subr.bf16.mxu0 0
  %3714 = vmatpush2.bf16.msra.mxu0 0
  %3715 = vmatprep.subr.bf16.mxu0 0
  %3716 = vmatpush2.bf16.msra.mxu0 0
  %3717 = vmatprep.subr.bf16.mxu0 0
  %3718 = vmatpush2.bf16.msra.mxu0 0
  %3719 = vmatprep.subr.bf16.mxu0 0
  %3720 = vmatpush2.bf16.msra.mxu0 0
  %3721 = vmatprep.subr.bf16.mxu0 0
  %3722 = vmatpush2.bf16.msra.mxu0 0
  %3723 = vmatprep.subr.bf16.mxu0 0
  %3724 = vmatpush2.bf16.msra.mxu0 0
  %3725 = vmatprep.mubr.bf16.mxu0 0
  %3726 = vmatmul.mubr.bf16.gmra.mxu0 %v1763
  %v3727 = vpop.f32.mrf.mxu0
  %v3728 = vadd.f32 %v3592, %v3727
  %v3729 = vpop.f32.mrf.mxu0
  %v3730 = vpop.f32.mrf.mxu0
  %v3731 = vadd.f32 %v3595, %v3730
  %v3732 = vpop.f32.mrf.mxu0
  %3733 = vmatprep.mubr.bf16.mxu0 0
  %3734 = vmatmul.mubr.bf16.gmra.mxu0 %v1839
  %v3735 = vpop.f32.mrf.mxu0
  %v3736 = vadd.f32 %v3600, %v3735
  %v3737 = vpop.f32.mrf.mxu0
  %v3738 = vpop.f32.mrf.mxu0
  %v3739 = vadd.f32 %v3603, %v3738
  %v3740 = vpop.f32.mrf.mxu0
  %3741 = vmatprep.mubr.bf16.mxu0 0
  %3742 = vmatmul.mubr.bf16.gmra.mxu0 %v1915
  %v3743 = vpop.f32.mrf.mxu0
  %v3744 = vadd.f32 %v3608, %v3743
  %v3745 = vpop.f32.mrf.mxu0
  %v3746 = vpop.f32.mrf.mxu0
  %v3747 = vadd.f32 %v3611, %v3746
  %v3748 = vpop.f32.mrf.mxu0
  %3749 = vmatprep.mubr.bf16.mxu0 0
  %3750 = vmatmul.mubr.bf16.gmra.mxu0 %v1991
  %v3751 = vpop.f32.mrf.mxu0
  %v3752 = vadd.f32 %v3616, %v3751
  %v3753 = vpop.f32.mrf.mxu0
  %v3754 = vpop.f32.mrf.mxu0
  %v3755 = vadd.f32 %v3619, %v3754
  %v3756 = vpop.f32.mrf.mxu0
  %3757 = vmatprep.mubr.bf16.mxu0 0
  %3758 = vmatmul.mubr.bf16.gmra.mxu0 %v2067
  %v3759 = vpop.f32.mrf.mxu0
  %v3760 = vadd.f32 %v3624, %v3759
  %v3761 = vpop.f32.mrf.mxu0
  %v3762 = vpop.f32.mrf.mxu0
  %v3763 = vadd.f32 %v3627, %v3762
  %v3764 = vpop.f32.mrf.mxu0
  %3765 = vmatprep.mubr.bf16.mxu0 0
  %3766 = vmatmul.mubr.bf16.gmra.mxu0 %v2143
  %v3767 = vpop.f32.mrf.mxu0
  %v3768 = vadd.f32 %v3632, %v3767
  %v3769 = vpop.f32.mrf.mxu0
  %v3770 = vpop.f32.mrf.mxu0
  %v3771 = vadd.f32 %v3635, %v3770
  %v3772 = vpop.f32.mrf.mxu0
  %3773 = vmatprep.mubr.bf16.mxu0 0
  %3774 = vmatmul.mubr.bf16.gmra.mxu0 %v2219
  %v3775 = vpop.f32.mrf.mxu0
  %v3776 = vadd.f32 %v3640, %v3775
  %v3777 = vpop.f32.mrf.mxu0
  %v3778 = vpop.f32.mrf.mxu0
  %v3779 = vadd.f32 %v3643, %v3778
  %v3780 = vpop.f32.mrf.mxu0
  %3781 = vmatprep.mubr.bf16.mxu0 0
  %3782 = vmatmul.mubr.bf16.gmra.mxu0 %v2295
  %v3783 = vpop.f32.mrf.mxu0
  %v3784 = vadd.f32 %v3648, %v3783
  %v3785 = vpop.f32.mrf.mxu0
  %v3786 = vpop.f32.mrf.mxu0
  %v3787 = vadd.f32 %v3651, %v3786
  %v3788 = vpop.f32.mrf.mxu0
  %3789 = vmatprep.mubr.bf16.mxu0 0
  %3790 = vmatmul.mubr.bf16.gmra.mxu0 %v2371
  %v3791 = vpop.f32.mrf.mxu0
  %v3792 = vadd.f32 %v3656, %v3791
  %v3793 = vpop.f32.mrf.mxu0
  %v3794 = vpop.f32.mrf.mxu0
  %v3795 = vadd.f32 %v3659, %v3794
  %v3796 = vpop.f32.mrf.mxu0
  %3797 = vmatprep.mubr.bf16.mxu0 0
  %3798 = vmatmul.mubr.bf16.gmra.mxu0 %v2447
  %v3799 = vpop.f32.mrf.mxu0
  %v3800 = vadd.f32 %v3664, %v3799
  %v3801 = vpop.f32.mrf.mxu0
  %v3802 = vpop.f32.mrf.mxu0
  %v3803 = vadd.f32 %v3667, %v3802
  %v3804 = vpop.f32.mrf.mxu0
  %3805 = vmatprep.mubr.bf16.mxu0 0
  %3806 = vmatmul.mubr.bf16.gmra.mxu0 %v2523
  %v3807 = vpop.f32.mrf.mxu0
  %v3808 = vadd.f32 %v3672, %v3807
  %v3809 = vpop.f32.mrf.mxu0
  %v3810 = vpop.f32.mrf.mxu0
  %v3811 = vadd.f32 %v3675, %v3810
  %v3812 = vpop.f32.mrf.mxu0
  %3813 = vmatprep.mubr.bf16.mxu0 0
  %3814 = vmatmul.mubr.bf16.gmra.mxu0 %v2599
  %v3815 = vpop.f32.mrf.mxu0
  %v3816 = vadd.f32 %v3680, %v3815
  %v3817 = vpop.f32.mrf.mxu0
  %v3818 = vpop.f32.mrf.mxu0
  %v3819 = vadd.f32 %v3683, %v3818
  %v3820 = vpop.f32.mrf.mxu0
  %3821 = vmatprep.mubr.bf16.mxu0 0
  %3822 = vmatmul.mubr.bf16.gmra.mxu0 %v2598
  %v3823 = vpop.f32.mrf.mxu0
  %v3824 = vadd.f32 %v3688, %v3823
  %v3825 = vpop.f32.mrf.mxu0
  %v3826 = vpop.f32.mrf.mxu0
  %v3827 = vpop.f32.mrf.mxu0
  %3828 = vdwg.mxu0
  %v3829 = vmul.f32 %v3728, %v55
  %v3830 = vmul.f32 %v3731, %v60
  %v3831 = vmul.f32 %v3736, %v65
  %v3832 = vmul.f32 %v3739, %v70
  %v3833 = vmul.f32 %v3744, %v75
  %v3834 = vmul.f32 %v3747, %v80
  %v3835 = vmul.f32 %v3752, %v85
  %v3836 = vmul.f32 %v3755, %v90
  %v3837 = vmul.f32 %v3760, %v95
  %v3838 = vmul.f32 %v3763, %v100
  %v3839 = vmul.f32 %v3768, %v105
  %v3840 = vmul.f32 %v3771, %v110
  %v3841 = vmul.f32 %v3776, %v115
  %v3842 = vmul.f32 %v3779, %v120
  %v3843 = vmul.f32 %v3784, %v125
  %v3844 = vmul.f32 %v3787, %v130
  %v3845 = vmul.f32 %v3792, %v135
  %v3846 = vmul.f32 %v3795, %v140
  %v3847 = vmul.f32 %v3800, %v145
  %v3848 = vmul.f32 %v3803, %v150
  %v3849 = vmul.f32 %v3808, %v155
  %v3850 = vmul.f32 %v3811, %v160
  %v3851 = vmul.f32 %v3816, %v165
  %v3852 = vmul.f32 %v3819, %v170
  %v3853 = vmul.f32 %v3824, %v175
  %v3854 = vadd.f32 %v3829, %v3830
  %v3855 = vadd.f32 %v3854, %v3831
  %v3856 = vadd.f32 %v3855, %v3832
  %v3857 = vadd.f32 %v3856, %v3833
  %v3858 = vadd.f32 %v3857, %v3834
  %v3859 = vadd.f32 %v3858, %v3835
  %v3860 = vadd.f32 %v3859, %v3836
  %v3861 = vadd.f32 %v3860, %v3837
  %v3862 = vadd.f32 %v3861, %v3838
  %v3863 = vadd.f32 %v3862, %v3839
  %v3864 = vadd.f32 %v3863, %v3840
  %v3865 = vadd.f32 %v3864, %v3841
  %v3866 = vadd.f32 %v3865, %v3842
  %v3867 = vadd.f32 %v3866, %v3843
  %v3868 = vadd.f32 %v3867, %v3844
  %v3869 = vadd.f32 %v3868, %v3845
  %v3870 = vadd.f32 %v3869, %v3846
  %v3871 = vadd.f32 %v3870, %v3847
  %v3872 = vadd.f32 %v3871, %v3848
  %v3873 = vadd.f32 %v3872, %v3849
  %v3874 = vadd.f32 %v3873, %v3850
  %v3875 = vadd.f32 %v3874, %v3851
  %v3876 = vadd.f32 %v3875, %v3852
  %v3877 = vadd.f32 %v3876, %v3853
  %v3878 = vrot.slane %v3877, 4
  %v3879 = vadd.f32 %v3877, %v3878
  %v3880 = vrot.slane %v3879, 2
  %v3881 = vadd.f32 %v3879, %v3880
  %v3882 = vrot.slane %v3881, 1
  %v3883 = vadd.f32 %v3881, %v3882
  %v3884 = vmul.f32 %v3829, %v3829
  %v3885 = vmul.f32 %v3830, %v3830
  %v3886 = vmul.f32 %v3831, %v3831
  %v3887 = vmul.f32 %v3832, %v3832
  %v3888 = vmul.f32 %v3833, %v3833
  %v3889 = vmul.f32 %v3834, %v3834
  %v3890 = vmul.f32 %v3835, %v3835
  %v3891 = vmul.f32 %v3836, %v3836
  %v3892 = vmul.f32 %v3837, %v3837
  %v3893 = vmul.f32 %v3838, %v3838
  %v3894 = vmul.f32 %v3839, %v3839
  %v3895 = vmul.f32 %v3840, %v3840
  %v3896 = vmul.f32 %v3841, %v3841
  %v3897 = vmul.f32 %v3842, %v3842
  %v3898 = vmul.f32 %v3843, %v3843
  %v3899 = vmul.f32 %v3844, %v3844
  %v3900 = vmul.f32 %v3845, %v3845
  %v3901 = vmul.f32 %v3846, %v3846
  %v3902 = vmul.f32 %v3847, %v3847
  %v3903 = vmul.f32 %v3848, %v3848
  %v3904 = vmul.f32 %v3849, %v3849
  %v3905 = vmul.f32 %v3850, %v3850
  %v3906 = vmul.f32 %v3851, %v3851
  %v3907 = vmul.f32 %v3852, %v3852
  %v3908 = vmul.f32 %v3853, %v3853
  %v3909 = vadd.f32 %v3884, %v3885
  %v3910 = vadd.f32 %v3909, %v3886
  %v3911 = vadd.f32 %v3910, %v3887
  %v3912 = vadd.f32 %v3911, %v3888
  %v3913 = vadd.f32 %v3912, %v3889
  %v3914 = vadd.f32 %v3913, %v3890
  %v3915 = vadd.f32 %v3914, %v3891
  %v3916 = vadd.f32 %v3915, %v3892
  %v3917 = vadd.f32 %v3916, %v3893
  %v3918 = vadd.f32 %v3917, %v3894
  %v3919 = vadd.f32 %v3918, %v3895
  %v3920 = vadd.f32 %v3919, %v3896
  %v3921 = vadd.f32 %v3920, %v3897
  %v3922 = vadd.f32 %v3921, %v3898
  %v3923 = vadd.f32 %v3922, %v3899
  %v3924 = vadd.f32 %v3923, %v3900
  %v3925 = vadd.f32 %v3924, %v3901
  %v3926 = vadd.f32 %v3925, %v3902
  %v3927 = vadd.f32 %v3926, %v3903
  %v3928 = vadd.f32 %v3927, %v3904
  %v3929 = vadd.f32 %v3928, %v3905
  %v3930 = vadd.f32 %v3929, %v3906
  %v3931 = vadd.f32 %v3930, %v3907
  %v3932 = vadd.f32 %v3931, %v3908
  %v3933 = vrot.slane %v3932, 4
  %v3934 = vadd.f32 %v3932, %v3933
  %v3935 = vrot.slane %v3934, 2
  %v3936 = vadd.f32 %v3934, %v3935
  %v3937 = vrot.slane %v3936, 1
  %v3938 = vadd.f32 %v3936, %v3937
  %v3939 = vmul.f32 %v3883, 0.0078125
  %v3940 = vmul.f32 %v3938, 0.0078125
  %v3941 = vmul.f32 %v3939, %v3939
  %v3942 = vsub.f32 %v3940, %v3941
  %v3943 = vmax.f32 %v3942, 0.0
  %v3944 = vld [vmem:[%s4] sm:$0x1]
  %v3945 = vadd.f32 %v3943, 1e-05
  %v3946 = vrsqrt.pop %v3945
  %v3947 = vmul.f32 %v3944, %v3946
  %v3948 = vld [vmem:[%s4 + $0x1] sm:$0x1]
  %v3949 = vmul.f32 %v3939, %v3947
  %v3950 = vsub.f32 %v3948, %v3949
  %v3951 = vlaneseq
  %v3952 = vshrl.u32 %v3951, 7
  %v3953 = vsub.s32 0, %v3952
  %v3954 = vrot.slane %v3947, %v3953
  %v3955 = vmul.f32 %v3829, %v3954
  %v3956 = vmul.f32 %v3830, %v3954
  %v3957 = vmul.f32 %v3831, %v3954
  %v3958 = vmul.f32 %v3832, %v3954
  %v3959 = vmul.f32 %v3833, %v3954
  %v3960 = vmul.f32 %v3834, %v3954
  %v3961 = vmul.f32 %v3835, %v3954
  %v3962 = vmul.f32 %v3836, %v3954
  %v3963 = vmul.f32 %v3837, %v3954
  %v3964 = vmul.f32 %v3838, %v3954
  %v3965 = vmul.f32 %v3839, %v3954
  %v3966 = vmul.f32 %v3840, %v3954
  %v3967 = vmul.f32 %v3841, %v3954
  %v3968 = vmul.f32 %v3842, %v3954
  %v3969 = vmul.f32 %v3843, %v3954
  %v3970 = vmul.f32 %v3844, %v3954
  %v3971 = vmul.f32 %v3845, %v3954
  %v3972 = vmul.f32 %v3846, %v3954
  %v3973 = vmul.f32 %v3847, %v3954
  %v3974 = vmul.f32 %v3848, %v3954
  %v3975 = vmul.f32 %v3849, %v3954
  %v3976 = vmul.f32 %v3850, %v3954
  %v3977 = vmul.f32 %v3851, %v3954
  %v3978 = vmul.f32 %v3852, %v3954
  %v3979 = vmul.f32 %v3853, %v3954
  %v3980 = vlaneseq
  %v3981 = vshrl.u32 %v3980, 7
  %v3982 = vsub.s32 0, %v3981
  %v3983 = vrot.slane %v3950, %v3982
  %v3984 = vadd.f32 %v3955, %v3983
  %v3985 = vadd.f32 %v3956, %v3983
  %v3986 = vadd.f32 %v3957, %v3983
  %v3987 = vadd.f32 %v3958, %v3983
  %v3988 = vadd.f32 %v3959, %v3983
  %v3989 = vadd.f32 %v3960, %v3983
  %v3990 = vadd.f32 %v3961, %v3983
  %v3991 = vadd.f32 %v3962, %v3983
  %v3992 = vadd.f32 %v3963, %v3983
  %v3993 = vadd.f32 %v3964, %v3983
  %v3994 = vadd.f32 %v3965, %v3983
  %v3995 = vadd.f32 %v3966, %v3983
  %v3996 = vadd.f32 %v3967, %v3983
  %v3997 = vadd.f32 %v3968, %v3983
  %v3998 = vadd.f32 %v3969, %v3983
  %v3999 = vadd.f32 %v3970, %v3983
  %v4000 = vadd.f32 %v3971, %v3983
  %v4001 = vadd.f32 %v3972, %v3983
  %v4002 = vadd.f32 %v3973, %v3983
  %v4003 = vadd.f32 %v3974, %v3983
  %v4004 = vadd.f32 %v3975, %v3983
  %v4005 = vadd.f32 %v3976, %v3983
  %v4006 = vadd.f32 %v3977, %v3983
  %v4007 = vadd.f32 %v3978, %v3983
  %v4008 = vadd.f32 %v3979, %v3983
  %v4009 = vld [vmem:[%s5] sm:$0xff]
  %v4010 = vld [vmem:[%s5 + $0x8] sm:$0xff]
  %v4011 = vld [vmem:[%s5 + $0x10] sm:$0xff]
  %v4012 = vld [vmem:[%s5 + $0x18] sm:$0xff]
  %v4013 = vld [vmem:[%s5 + $0x20] sm:$0xff]
  %v4014 = vld [vmem:[%s5 + $0x28] sm:$0xff]
  %v4015 = vld [vmem:[%s5 + $0x30] sm:$0xff]
  %v4016 = vld [vmem:[%s5 + $0x38] sm:$0xff]
  %v4017 = vld [vmem:[%s5 + $0x40] sm:$0xff]
  %v4018 = vld [vmem:[%s5 + $0x48] sm:$0xff]
  %v4019 = vld [vmem:[%s5 + $0x50] sm:$0xff]
  %v4020 = vld [vmem:[%s5 + $0x58] sm:$0xff]
  %v4021 = vld [vmem:[%s5 + $0x60] sm:$0xff]
  %v4022 = vld [vmem:[%s5 + $0x68] sm:$0xff]
  %v4023 = vld [vmem:[%s5 + $0x70] sm:$0xff]
  %v4024 = vld [vmem:[%s5 + $0x78] sm:$0xff]
  %v4025 = vld [vmem:[%s5 + $0x80] sm:$0xff]
  %v4026 = vld [vmem:[%s5 + $0x88] sm:$0xff]
  %v4027 = vld [vmem:[%s5 + $0x90] sm:$0xff]
  %v4028 = vld [vmem:[%s5 + $0x98] sm:$0xff]
  %v4029 = vld [vmem:[%s5 + $0xa0] sm:$0xff]
  %v4030 = vld [vmem:[%s5 + $0xa8] sm:$0xff]
  %v4031 = vld [vmem:[%s5 + $0xb0] sm:$0xff]
  %v4032 = vld [vmem:[%s5 + $0xb8] sm:$0xff]
  %v4033 = vld [vmem:[%s5 + $0xc0] sm:$0xff]
  %v4034 = vadd.f32 %v3984, %v4009
  %v4035 = vadd.f32 %v3985, %v4010
  %v4036 = vadd.f32 %v3986, %v4011
  %v4037 = vadd.f32 %v3987, %v4012
  %v4038 = vadd.f32 %v3988, %v4013
  %v4039 = vadd.f32 %v3989, %v4014
  %v4040 = vadd.f32 %v3990, %v4015
  %v4041 = vadd.f32 %v3991, %v4016
  %v4042 = vadd.f32 %v3992, %v4017
  %v4043 = vadd.f32 %v3993, %v4018
  %v4044 = vadd.f32 %v3994, %v4019
  %v4045 = vadd.f32 %v3995, %v4020
  %v4046 = vadd.f32 %v3996, %v4021
  %v4047 = vadd.f32 %v3997, %v4022
  %v4048 = vadd.f32 %v3998, %v4023
  %v4049 = vadd.f32 %v3999, %v4024
  %v4050 = vadd.f32 %v4000, %v4025
  %v4051 = vadd.f32 %v4001, %v4026
  %v4052 = vadd.f32 %v4002, %v4027
  %v4053 = vadd.f32 %v4003, %v4028
  %v4054 = vadd.f32 %v4004, %v4029
  %v4055 = vadd.f32 %v4005, %v4030
  %v4056 = vadd.f32 %v4006, %v4031
  %v4057 = vadd.f32 %v4007, %v4032
  %v4058 = vadd.f32 %v4008, %v4033
  %v4059 = vmax.f32 %v4034, 0.0
  %v4060 = vmax.f32 %v4035, 0.0
  %v4061 = vmax.f32 %v4036, 0.0
  %v4062 = vmax.f32 %v4037, 0.0
  %v4063 = vmax.f32 %v4038, 0.0
  %v4064 = vmax.f32 %v4039, 0.0
  %v4065 = vmax.f32 %v4040, 0.0
  %v4066 = vmax.f32 %v4041, 0.0
  %v4067 = vmax.f32 %v4042, 0.0
  %v4068 = vmax.f32 %v4043, 0.0
  %v4069 = vmax.f32 %v4044, 0.0
  %v4070 = vmax.f32 %v4045, 0.0
  %v4071 = vmax.f32 %v4046, 0.0
  %v4072 = vmax.f32 %v4047, 0.0
  %v4073 = vmax.f32 %v4048, 0.0
  %v4074 = vmax.f32 %v4049, 0.0
  %v4075 = vmax.f32 %v4050, 0.0
  %v4076 = vmax.f32 %v4051, 0.0
  %v4077 = vmax.f32 %v4052, 0.0
  %v4078 = vmax.f32 %v4053, 0.0
  %v4079 = vmax.f32 %v4054, 0.0
  %v4080 = vmax.f32 %v4055, 0.0
  %v4081 = vmax.f32 %v4056, 0.0
  %v4082 = vmax.f32 %v4057, 0.0
  %v4083 = vmax.f32 %v4058, 0.0
  %4084 = vst [vmem:[%s7] sm:$0xff] %v4059
  %4085 = vst [vmem:[%s7 + $0x8] sm:$0xff] %v4060
  %4086 = vst [vmem:[%s7 + $0x10] sm:$0xff] %v4061
  %4087 = vst [vmem:[%s7 + $0x18] sm:$0xff] %v4062
  %4088 = vst [vmem:[%s7 + $0x20] sm:$0xff] %v4063
  %4089 = vst [vmem:[%s7 + $0x28] sm:$0xff] %v4064
  %4090 = vst [vmem:[%s7 + $0x30] sm:$0xff] %v4065
  %4091 = vst [vmem:[%s7 + $0x38] sm:$0xff] %v4066
  %4092 = vst [vmem:[%s7 + $0x40] sm:$0xff] %v4067
  %4093 = vst [vmem:[%s7 + $0x48] sm:$0xff] %v4068
  %4094 = vst [vmem:[%s7 + $0x50] sm:$0xff] %v4069
  %4095 = vst [vmem:[%s7 + $0x58] sm:$0xff] %v4070
  %4096 = vst [vmem:[%s7 + $0x60] sm:$0xff] %v4071
  %4097 = vst [vmem:[%s7 + $0x68] sm:$0xff] %v4072
  %4098 = vst [vmem:[%s7 + $0x70] sm:$0xff] %v4073
  %4099 = vst [vmem:[%s7 + $0x78] sm:$0xff] %v4074
  %4100 = vst [vmem:[%s7 + $0x80] sm:$0xff] %v4075
  %4101 = vst [vmem:[%s7 + $0x88] sm:$0xff] %v4076
  %4102 = vst [vmem:[%s7 + $0x90] sm:$0xff] %v4077
  %4103 = vst [vmem:[%s7 + $0x98] sm:$0xff] %v4078
  %4104 = vst [vmem:[%s7 + $0xa0] sm:$0xff] %v4079
  %4105 = vst [vmem:[%s7 + $0xa8] sm:$0xff] %v4080
  %4106 = vst [vmem:[%s7 + $0xb0] sm:$0xff] %v4081
  %4107 = vst [vmem:[%s7 + $0xb8] sm:$0xff] %v4082
  %4108 = vst [vmem:[%s7 + $0xc0] sm:$0xff] %v4083
  // Predicated region
  $region30: #{basic_block_forward.1} parent=0 // pred_check
    _
  $region31: #{basic_block_forward.1} parent=0 // pred_check_branch
    %4110 = sbr.rel (0) target = $region33
  $region32: #{basic_block_forward.1} parent=0 // pred_region
    _
  $region33: #{basic_block_forward.1} parent=0 // pred_fallthru
    _
  // Predicated region
  $region34: #{basic_block_forward.1} parent=0 // pred_check
    _
  $region35: #{basic_block_forward.1} parent=0 // pred_check_branch
    %4112 = sbr.rel (0) target = $region37
  $region36: #{basic_block_forward.1} parent=0 // pred_region
    _
  $region37: #{basic_block_forward.1} parent=0 // pred_fallthru
    _

</llo_original>
